<compile_context>
chip_gen: v7x
topology: tpu7x:2x2x1
jax: 0.10.0
libtpu: 0.0.40
codegen_flags: <defaults>
</compile_context>

<pallas_src>
import functools
import math

import jax
import jax.numpy as jnp
import numpy as np
from jax.experimental import pallas as pl
from jax.experimental.pallas import tpu as pltpu


def _posenc_half_kernel(inv_dim_t_ref, phase_ref, o_ref, *,
                        total_h, total_w, twopi):
    """Writes one (feats_half, H, W) half of the sine/cosine position embedding.

    grid = (batch, half): half == 0 -> y-based channels, half == 1 -> x-based.

    Channel convention (matches torch.cat((pos_y, pos_x), dim=3).permute(0,3,1,2)):
      within each half, channel k uses dim_t[k] = T ** (2 * (k // 2) / feats_half)
      even k -> sin(coord / dim_t[k]); odd k -> cos(...) = sin(... + pi/2).
    inv_dim_t_ref / phase_ref hold 1/dim_t and the phase, shape (fh, 1, 1).
    """
    fh, H, W = o_ref.shape
    half = pl.program_id(1)

    inv_dim_t = inv_dim_t_ref[...]          # (fh, 1, 1)
    phase = phase_ref[...]                  # (fh, 1, 1)
    eps = 1e-6

    @pl.when(half == 0)
    def _y_half():
        # y_embed = (i + 1) / (H + eps) * 2*pi ; varies along the sublane axis.
        i = jax.lax.broadcasted_iota(jnp.int32, (fh, H, 1), 1).astype(jnp.float32)
        y_embed = (i + 1.0) * (twopi / (total_h + eps))
        tab = jnp.sin(y_embed * inv_dim_t + phase)           # (fh, H, 1)
        o_ref[...] = jnp.broadcast_to(tab, (fh, H, W))       # lane broadcast

    @pl.when(half == 1)
    def _x_half():
        # x_embed = (j + 1) / (W + eps) * 2*pi ; varies along the lane axis.
        j = jax.lax.broadcasted_iota(jnp.int32, (fh, 1, W), 2).astype(jnp.float32)
        x_embed = (j + 1.0) * (twopi / (total_w + eps))
        tab = jnp.sin(x_embed * inv_dim_t + phase)           # (fh, 1, W)
        o_ref[...] = jnp.broadcast_to(tab, (fh, H, W))       # sublane broadcast


def position_embedding_sine(batch_size: int, height: int, width: int,
                            num_pos_feats: int) -> jax.Array:
    """Equivalent of PositionEmbeddingSine(num_pos_feats).forward(B, H, W).

    Returns float32 array of shape (batch_size, num_pos_feats, height, width).
    """
    assert num_pos_feats % 2 == 0, "Expecting even model width"
    feats_half = num_pos_feats // 2
    C = num_pos_feats
    temperature = 10000.0
    twopi = 2.0 * math.pi

    # Host-side per-channel constants (hoisted out of the kernel's hot path).
    k = np.arange(feats_half, dtype=np.float64)
    inv_dim_t_np = temperature ** (-(2.0 * np.floor(k / 2.0)) / feats_half)
    phase_np = (k % 2) * (np.pi / 2.0)
    inv_dim_t = jnp.asarray(inv_dim_t_np, dtype=jnp.float32).reshape(feats_half, 1, 1)
    phase = jnp.asarray(phase_np, dtype=jnp.float32).reshape(feats_half, 1, 1)

    kernel = functools.partial(_posenc_half_kernel, total_h=height,
                               total_w=width, twopi=twopi)

    return pl.pallas_call(
        kernel,
        out_shape=jax.ShapeDtypeStruct((batch_size, C, height, width),
                                       jnp.float32),
        grid=(batch_size, 2),
        in_specs=[
            pl.BlockSpec((feats_half, 1, 1), lambda b, h: (0, 0, 0)),
            pl.BlockSpec((feats_half, 1, 1), lambda b, h: (0, 0, 0)),
        ],
        out_specs=pl.BlockSpec((None, feats_half, height, width),
                               lambda b, h: (b, h, 0, 0)),
        compiler_params=pltpu.CompilerParams(
            dimension_semantics=("parallel", "parallel")),
    )(inv_dim_t, phase)


def _reference_jax(batch_size, height, width, num_pos_feats):
    """Plain-JAX transcription of the PyTorch forward (for verification)."""
    feats_half = num_pos_feats // 2
    twopi = 2.0 * math.pi
    eps = 1e-6
    y_embed = jnp.arange(1, height + 1, dtype=jnp.float32)
    y_embed = jnp.broadcast_to(y_embed[None, :, None], (batch_size, height, width))
    x_embed = jnp.arange(1, width + 1, dtype=jnp.float32)
    x_embed = jnp.broadcast_to(x_embed[None, None, :], (batch_size, height, width))
    y_embed = y_embed / (y_embed[:, -1:, :] + eps) * twopi
    x_embed = x_embed / (x_embed[:, :, -1:] + eps) * twopi
    dim_t = jnp.arange(feats_half, dtype=jnp.float32)
    dim_t = 10000.0 ** (2.0 * jnp.floor(dim_t / 2.0) / feats_half)
    pos_x = x_embed[:, :, :, None] / dim_t
    pos_y = y_embed[:, :, :, None] / dim_t
    pos_x = jnp.stack((jnp.sin(pos_x[..., 0::2]), jnp.cos(pos_x[..., 1::2])),
                      axis=4).reshape(batch_size, height, width, feats_half)
    pos_y = jnp.stack((jnp.sin(pos_y[..., 0::2]), jnp.cos(pos_y[..., 1::2])),
                      axis=4).reshape(batch_size, height, width, feats_half)
    pos = jnp.concatenate((pos_y, pos_x), axis=3).transpose(0, 3, 1, 2)
    return pos


if __name__ == "__main__":
    # PositionEmbeddingSine.forward has no tensor inputs (only ints); the key is
    # created only to comply with the deterministic-setup convention.
    _ = jax.random.PRNGKey(0)

    batch_size, height, width = 2, 16, 16
    num_pos_feats = 32  # constructor arg; output channel count

    out = position_embedding_sine(batch_size, height, width, num_pos_feats)
    out = jax.block_until_ready(out)

    ref = _reference_jax(batch_size, height, width, num_pos_feats)
    assert out.shape == (batch_size, num_pos_feats, height, width)
    assert out.dtype == jnp.float32
    np.testing.assert_allclose(np.asarray(out), np.asarray(ref),
                               rtol=1e-5, atol=1e-5)

    # TODO(synk): the torch module's Python-side result cache (self.cache) is
    # host bookkeeping, not a tensor op; it is intentionally not replicated.
    print("KERNEL_OK")
</pallas_src>

<mosaic_0001>
module attributes {stable_mosaic.version = 11 : i64} {
  func.func @_posenc_half_kernel(%arg0: i32, %arg1: i32, %arg2: memref<16x1x1xf32, #tpu.memory_space<vmem>>, %arg3: memref<16x1x1xf32, #tpu.memory_space<vmem>>, %arg4: memref<1x16x16x16xf32, #tpu.memory_space<vmem>>) attributes {dimension_semantics = [#tpu.dimension_semantics<parallel>, #tpu.dimension_semantics<parallel>], iteration_bounds = array<i64: 2, 2>, scalar_prefetch = 0 : i64, scratch_operands = 0 : i64, tpu.core_type = #tpu.core_type<tc>, window_params = [{pipeline_mode = #tpu.pipeline_mode<synchronous>, transform_indices = @transform_0, window_bounds = array<i64: 16, 1, 1>}, {pipeline_mode = #tpu.pipeline_mode<synchronous>, transform_indices = @transform_1, window_bounds = array<i64: 16, 1, 1>}, {transform_indices = @transform_2, window_bounds = array<i64: 1, 16, 16, 16>}]} {
    %c0 = arith.constant 0 : index
    %c0_0 = arith.constant 0 : index
    %c0_1 = arith.constant 0 : index
    %0 = vector.load %arg2[%c0, %c0_0, %c0_1] : memref<16x1x1xf32, #tpu.memory_space<vmem>>, vector<16x1x1xf32>
    %c0_2 = arith.constant 0 : index
    %c0_3 = arith.constant 0 : index
    %c0_4 = arith.constant 0 : index
    %1 = vector.load %arg3[%c0_2, %c0_3, %c0_4] : memref<16x1x1xf32, #tpu.memory_space<vmem>>, vector<16x1x1xf32>
    %c0_i32 = arith.constant 0 : i32
    %2 = arith.cmpi eq, %arg1, %c0_i32 : i32
    %3 = arith.extui %2 : i1 to i32
    %c0_i32_5 = arith.constant 0 : i32
    %4 = arith.cmpi ne, %3, %c0_i32_5 : i32
    scf.if %4 {
      %8 = tpu.iota {dimensions = array<i32: 1>} : vector<16x16x1xi32>
      %9 = arith.sitofp %8 : vector<16x16x1xi32> to vector<16x16x1xf32>
      %cst = arith.constant 1.000000e+00 : f32
      %10 = vector.broadcast %cst : f32 to vector<16x16x1xf32>
      %11 = arith.addf %9, %10 : vector<16x16x1xf32>
      %cst_7 = arith.constant 0.392699063 : f32
      %12 = vector.broadcast %cst_7 : f32 to vector<16x16x1xf32>
      %13 = arith.mulf %11, %12 : vector<16x16x1xf32>
      %14 = vector.broadcast %0 : vector<16x1x1xf32> to vector<16x16x1xf32>
      %15 = arith.mulf %13, %14 : vector<16x16x1xf32>
      %16 = vector.broadcast %1 : vector<16x1x1xf32> to vector<16x16x1xf32>
      %17 = arith.addf %15, %16 : vector<16x16x1xf32>
      %18 = math.sin %17 : vector<16x16x1xf32>
      %19 = vector.shape_cast %18 : vector<16x16x1xf32> to vector<16x16x1xf32>
      %20 = vector.broadcast %19 : vector<16x16x1xf32> to vector<16x16x16xf32>
      %c0_8 = arith.constant 0 : index
      %c0_9 = arith.constant 0 : index
      %c0_10 = arith.constant 0 : index
      %c0_11 = arith.constant 0 : index
      %21 = vector.load %arg4[%c0_8, %c0_9, %c0_10, %c0_11] : memref<1x16x16x16xf32, #tpu.memory_space<vmem>>, vector<1x16x16x16xf32>
      %22 = vector.shape_cast %21 : vector<1x16x16x16xf32> to vector<16x16x16xf32>
      %23 = vector.shape_cast %20 : vector<16x16x16xf32> to vector<1x16x16x16xf32>
      tpu.vector_store %arg4[%c0_8, %c0_9, %c0_10, %c0_11], %23 {strides = array<i32>} : memref<1x16x16x16xf32, #tpu.memory_space<vmem>>, vector<1x16x16x16xf32>,
    } else {
    }
    %c1_i32 = arith.constant 1 : i32
    %5 = arith.cmpi eq, %arg1, %c1_i32 : i32
    %6 = arith.extui %5 : i1 to i32
    %c0_i32_6 = arith.constant 0 : i32
    %7 = arith.cmpi ne, %6, %c0_i32_6 : i32
    scf.if %7 {
      %8 = tpu.iota {dimensions = array<i32: 2>} : vector<16x1x16xi32>
      %9 = arith.sitofp %8 : vector<16x1x16xi32> to vector<16x1x16xf32>
      %cst = arith.constant 1.000000e+00 : f32
      %10 = vector.broadcast %cst : f32 to vector<16x1x16xf32>
      %11 = arith.addf %9, %10 : vector<16x1x16xf32>
      %cst_7 = arith.constant 0.392699063 : f32
      %12 = vector.broadcast %cst_7 : f32 to vector<16x1x16xf32>
      %13 = arith.mulf %11, %12 : vector<16x1x16xf32>
      %14 = vector.broadcast %0 : vector<16x1x1xf32> to vector<16x1x16xf32>
      %15 = arith.mulf %13, %14 : vector<16x1x16xf32>
      %16 = vector.broadcast %1 : vector<16x1x1xf32> to vector<16x1x16xf32>
      %17 = arith.addf %15, %16 : vector<16x1x16xf32>
      %18 = math.sin %17 : vector<16x1x16xf32>
      %19 = vector.shape_cast %18 : vector<16x1x16xf32> to vector<16x1x16xf32>
      %20 = vector.broadcast %19 : vector<16x1x16xf32> to vector<16x16x16xf32>
      %c0_8 = arith.constant 0 : index
      %c0_9 = arith.constant 0 : index
      %c0_10 = arith.constant 0 : index
      %c0_11 = arith.constant 0 : index
      %21 = vector.load %arg4[%c0_8, %c0_9, %c0_10, %c0_11] : memref<1x16x16x16xf32, #tpu.memory_space<vmem>>, vector<1x16x16x16xf32>
      %22 = vector.shape_cast %21 : vector<1x16x16x16xf32> to vector<16x16x16xf32>
      %23 = vector.shape_cast %20 : vector<16x16x16xf32> to vector<1x16x16x16xf32>
      tpu.vector_store %arg4[%c0_8, %c0_9, %c0_10, %c0_11], %23 {strides = array<i32>} : memref<1x16x16x16xf32, #tpu.memory_space<vmem>>, vector<1x16x16x16xf32>,
    } else {
    }
    return
  }
  func.func @transform_0(%arg0: i32, %arg1: i32) -> (i32, i32, i32) {
    %c0_i32 = arith.constant 0 : i32
    %c0_i32_0 = arith.constant 0 : i32
    %c0_i32_1 = arith.constant 0 : i32
    %c0_i32_2 = arith.constant 0 : i32
    return %c0_i32, %c0_i32_0, %c0_i32_1 : i32, i32, i32
  }
  func.func @transform_1(%arg0: i32, %arg1: i32) -> (i32, i32, i32) {
    %c0_i32 = arith.constant 0 : i32
    %c0_i32_0 = arith.constant 0 : i32
    %c0_i32_1 = arith.constant 0 : i32
    %c0_i32_2 = arith.constant 0 : i32
    return %c0_i32, %c0_i32_0, %c0_i32_1 : i32, i32, i32
  }
  func.func @transform_2(%arg0: i32, %arg1: i32) -> (i32, i32, i32, i32) {
    %c0_i32 = arith.constant 0 : i32
    %c0_i32_0 = arith.constant 0 : i32
    %c0_i32_1 = arith.constant 0 : i32
    return %arg0, %arg1, %c0_i32, %c0_i32_0 : i32, i32, i32, i32
  }
}

</mosaic_0001>

<llo_original>
// kernel: tpu_custom_call.1
$region0: #{tpu_custom_call.1}
  #allocation0 [shape = 'u32[]', space=smem, size = 0x4, offset = 0x4, fixed_abs, tag = 'smem constant byte address 0x4 - core index']
  #allocation1 [shape = 'u32[144,128]{1,0:T(1,128)}', space=vmem, size = 0x12000, scoped, tag = 'internal scratch']
  %s0 = inlined_call_operand.vmem [shape: f32[16,1,1], index: 0, kind: input, shape index: {}]
  %s1 = inlined_call_operand.vmem [shape: f32[16,1,1], index: 1, kind: input, shape index: {}]
  %s2 = inlined_call_operand.vmem [shape: f32[2,32,16,16], index: 2, kind: output, shape index: {}]
  %s3 = sld [smem:[#allocation0]]
  $region49: #{tpu_custom_call.1} parent=0
    _
  %s5 = ssub.s32 1, %s3
  %s6 = scalar_select 0, %s5, %s3
  loop: start=0, step=1, limit=6
  $region2: #{tpu_custom_call.1} parent=0 // loop_pre_header
    _
  $region3: #{tpu_custom_call.1} parent=0 // loop_header
    %s8 = sphi 0, %s12
    %p9 = scmp.ge.s32.totalorder %s8, 6
    %s15 = sphi 0, %s27
    %s16 = sphi 0, %s23
    %s17 = sphi 0, %s15
    %s18 = sphi 0, %s16
    %s19 = sphi 0, %s17
    %s20 = sphi 0, %s18
    %s28 = sphi 0, %s28
    %s30 = sphi 0, %s28
    %s31 = sphi 0, %s30
    %s45 = sphi 0, %s31
    %s49 = sphi 0, %s49
    %s51 = sphi 0, %s49
    %s52 = sphi 0, %s51
    %s66 = sphi 0, %s52
    %s74 = sphi 0, %s76
    %s77 = sphi 0, %s74
    %s78 = sphi 0, %s77
    %s94 = sphi 0, %s78
  $region4: #{tpu_custom_call.1} parent=0 // loop_header_branch
    %11 = sbr.rel (%p9) target = $region8
  $region5: #{tpu_custom_call.1} parent=0 // loop_body
    %s13 = ssub.s32 %s8, 1
    %s14 = ssub.s32 %s8, 2
    %s21 = sadd.s32 1, %s16
    %p22 = scmp.ge.s32.totalorder %s21, 2
    %s23 = scalar_select %p22, 0, %s21
    %s24 = sadd.s32 1, %s15
    %s25 = scalar_select %p22, %s24, %s15
    %p26 = scmp.ge.s32.totalorder %s25, 2
    %s27 = scalar_select %p26, 0, %s25
    %s29 = sadd.s32 %s28, 1
    %p32 = scmp.eq.s32.totalorder %s8, 3
    %p33 = scmp.ne.s32.totalorder %s28, %s30
    %p34 = scmp.eq.s32.totalorder %s8, 0
    %p35 = por %p33, %p34
    %p36 = scmp.ne.s32.totalorder %s28, %s30
    %p37 = scmp.eq.s32.totalorder %s13, 3
    %p38 = por %p36, %p37
    %p39 = scmp.ne.s32.totalorder %s30, %s31
    %p40 = scmp.eq.s32.totalorder %s13, 0
    %p41 = por %p39, %p40
    %p42 = scmp.ne.s32.totalorder %s30, %s31
    %p43 = scmp.eq.s32.totalorder %s14, 3
    %p44 = por %p42, %p43
    %p46 = scmp.ne.s32.totalorder %s31, %s45
    %p47 = scmp.eq.s32.totalorder %s14, 0
    %p48 = por %p46, %p47
    %s50 = sadd.s32 %s49, 1
    %p53 = scmp.eq.s32.totalorder %s8, 3
    %p54 = scmp.ne.s32.totalorder %s49, %s51
    %p55 = scmp.eq.s32.totalorder %s8, 0
    %p56 = por %p54, %p55
    %p57 = scmp.ne.s32.totalorder %s49, %s51
    %p58 = scmp.eq.s32.totalorder %s13, 3
    %p59 = por %p57, %p58
    %p60 = scmp.ne.s32.totalorder %s51, %s52
    %p61 = scmp.eq.s32.totalorder %s13, 0
    %p62 = por %p60, %p61
    %p63 = scmp.ne.s32.totalorder %s51, %s52
    %p64 = scmp.eq.s32.totalorder %s14, 3
    %p65 = por %p63, %p64
    %p67 = scmp.ne.s32.totalorder %s52, %s66
    %p68 = scmp.eq.s32.totalorder %s14, 0
    %p69 = por %p67, %p68
    %s70 = ssub.s32 %s15, %s27
    %s71 = ssub.s32 %s16, %s23
    %s72 = sor.u32 %s70, %s71
    %p73 = scmp.eq.s32.totalorder %s72, 0
    %s75 = sadd.s32 %s74, 1
    %s76 = scalar_select %p73, %s74, %s75
    %p79 = pneg %p73
    %p80 = scmp.eq.s32.totalorder %s8, 3
    %p81 = por %p79, %p80
    %p82 = scmp.ne.s32.totalorder %s74, %s77
    %p83 = scmp.eq.s32.totalorder %s8, 0
    %p84 = por %p82, %p83
    %p85 = scmp.ne.s32.totalorder %s74, %s77
    %p86 = scmp.eq.s32.totalorder %s13, 3
    %p87 = por %p85, %p86
    %p88 = scmp.ne.s32.totalorder %s77, %s78
    %p89 = scmp.eq.s32.totalorder %s13, 0
    %p90 = por %p88, %p89
    %p91 = scmp.ne.s32.totalorder %s77, %s78
    %p92 = scmp.eq.s32.totalorder %s14, 3
    %p93 = por %p91, %p92
    %p95 = scmp.ne.s32.totalorder %s78, %s94
    %p96 = scmp.eq.s32.totalorder %s14, 0
    %p97 = por %p95, %p96
    %p98 = scmp.le.s32.totalorder 1, %s8
    %p99 = scmp.lt.s32.totalorder %s8, 5
    %p100 = pnand %p98, %p99
    %p101 = pneg %p100
    // Predicated region
    $region9: #{tpu_custom_call.1} parent=5 // pred_check
      _
    $region10: #{tpu_custom_call.1} parent=5 // pred_check_branch
      %103 = sbr.rel (%p100) target = $region12
    $region11: #{tpu_custom_call.1} parent=5 // pred_region
      %s104 = ssub.s32 %s8, 1
      // Predicated region
      $region13: #{tpu_custom_call.1} parent=11 // pred_check
        %p105 = pneg %p41
      $region14: #{tpu_custom_call.1} parent=11 // pred_check_branch
        %107 = sbr.rel (%p105) target = $region16
      $region15: #{tpu_custom_call.1} parent=11 // pred_region
        _
      $region16: #{tpu_custom_call.1} parent=11 // pred_fallthru
        _
      // Predicated region
      $region17: #{tpu_custom_call.1} parent=11 // pred_check
        %p108 = pneg %p62
      $region18: #{tpu_custom_call.1} parent=11 // pred_check_branch
        %110 = sbr.rel (%p108) target = $region20
      $region19: #{tpu_custom_call.1} parent=11 // pred_region
        _
      $region20: #{tpu_custom_call.1} parent=11 // pred_fallthru
        _
    $region12: #{tpu_custom_call.1} parent=5 // pred_fallthru
      _
    %p111 = scmp.lt.s32.totalorder %s8, 4
    // Predicated region
    $region21: #{tpu_custom_call.1} parent=5 // pred_check
      %p112 = pneg %p111
    $region22: #{tpu_custom_call.1} parent=5 // pred_check_branch
      %114 = sbr.rel (%p112) target = $region24
    $region23: #{tpu_custom_call.1} parent=5 // pred_region
      _
    $region24: #{tpu_custom_call.1} parent=5 // pred_fallthru
      _
    %p115 = scmp.le.s32.totalorder 1, %s8
    %p116 = scmp.lt.s32.totalorder %s8, 5
    %p117 = pnand %p115, %p116
    %p118 = pneg %p117
    // Predicated region
    $region25: #{tpu_custom_call.1} parent=5 // pred_check
      _
    $region26: #{tpu_custom_call.1} parent=5 // pred_check_branch
      %120 = sbr.rel (%p117) target = $region28
    $region27: #{tpu_custom_call.1} parent=5 // pred_region
      %s121 = ssub.s32 %s8, 1
      %p122 = pneg %p41
      %p123 = pneg %p38
      %p124 = pneg %p62
      %p125 = pneg %p59
      %p126 = pneg %p90
      %p127 = pneg %p87
      %s128 = smul.u32 16, %s18
      %p129 = scmp.lt.s32.totalorder %s17, 1
      %s130 = scalar_select %p129, %s17, 1
      %p131 = scmp.lt.s32.totalorder %s128, 31
      %s132 = scalar_select %p131, %s128, 31
      %s133 = smul.addr %s132, 2
      %s134 = smul.addr %s130, 64
      %s135 = sadd.s32 %s133, %s134
      %s136 = smul.addr %s135, 8
      %s137 = scalar_lea.vmem %s2, %s136
      %s138 = smul.u32 16, %s18
      %p139 = scmp.lt.s32.totalorder %s17, 1
      %s140 = scalar_select %p139, %s17, 1
      %p141 = scmp.lt.s32.totalorder %s138, 31
      %s142 = scalar_select %p141, %s138, 31
      %s143 = smul.addr %s142, 2
      %s144 = smul.addr %s140, 64
      %s145 = sadd.s32 %s143, %s144
      %s146 = smul.addr %s145, 8
      %s147 = scalar_lea.vmem %s2, %s146
      %s148 = smul.u32 16, %s18
      %v149 = vld [vmem:[%s0] sm:$0x1]
      %v150 = vld [vmem:[%s0 + $0x1] sm:$0x1]
      %v151 = vld [vmem:[%s0 + $0x2] sm:$0x1]
      %v152 = vld [vmem:[%s0 + $0x3] sm:$0x1]
      %v153 = vld [vmem:[%s0 + $0x4] sm:$0x1]
      %v154 = vld [vmem:[%s0 + $0x5] sm:$0x1]
      %v155 = vld [vmem:[%s0 + $0x6] sm:$0x1]
      %v156 = vld [vmem:[%s0 + $0x7] sm:$0x1]
      %v157 = vld [vmem:[%s0 + $0x8] sm:$0x1]
      %v158 = vld [vmem:[%s0 + $0x9] sm:$0x1]
      %v159 = vld [vmem:[%s0 + $0xa] sm:$0x1]
      %v160 = vld [vmem:[%s0 + $0xb] sm:$0x1]
      %v161 = vld [vmem:[%s0 + $0xc] sm:$0x1]
      %v162 = vld [vmem:[%s0 + $0xd] sm:$0x1]
      %v163 = vld [vmem:[%s0 + $0xe] sm:$0x1]
      %v164 = vld [vmem:[%s0 + $0xf] sm:$0x1]
      %v165 = vld [vmem:[%s1] sm:$0x1]
      %v166 = vld [vmem:[%s1 + $0x1] sm:$0x1]
      %v167 = vld [vmem:[%s1 + $0x2] sm:$0x1]
      %v168 = vld [vmem:[%s1 + $0x3] sm:$0x1]
      %v169 = vld [vmem:[%s1 + $0x4] sm:$0x1]
      %v170 = vld [vmem:[%s1 + $0x5] sm:$0x1]
      %v171 = vld [vmem:[%s1 + $0x6] sm:$0x1]
      %v172 = vld [vmem:[%s1 + $0x7] sm:$0x1]
      %v173 = vld [vmem:[%s1 + $0x8] sm:$0x1]
      %v174 = vld [vmem:[%s1 + $0x9] sm:$0x1]
      %v175 = vld [vmem:[%s1 + $0xa] sm:$0x1]
      %v176 = vld [vmem:[%s1 + $0xb] sm:$0x1]
      %v177 = vld [vmem:[%s1 + $0xc] sm:$0x1]
      %v178 = vld [vmem:[%s1 + $0xd] sm:$0x1]
      %v179 = vld [vmem:[%s1 + $0xe] sm:$0x1]
      %v180 = vld [vmem:[%s1 + $0xf] sm:$0x1]
      %p181 = scmp.eq.s32.totalorder %s18, 0
      // Predicated region
      $region29: #{tpu_custom_call.1} parent=27 // pred_check
        %p182 = pneg %p181
      $region30: #{tpu_custom_call.1} parent=27 // pred_check_branch
        %184 = sbr.rel (%p182) target = $region32
      $region31: #{tpu_custom_call.1} parent=27 // pred_region
        %v185 = vlaneseq
        %v186 = vshrl.u32 %v185, 7
        %v187 = vadd.s32 %v186, 8
        %v188 = vcvt.s32.f32 %v186
        %v189 = vcvt.s32.f32 %v187
        %v190 = vadd.f32 %v188, 1.0
        %v191 = vadd.f32 %v189, 1.0
        %v192 = vmul.f32 %v190, 0.39269906
        %v193 = vmul.f32 %v191, 0.39269906
        %v210 = vlaneseq
        %v211 = vshrl.u32 %v210, 7
        %v212 = vsub.s32 0, %v211
        %v213 = vrot.slane %v149, %v212
        %v214 = vlaneseq
        %v215 = vshrl.u32 %v214, 7
        %v216 = vsub.s32 0, %v215
        %v217 = vrot.slane %v150, %v216
        %v218 = vlaneseq
        %v219 = vshrl.u32 %v218, 7
        %v220 = vsub.s32 0, %v219
        %v221 = vrot.slane %v151, %v220
        %v222 = vlaneseq
        %v223 = vshrl.u32 %v222, 7
        %v224 = vsub.s32 0, %v223
        %v225 = vrot.slane %v152, %v224
        %v226 = vlaneseq
        %v227 = vshrl.u32 %v226, 7
        %v228 = vsub.s32 0, %v227
        %v229 = vrot.slane %v153, %v228
        %v230 = vlaneseq
        %v231 = vshrl.u32 %v230, 7
        %v232 = vsub.s32 0, %v231
        %v233 = vrot.slane %v154, %v232
        %v234 = vlaneseq
        %v235 = vshrl.u32 %v234, 7
        %v236 = vsub.s32 0, %v235
        %v237 = vrot.slane %v155, %v236
        %v238 = vlaneseq
        %v239 = vshrl.u32 %v238, 7
        %v240 = vsub.s32 0, %v239
        %v241 = vrot.slane %v156, %v240
        %v242 = vlaneseq
        %v243 = vshrl.u32 %v242, 7
        %v244 = vsub.s32 0, %v243
        %v245 = vrot.slane %v157, %v244
        %v246 = vlaneseq
        %v247 = vshrl.u32 %v246, 7
        %v248 = vsub.s32 0, %v247
        %v249 = vrot.slane %v158, %v248
        %v250 = vlaneseq
        %v251 = vshrl.u32 %v250, 7
        %v252 = vsub.s32 0, %v251
        %v253 = vrot.slane %v159, %v252
        %v254 = vlaneseq
        %v255 = vshrl.u32 %v254, 7
        %v256 = vsub.s32 0, %v255
        %v257 = vrot.slane %v160, %v256
        %v258 = vlaneseq
        %v259 = vshrl.u32 %v258, 7
        %v260 = vsub.s32 0, %v259
        %v261 = vrot.slane %v161, %v260
        %v262 = vlaneseq
        %v263 = vshrl.u32 %v262, 7
        %v264 = vsub.s32 0, %v263
        %v265 = vrot.slane %v162, %v264
        %v266 = vlaneseq
        %v267 = vshrl.u32 %v266, 7
        %v268 = vsub.s32 0, %v267
        %v269 = vrot.slane %v163, %v268
        %v270 = vlaneseq
        %v271 = vshrl.u32 %v270, 7
        %v272 = vsub.s32 0, %v271
        %v273 = vrot.slane %v164, %v272
        %v290 = vmul.f32 %v192, %v213
        %v291 = vmul.f32 %v193, %v213
        %v292 = vmul.f32 %v192, %v217
        %v293 = vmul.f32 %v193, %v217
        %v294 = vmul.f32 %v192, %v221
        %v295 = vmul.f32 %v193, %v221
        %v296 = vmul.f32 %v192, %v225
        %v297 = vmul.f32 %v193, %v225
        %v298 = vmul.f32 %v192, %v229
        %v299 = vmul.f32 %v193, %v229
        %v300 = vmul.f32 %v192, %v233
        %v301 = vmul.f32 %v193, %v233
        %v302 = vmul.f32 %v192, %v237
        %v303 = vmul.f32 %v193, %v237
        %v304 = vmul.f32 %v192, %v241
        %v305 = vmul.f32 %v193, %v241
        %v306 = vmul.f32 %v192, %v245
        %v307 = vmul.f32 %v193, %v245
        %v308 = vmul.f32 %v192, %v249
        %v309 = vmul.f32 %v193, %v249
        %v310 = vmul.f32 %v192, %v253
        %v311 = vmul.f32 %v193, %v253
        %v312 = vmul.f32 %v192, %v257
        %v313 = vmul.f32 %v193, %v257
        %v314 = vmul.f32 %v192, %v261
        %v315 = vmul.f32 %v193, %v261
        %v316 = vmul.f32 %v192, %v265
        %v317 = vmul.f32 %v193, %v265
        %v318 = vmul.f32 %v192, %v269
        %v319 = vmul.f32 %v193, %v269
        %v320 = vmul.f32 %v192, %v273
        %v321 = vmul.f32 %v193, %v273
        %v338 = vlaneseq
        %v339 = vshrl.u32 %v338, 7
        %v340 = vsub.s32 0, %v339
        %v341 = vrot.slane %v165, %v340
        %v342 = vlaneseq
        %v343 = vshrl.u32 %v342, 7
        %v344 = vsub.s32 0, %v343
        %v345 = vrot.slane %v166, %v344
        %v346 = vlaneseq
        %v347 = vshrl.u32 %v346, 7
        %v348 = vsub.s32 0, %v347
        %v349 = vrot.slane %v167, %v348
        %v350 = vlaneseq
        %v351 = vshrl.u32 %v350, 7
        %v352 = vsub.s32 0, %v351
        %v353 = vrot.slane %v168, %v352
        %v354 = vlaneseq
        %v355 = vshrl.u32 %v354, 7
        %v356 = vsub.s32 0, %v355
        %v357 = vrot.slane %v169, %v356
        %v358 = vlaneseq
        %v359 = vshrl.u32 %v358, 7
        %v360 = vsub.s32 0, %v359
        %v361 = vrot.slane %v170, %v360
        %v362 = vlaneseq
        %v363 = vshrl.u32 %v362, 7
        %v364 = vsub.s32 0, %v363
        %v365 = vrot.slane %v171, %v364
        %v366 = vlaneseq
        %v367 = vshrl.u32 %v366, 7
        %v368 = vsub.s32 0, %v367
        %v369 = vrot.slane %v172, %v368
        %v370 = vlaneseq
        %v371 = vshrl.u32 %v370, 7
        %v372 = vsub.s32 0, %v371
        %v373 = vrot.slane %v173, %v372
        %v374 = vlaneseq
        %v375 = vshrl.u32 %v374, 7
        %v376 = vsub.s32 0, %v375
        %v377 = vrot.slane %v174, %v376
        %v378 = vlaneseq
        %v379 = vshrl.u32 %v378, 7
        %v380 = vsub.s32 0, %v379
        %v381 = vrot.slane %v175, %v380
        %v382 = vlaneseq
        %v383 = vshrl.u32 %v382, 7
        %v384 = vsub.s32 0, %v383
        %v385 = vrot.slane %v176, %v384
        %v386 = vlaneseq
        %v387 = vshrl.u32 %v386, 7
        %v388 = vsub.s32 0, %v387
        %v389 = vrot.slane %v177, %v388
        %v390 = vlaneseq
        %v391 = vshrl.u32 %v390, 7
        %v392 = vsub.s32 0, %v391
        %v393 = vrot.slane %v178, %v392
        %v394 = vlaneseq
        %v395 = vshrl.u32 %v394, 7
        %v396 = vsub.s32 0, %v395
        %v397 = vrot.slane %v179, %v396
        %v398 = vlaneseq
        %v399 = vshrl.u32 %v398, 7
        %v400 = vsub.s32 0, %v399
        %v401 = vrot.slane %v180, %v400
        %v418 = vadd.f32 %v290, %v341
        %v419 = vadd.f32 %v291, %v341
        %v420 = vadd.f32 %v292, %v345
        %v421 = vadd.f32 %v293, %v345
        %v422 = vadd.f32 %v294, %v349
        %v423 = vadd.f32 %v295, %v349
        %v424 = vadd.f32 %v296, %v353
        %v425 = vadd.f32 %v297, %v353
        %v426 = vadd.f32 %v298, %v357
        %v427 = vadd.f32 %v299, %v357
        %v428 = vadd.f32 %v300, %v361
        %v429 = vadd.f32 %v301, %v361
        %v430 = vadd.f32 %v302, %v365
        %v431 = vadd.f32 %v303, %v365
        %v432 = vadd.f32 %v304, %v369
        %v433 = vadd.f32 %v305, %v369
        %v434 = vadd.f32 %v306, %v373
        %v435 = vadd.f32 %v307, %v373
        %v436 = vadd.f32 %v308, %v377
        %v437 = vadd.f32 %v309, %v377
        %v438 = vadd.f32 %v310, %v381
        %v439 = vadd.f32 %v311, %v381
        %v440 = vadd.f32 %v312, %v385
        %v441 = vadd.f32 %v313, %v385
        %v442 = vadd.f32 %v314, %v389
        %v443 = vadd.f32 %v315, %v389
        %v444 = vadd.f32 %v316, %v393
        %v445 = vadd.f32 %v317, %v393
        %v446 = vadd.f32 %v318, %v397
        %v447 = vadd.f32 %v319, %v397
        %v448 = vadd.f32 %v320, %v401
        %v449 = vadd.f32 %v321, %v401
        %v450 = vand.u32 2147483647, %v418
        %vm451 = vcmp.le.f32.partialorder %v450, 0.7853982
        %vm452 = vcmp.lt.s32.totalorder %v418, 0
        %v453 = vand.u32 %v418, 2139095040
        %v454 = vshrl.u32 %v453, 23
        %v455 = vsub.s32 %v454, 127
        %v456 = vand.u32 2147483647, %v418
        %v457 = vand.u32 %v456, 8388607
        %v458 = vor.u32 %v457, 8388608
        %v459 = vsub.s32 0, %v458
        %v460 = vadd.s32 %v455, 1
        %vm461 = vcmp.gt.s32.totalorder %v460, 0
        %v462 = vsel %vm461, %v460, 0
        %v463 = vshrl.u32 %v462, 5
        %v464 = vand.u32 %v462, 31
        %v465 = vsub.s32 32, %v464
        %v466 = vshrl.u32 683565275, %v465
        %v467 = vshll.u32 683565275, %v464
        %v468 = vshrl.u32 2475754826, %v465
        %v469 = vor.u32 %v467, %v468
        %v470 = vshll.u32 2475754826, %v464
        %v471 = vshrl.u32 2131351028, %v465
        %v472 = vor.u32 %v470, %v471
        %v473 = vshll.u32 2131351028, %v464
        %v474 = vshrl.u32 2102212464, %v465
        %v475 = vor.u32 %v473, %v474
        %v476 = vshll.u32 2102212464, %v464
        %v477 = vshrl.u32 920167782, %v465
        %v478 = vor.u32 %v476, %v477
        %v479 = vshll.u32 920167782, %v464
        %v480 = vshrl.u32 1326507024, %v465
        %v481 = vor.u32 %v479, %v480
        %vm482 = vcmp.lt.s32.totalorder %v463, 1
        %vm483 = vcmp.lt.s32.totalorder %v463, 2
        %vm484 = vcmp.lt.s32.totalorder %v463, 3
        %vm485 = vcmp.lt.s32.totalorder %v463, 4
        %v486 = vsel %vm482, %v466, %v469
        %v487 = vsel %vm485, %v475, 2102212464
        %v488 = vsel %vm484, %v472, %v487
        %v489 = vsel %vm483, %v486, %v488
        %v490 = vsel %vm482, %v469, %v472
        %v491 = vsel %vm485, %v478, 920167782
        %v492 = vsel %vm484, %v475, %v491
        %v493 = vsel %vm483, %v490, %v492
        %v494 = vsel %vm482, %v472, %v475
        %v495 = vsel %vm485, %v481, 1326507024
        %v496 = vsel %vm484, %v478, %v495
        %v497 = vsel %vm483, %v494, %v496
        %v498 = vshll.u32 %v458, 8
        %v499 = vmul.u32.u64.compose %v498, %v497
        %v500 = vextract.low.u32 %v499
        %v501 = vextract.high.u32 %v499
        %v502 = vmul.u32.u64.compose %v498, %v493
        %v503 = vextract.low.u32 %v502
        %v504 = vextract.high.u32 %v502
        %v505 = vmul.u32 %v498, %v489
        %v506 = vadd.s32 %v501, %v503
        %vm507 = vc.u32 %v501, %v503
        %v508 = vadd.s32 %v504, 1
        %v509 = vsel %vm507, %v508, %v504
        %v510 = vadd.s32 %v505, %v509
        %v511 = vadd.s32 %v510, 536870912
        %v512 = vshrl.u32 %v511, 30
        %v513 = vshll.u32 %v512, 30
        %v514 = vsub.s32 %v510, %v513
        %vm515 = vcmp.lt.s32.totalorder %v514, 0
        %v516 = vsub.s32 0, %v514
        %v517 = vsel %vm515, %v516, %v514
        %v518 = vclz %v517
        %v519 = vsub.s32 %v518, 2
        %vm520 = vcmp.gt.s32.totalorder 0, %v519
        %v521 = vsel %vm520, 0, %v519
        %v522 = vsub.s32 32, %v521
        %v523 = vshll.u32 %v514, %v521
        %v524 = vshrl.u32 %v506, %v522
        %v525 = vor.u32 %v523, %v524
        %v526 = vsub.s32 4294967266, %v521
        %v527 = vadd.s32 %v526, 127
        %v528 = vshll.u32 %v527, 23
        %v529 = vor.u32 4788187, %v528
        %v530 = vand.u32 2147483647, %v529
        %v532 = vcvt.s32.f32 %v525
        %v533 = vmul.f32 %v532, %v530
        %v534 = vxor.u32 %v533, 2147483648
        %v535 = vsel %vm452, %v534, %v533
        %v536 = vsub.s32 4, %v512
        %v537 = vsel %vm452, %v536, %v512
        %v538 = vsel %vm451, %v418, %v535
        %v539 = vsel %vm451, 0, %v537
        %v540 = vcosq.f32.pop %v538
        %v541 = vsinq.f32.pop %v538
        %vm542 = vweird.f32 %v418
        %v543 = vadd.s32 %v539, 3
        %v544 = vand.u32 %v543, 3
        %vm545 = vcmp.lt.s32.totalorder %v544, 2
        %vm546 = vcmp.eq.s32.totalorder %v544, 0
        %v547 = vxor.u32 %v541, 2147483648
        %v548 = vsel %vm546, %v540, %v547
        %vm549 = vcmp.eq.s32.totalorder %v544, 2
        %v550 = vxor.u32 %v540, 2147483648
        %v551 = vsel %vm549, %v550, %v541
        %v552 = vsel %vm545, %v548, %v551
        %v553 = vsel %vm542, nan, %v552
        %v554 = vand.u32 2147483647, %v419
        %vm555 = vcmp.le.f32.partialorder %v554, 0.7853982
        %vm556 = vcmp.lt.s32.totalorder %v419, 0
        %v557 = vand.u32 %v419, 2139095040
        %v558 = vshrl.u32 %v557, 23
        %v559 = vsub.s32 %v558, 127
        %v560 = vand.u32 2147483647, %v419
        %v561 = vand.u32 %v560, 8388607
        %v562 = vor.u32 %v561, 8388608
        %v563 = vsub.s32 0, %v562
        %v564 = vadd.s32 %v559, 1
        %vm565 = vcmp.gt.s32.totalorder %v564, 0
        %v566 = vsel %vm565, %v564, 0
        %v567 = vshrl.u32 %v566, 5
        %v568 = vand.u32 %v566, 31
        %v569 = vsub.s32 32, %v568
        %v570 = vshrl.u32 683565275, %v569
        %v571 = vshll.u32 683565275, %v568
        %v572 = vshrl.u32 2475754826, %v569
        %v573 = vor.u32 %v571, %v572
        %v574 = vshll.u32 2475754826, %v568
        %v575 = vshrl.u32 2131351028, %v569
        %v576 = vor.u32 %v574, %v575
        %v577 = vshll.u32 2131351028, %v568
        %v578 = vshrl.u32 2102212464, %v569
        %v579 = vor.u32 %v577, %v578
        %v580 = vshll.u32 2102212464, %v568
        %v581 = vshrl.u32 920167782, %v569
        %v582 = vor.u32 %v580, %v581
        %v583 = vshll.u32 920167782, %v568
        %v584 = vshrl.u32 1326507024, %v569
        %v585 = vor.u32 %v583, %v584
        %vm586 = vcmp.lt.s32.totalorder %v567, 1
        %vm587 = vcmp.lt.s32.totalorder %v567, 2
        %vm588 = vcmp.lt.s32.totalorder %v567, 3
        %vm589 = vcmp.lt.s32.totalorder %v567, 4
        %v590 = vsel %vm586, %v570, %v573
        %v591 = vsel %vm589, %v579, 2102212464
        %v592 = vsel %vm588, %v576, %v591
        %v593 = vsel %vm587, %v590, %v592
        %v594 = vsel %vm586, %v573, %v576
        %v595 = vsel %vm589, %v582, 920167782
        %v596 = vsel %vm588, %v579, %v595
        %v597 = vsel %vm587, %v594, %v596
        %v598 = vsel %vm586, %v576, %v579
        %v599 = vsel %vm589, %v585, 1326507024
        %v600 = vsel %vm588, %v582, %v599
        %v601 = vsel %vm587, %v598, %v600
        %v602 = vshll.u32 %v562, 8
        %v603 = vmul.u32.u64.compose %v602, %v601
        %v604 = vextract.low.u32 %v603
        %v605 = vextract.high.u32 %v603
        %v606 = vmul.u32.u64.compose %v602, %v597
        %v607 = vextract.low.u32 %v606
        %v608 = vextract.high.u32 %v606
        %v609 = vmul.u32 %v602, %v593
        %v610 = vadd.s32 %v605, %v607
        %vm611 = vc.u32 %v605, %v607
        %v612 = vadd.s32 %v608, 1
        %v613 = vsel %vm611, %v612, %v608
        %v614 = vadd.s32 %v609, %v613
        %v615 = vadd.s32 %v614, 536870912
        %v616 = vshrl.u32 %v615, 30
        %v617 = vshll.u32 %v616, 30
        %v618 = vsub.s32 %v614, %v617
        %vm619 = vcmp.lt.s32.totalorder %v618, 0
        %v620 = vsub.s32 0, %v618
        %v621 = vsel %vm619, %v620, %v618
        %v622 = vclz %v621
        %v623 = vsub.s32 %v622, 2
        %vm624 = vcmp.gt.s32.totalorder 0, %v623
        %v625 = vsel %vm624, 0, %v623
        %v626 = vsub.s32 32, %v625
        %v627 = vshll.u32 %v618, %v625
        %v628 = vshrl.u32 %v610, %v626
        %v629 = vor.u32 %v627, %v628
        %v630 = vsub.s32 4294967266, %v625
        %v631 = vadd.s32 %v630, 127
        %v632 = vshll.u32 %v631, 23
        %v633 = vor.u32 4788187, %v632
        %v634 = vand.u32 2147483647, %v633
        %v636 = vcvt.s32.f32 %v629
        %v637 = vmul.f32 %v636, %v634
        %v638 = vxor.u32 %v637, 2147483648
        %v639 = vsel %vm556, %v638, %v637
        %v640 = vsub.s32 4, %v616
        %v641 = vsel %vm556, %v640, %v616
        %v642 = vsel %vm555, %v419, %v639
        %v643 = vsel %vm555, 0, %v641
        %v644 = vcosq.f32.pop %v642
        %v645 = vsinq.f32.pop %v642
        %vm646 = vweird.f32 %v419
        %v647 = vadd.s32 %v643, 3
        %v648 = vand.u32 %v647, 3
        %vm649 = vcmp.lt.s32.totalorder %v648, 2
        %vm650 = vcmp.eq.s32.totalorder %v648, 0
        %v651 = vxor.u32 %v645, 2147483648
        %v652 = vsel %vm650, %v644, %v651
        %vm653 = vcmp.eq.s32.totalorder %v648, 2
        %v654 = vxor.u32 %v644, 2147483648
        %v655 = vsel %vm653, %v654, %v645
        %v656 = vsel %vm649, %v652, %v655
        %v657 = vsel %vm646, nan, %v656
        %v658 = vand.u32 2147483647, %v420
        %vm659 = vcmp.le.f32.partialorder %v658, 0.7853982
        %vm660 = vcmp.lt.s32.totalorder %v420, 0
        %v661 = vand.u32 %v420, 2139095040
        %v662 = vshrl.u32 %v661, 23
        %v663 = vsub.s32 %v662, 127
        %v664 = vand.u32 2147483647, %v420
        %v665 = vand.u32 %v664, 8388607
        %v666 = vor.u32 %v665, 8388608
        %v667 = vsub.s32 0, %v666
        %v668 = vadd.s32 %v663, 1
        %vm669 = vcmp.gt.s32.totalorder %v668, 0
        %v670 = vsel %vm669, %v668, 0
        %v671 = vshrl.u32 %v670, 5
        %v672 = vand.u32 %v670, 31
        %v673 = vsub.s32 32, %v672
        %v674 = vshrl.u32 683565275, %v673
        %v675 = vshll.u32 683565275, %v672
        %v676 = vshrl.u32 2475754826, %v673
        %v677 = vor.u32 %v675, %v676
        %v678 = vshll.u32 2475754826, %v672
        %v679 = vshrl.u32 2131351028, %v673
        %v680 = vor.u32 %v678, %v679
        %v681 = vshll.u32 2131351028, %v672
        %v682 = vshrl.u32 2102212464, %v673
        %v683 = vor.u32 %v681, %v682
        %v684 = vshll.u32 2102212464, %v672
        %v685 = vshrl.u32 920167782, %v673
        %v686 = vor.u32 %v684, %v685
        %v687 = vshll.u32 920167782, %v672
        %v688 = vshrl.u32 1326507024, %v673
        %v689 = vor.u32 %v687, %v688
        %vm690 = vcmp.lt.s32.totalorder %v671, 1
        %vm691 = vcmp.lt.s32.totalorder %v671, 2
        %vm692 = vcmp.lt.s32.totalorder %v671, 3
        %vm693 = vcmp.lt.s32.totalorder %v671, 4
        %v694 = vsel %vm690, %v674, %v677
        %v695 = vsel %vm693, %v683, 2102212464
        %v696 = vsel %vm692, %v680, %v695
        %v697 = vsel %vm691, %v694, %v696
        %v698 = vsel %vm690, %v677, %v680
        %v699 = vsel %vm693, %v686, 920167782
        %v700 = vsel %vm692, %v683, %v699
        %v701 = vsel %vm691, %v698, %v700
        %v702 = vsel %vm690, %v680, %v683
        %v703 = vsel %vm693, %v689, 1326507024
        %v704 = vsel %vm692, %v686, %v703
        %v705 = vsel %vm691, %v702, %v704
        %v706 = vshll.u32 %v666, 8
        %v707 = vmul.u32.u64.compose %v706, %v705
        %v708 = vextract.low.u32 %v707
        %v709 = vextract.high.u32 %v707
        %v710 = vmul.u32.u64.compose %v706, %v701
        %v711 = vextract.low.u32 %v710
        %v712 = vextract.high.u32 %v710
        %v713 = vmul.u32 %v706, %v697
        %v714 = vadd.s32 %v709, %v711
        %vm715 = vc.u32 %v709, %v711
        %v716 = vadd.s32 %v712, 1
        %v717 = vsel %vm715, %v716, %v712
        %v718 = vadd.s32 %v713, %v717
        %v719 = vadd.s32 %v718, 536870912
        %v720 = vshrl.u32 %v719, 30
        %v721 = vshll.u32 %v720, 30
        %v722 = vsub.s32 %v718, %v721
        %vm723 = vcmp.lt.s32.totalorder %v722, 0
        %v724 = vsub.s32 0, %v722
        %v725 = vsel %vm723, %v724, %v722
        %v726 = vclz %v725
        %v727 = vsub.s32 %v726, 2
        %vm728 = vcmp.gt.s32.totalorder 0, %v727
        %v729 = vsel %vm728, 0, %v727
        %v730 = vsub.s32 32, %v729
        %v731 = vshll.u32 %v722, %v729
        %v732 = vshrl.u32 %v714, %v730
        %v733 = vor.u32 %v731, %v732
        %v734 = vsub.s32 4294967266, %v729
        %v735 = vadd.s32 %v734, 127
        %v736 = vshll.u32 %v735, 23
        %v737 = vor.u32 4788187, %v736
        %v738 = vand.u32 2147483647, %v737
        %v740 = vcvt.s32.f32 %v733
        %v741 = vmul.f32 %v740, %v738
        %v742 = vxor.u32 %v741, 2147483648
        %v743 = vsel %vm660, %v742, %v741
        %v744 = vsub.s32 4, %v720
        %v745 = vsel %vm660, %v744, %v720
        %v746 = vsel %vm659, %v420, %v743
        %v747 = vsel %vm659, 0, %v745
        %v748 = vcosq.f32.pop %v746
        %v749 = vsinq.f32.pop %v746
        %vm750 = vweird.f32 %v420
        %v751 = vadd.s32 %v747, 3
        %v752 = vand.u32 %v751, 3
        %vm753 = vcmp.lt.s32.totalorder %v752, 2
        %vm754 = vcmp.eq.s32.totalorder %v752, 0
        %v755 = vxor.u32 %v749, 2147483648
        %v756 = vsel %vm754, %v748, %v755
        %vm757 = vcmp.eq.s32.totalorder %v752, 2
        %v758 = vxor.u32 %v748, 2147483648
        %v759 = vsel %vm757, %v758, %v749
        %v760 = vsel %vm753, %v756, %v759
        %v761 = vsel %vm750, nan, %v760
        %v762 = vand.u32 2147483647, %v421
        %vm763 = vcmp.le.f32.partialorder %v762, 0.7853982
        %vm764 = vcmp.lt.s32.totalorder %v421, 0
        %v765 = vand.u32 %v421, 2139095040
        %v766 = vshrl.u32 %v765, 23
        %v767 = vsub.s32 %v766, 127
        %v768 = vand.u32 2147483647, %v421
        %v769 = vand.u32 %v768, 8388607
        %v770 = vor.u32 %v769, 8388608
        %v771 = vsub.s32 0, %v770
        %v772 = vadd.s32 %v767, 1
        %vm773 = vcmp.gt.s32.totalorder %v772, 0
        %v774 = vsel %vm773, %v772, 0
        %v775 = vshrl.u32 %v774, 5
        %v776 = vand.u32 %v774, 31
        %v777 = vsub.s32 32, %v776
        %v778 = vshrl.u32 683565275, %v777
        %v779 = vshll.u32 683565275, %v776
        %v780 = vshrl.u32 2475754826, %v777
        %v781 = vor.u32 %v779, %v780
        %v782 = vshll.u32 2475754826, %v776
        %v783 = vshrl.u32 2131351028, %v777
        %v784 = vor.u32 %v782, %v783
        %v785 = vshll.u32 2131351028, %v776
        %v786 = vshrl.u32 2102212464, %v777
        %v787 = vor.u32 %v785, %v786
        %v788 = vshll.u32 2102212464, %v776
        %v789 = vshrl.u32 920167782, %v777
        %v790 = vor.u32 %v788, %v789
        %v791 = vshll.u32 920167782, %v776
        %v792 = vshrl.u32 1326507024, %v777
        %v793 = vor.u32 %v791, %v792
        %vm794 = vcmp.lt.s32.totalorder %v775, 1
        %vm795 = vcmp.lt.s32.totalorder %v775, 2
        %vm796 = vcmp.lt.s32.totalorder %v775, 3
        %vm797 = vcmp.lt.s32.totalorder %v775, 4
        %v798 = vsel %vm794, %v778, %v781
        %v799 = vsel %vm797, %v787, 2102212464
        %v800 = vsel %vm796, %v784, %v799
        %v801 = vsel %vm795, %v798, %v800
        %v802 = vsel %vm794, %v781, %v784
        %v803 = vsel %vm797, %v790, 920167782
        %v804 = vsel %vm796, %v787, %v803
        %v805 = vsel %vm795, %v802, %v804
        %v806 = vsel %vm794, %v784, %v787
        %v807 = vsel %vm797, %v793, 1326507024
        %v808 = vsel %vm796, %v790, %v807
        %v809 = vsel %vm795, %v806, %v808
        %v810 = vshll.u32 %v770, 8
        %v811 = vmul.u32.u64.compose %v810, %v809
        %v812 = vextract.low.u32 %v811
        %v813 = vextract.high.u32 %v811
        %v814 = vmul.u32.u64.compose %v810, %v805
        %v815 = vextract.low.u32 %v814
        %v816 = vextract.high.u32 %v814
        %v817 = vmul.u32 %v810, %v801
        %v818 = vadd.s32 %v813, %v815
        %vm819 = vc.u32 %v813, %v815
        %v820 = vadd.s32 %v816, 1
        %v821 = vsel %vm819, %v820, %v816
        %v822 = vadd.s32 %v817, %v821
        %v823 = vadd.s32 %v822, 536870912
        %v824 = vshrl.u32 %v823, 30
        %v825 = vshll.u32 %v824, 30
        %v826 = vsub.s32 %v822, %v825
        %vm827 = vcmp.lt.s32.totalorder %v826, 0
        %v828 = vsub.s32 0, %v826
        %v829 = vsel %vm827, %v828, %v826
        %v830 = vclz %v829
        %v831 = vsub.s32 %v830, 2
        %vm832 = vcmp.gt.s32.totalorder 0, %v831
        %v833 = vsel %vm832, 0, %v831
        %v834 = vsub.s32 32, %v833
        %v835 = vshll.u32 %v826, %v833
        %v836 = vshrl.u32 %v818, %v834
        %v837 = vor.u32 %v835, %v836
        %v838 = vsub.s32 4294967266, %v833
        %v839 = vadd.s32 %v838, 127
        %v840 = vshll.u32 %v839, 23
        %v841 = vor.u32 4788187, %v840
        %v842 = vand.u32 2147483647, %v841
        %v844 = vcvt.s32.f32 %v837
        %v845 = vmul.f32 %v844, %v842
        %v846 = vxor.u32 %v845, 2147483648
        %v847 = vsel %vm764, %v846, %v845
        %v848 = vsub.s32 4, %v824
        %v849 = vsel %vm764, %v848, %v824
        %v850 = vsel %vm763, %v421, %v847
        %v851 = vsel %vm763, 0, %v849
        %v852 = vcosq.f32.pop %v850
        %v853 = vsinq.f32.pop %v850
        %vm854 = vweird.f32 %v421
        %v855 = vadd.s32 %v851, 3
        %v856 = vand.u32 %v855, 3
        %vm857 = vcmp.lt.s32.totalorder %v856, 2
        %vm858 = vcmp.eq.s32.totalorder %v856, 0
        %v859 = vxor.u32 %v853, 2147483648
        %v860 = vsel %vm858, %v852, %v859
        %vm861 = vcmp.eq.s32.totalorder %v856, 2
        %v862 = vxor.u32 %v852, 2147483648
        %v863 = vsel %vm861, %v862, %v853
        %v864 = vsel %vm857, %v860, %v863
        %v865 = vsel %vm854, nan, %v864
        %v866 = vand.u32 2147483647, %v422
        %vm867 = vcmp.le.f32.partialorder %v866, 0.7853982
        %vm868 = vcmp.lt.s32.totalorder %v422, 0
        %v869 = vand.u32 %v422, 2139095040
        %v870 = vshrl.u32 %v869, 23
        %v871 = vsub.s32 %v870, 127
        %v872 = vand.u32 2147483647, %v422
        %v873 = vand.u32 %v872, 8388607
        %v874 = vor.u32 %v873, 8388608
        %v875 = vsub.s32 0, %v874
        %v876 = vadd.s32 %v871, 1
        %vm877 = vcmp.gt.s32.totalorder %v876, 0
        %v878 = vsel %vm877, %v876, 0
        %v879 = vshrl.u32 %v878, 5
        %v880 = vand.u32 %v878, 31
        %v881 = vsub.s32 32, %v880
        %v882 = vshrl.u32 683565275, %v881
        %v883 = vshll.u32 683565275, %v880
        %v884 = vshrl.u32 2475754826, %v881
        %v885 = vor.u32 %v883, %v884
        %v886 = vshll.u32 2475754826, %v880
        %v887 = vshrl.u32 2131351028, %v881
        %v888 = vor.u32 %v886, %v887
        %v889 = vshll.u32 2131351028, %v880
        %v890 = vshrl.u32 2102212464, %v881
        %v891 = vor.u32 %v889, %v890
        %v892 = vshll.u32 2102212464, %v880
        %v893 = vshrl.u32 920167782, %v881
        %v894 = vor.u32 %v892, %v893
        %v895 = vshll.u32 920167782, %v880
        %v896 = vshrl.u32 1326507024, %v881
        %v897 = vor.u32 %v895, %v896
        %vm898 = vcmp.lt.s32.totalorder %v879, 1
        %vm899 = vcmp.lt.s32.totalorder %v879, 2
        %vm900 = vcmp.lt.s32.totalorder %v879, 3
        %vm901 = vcmp.lt.s32.totalorder %v879, 4
        %v902 = vsel %vm898, %v882, %v885
        %v903 = vsel %vm901, %v891, 2102212464
        %v904 = vsel %vm900, %v888, %v903
        %v905 = vsel %vm899, %v902, %v904
        %v906 = vsel %vm898, %v885, %v888
        %v907 = vsel %vm901, %v894, 920167782
        %v908 = vsel %vm900, %v891, %v907
        %v909 = vsel %vm899, %v906, %v908
        %v910 = vsel %vm898, %v888, %v891
        %v911 = vsel %vm901, %v897, 1326507024
        %v912 = vsel %vm900, %v894, %v911
        %v913 = vsel %vm899, %v910, %v912
        %v914 = vshll.u32 %v874, 8
        %v915 = vmul.u32.u64.compose %v914, %v913
        %v916 = vextract.low.u32 %v915
        %v917 = vextract.high.u32 %v915
        %v918 = vmul.u32.u64.compose %v914, %v909
        %v919 = vextract.low.u32 %v918
        %v920 = vextract.high.u32 %v918
        %v921 = vmul.u32 %v914, %v905
        %v922 = vadd.s32 %v917, %v919
        %vm923 = vc.u32 %v917, %v919
        %v924 = vadd.s32 %v920, 1
        %v925 = vsel %vm923, %v924, %v920
        %v926 = vadd.s32 %v921, %v925
        %v927 = vadd.s32 %v926, 536870912
        %v928 = vshrl.u32 %v927, 30
        %v929 = vshll.u32 %v928, 30
        %v930 = vsub.s32 %v926, %v929
        %vm931 = vcmp.lt.s32.totalorder %v930, 0
        %v932 = vsub.s32 0, %v930
        %v933 = vsel %vm931, %v932, %v930
        %v934 = vclz %v933
        %v935 = vsub.s32 %v934, 2
        %vm936 = vcmp.gt.s32.totalorder 0, %v935
        %v937 = vsel %vm936, 0, %v935
        %v938 = vsub.s32 32, %v937
        %v939 = vshll.u32 %v930, %v937
        %v940 = vshrl.u32 %v922, %v938
        %v941 = vor.u32 %v939, %v940
        %v942 = vsub.s32 4294967266, %v937
        %v943 = vadd.s32 %v942, 127
        %v944 = vshll.u32 %v943, 23
        %v945 = vor.u32 4788187, %v944
        %v946 = vand.u32 2147483647, %v945
        %v948 = vcvt.s32.f32 %v941
        %v949 = vmul.f32 %v948, %v946
        %v950 = vxor.u32 %v949, 2147483648
        %v951 = vsel %vm868, %v950, %v949
        %v952 = vsub.s32 4, %v928
        %v953 = vsel %vm868, %v952, %v928
        %v954 = vsel %vm867, %v422, %v951
        %v955 = vsel %vm867, 0, %v953
        %v956 = vcosq.f32.pop %v954
        %v957 = vsinq.f32.pop %v954
        %vm958 = vweird.f32 %v422
        %v959 = vadd.s32 %v955, 3
        %v960 = vand.u32 %v959, 3
        %vm961 = vcmp.lt.s32.totalorder %v960, 2
        %vm962 = vcmp.eq.s32.totalorder %v960, 0
        %v963 = vxor.u32 %v957, 2147483648
        %v964 = vsel %vm962, %v956, %v963
        %vm965 = vcmp.eq.s32.totalorder %v960, 2
        %v966 = vxor.u32 %v956, 2147483648
        %v967 = vsel %vm965, %v966, %v957
        %v968 = vsel %vm961, %v964, %v967
        %v969 = vsel %vm958, nan, %v968
        %v970 = vand.u32 2147483647, %v423
        %vm971 = vcmp.le.f32.partialorder %v970, 0.7853982
        %vm972 = vcmp.lt.s32.totalorder %v423, 0
        %v973 = vand.u32 %v423, 2139095040
        %v974 = vshrl.u32 %v973, 23
        %v975 = vsub.s32 %v974, 127
        %v976 = vand.u32 2147483647, %v423
        %v977 = vand.u32 %v976, 8388607
        %v978 = vor.u32 %v977, 8388608
        %v979 = vsub.s32 0, %v978
        %v980 = vadd.s32 %v975, 1
        %vm981 = vcmp.gt.s32.totalorder %v980, 0
        %v982 = vsel %vm981, %v980, 0
        %v983 = vshrl.u32 %v982, 5
        %v984 = vand.u32 %v982, 31
        %v985 = vsub.s32 32, %v984
        %v986 = vshrl.u32 683565275, %v985
        %v987 = vshll.u32 683565275, %v984
        %v988 = vshrl.u32 2475754826, %v985
        %v989 = vor.u32 %v987, %v988
        %v990 = vshll.u32 2475754826, %v984
        %v991 = vshrl.u32 2131351028, %v985
        %v992 = vor.u32 %v990, %v991
        %v993 = vshll.u32 2131351028, %v984
        %v994 = vshrl.u32 2102212464, %v985
        %v995 = vor.u32 %v993, %v994
        %v996 = vshll.u32 2102212464, %v984
        %v997 = vshrl.u32 920167782, %v985
        %v998 = vor.u32 %v996, %v997
        %v999 = vshll.u32 920167782, %v984
        %v1000 = vshrl.u32 1326507024, %v985
        %v1001 = vor.u32 %v999, %v1000
        %vm1002 = vcmp.lt.s32.totalorder %v983, 1
        %vm1003 = vcmp.lt.s32.totalorder %v983, 2
        %vm1004 = vcmp.lt.s32.totalorder %v983, 3
        %vm1005 = vcmp.lt.s32.totalorder %v983, 4
        %v1006 = vsel %vm1002, %v986, %v989
        %v1007 = vsel %vm1005, %v995, 2102212464
        %v1008 = vsel %vm1004, %v992, %v1007
        %v1009 = vsel %vm1003, %v1006, %v1008
        %v1010 = vsel %vm1002, %v989, %v992
        %v1011 = vsel %vm1005, %v998, 920167782
        %v1012 = vsel %vm1004, %v995, %v1011
        %v1013 = vsel %vm1003, %v1010, %v1012
        %v1014 = vsel %vm1002, %v992, %v995
        %v1015 = vsel %vm1005, %v1001, 1326507024
        %v1016 = vsel %vm1004, %v998, %v1015
        %v1017 = vsel %vm1003, %v1014, %v1016
        %v1018 = vshll.u32 %v978, 8
        %v1019 = vmul.u32.u64.compose %v1018, %v1017
        %v1020 = vextract.low.u32 %v1019
        %v1021 = vextract.high.u32 %v1019
        %v1022 = vmul.u32.u64.compose %v1018, %v1013
        %v1023 = vextract.low.u32 %v1022
        %v1024 = vextract.high.u32 %v1022
        %v1025 = vmul.u32 %v1018, %v1009
        %v1026 = vadd.s32 %v1021, %v1023
        %vm1027 = vc.u32 %v1021, %v1023
        %v1028 = vadd.s32 %v1024, 1
        %v1029 = vsel %vm1027, %v1028, %v1024
        %v1030 = vadd.s32 %v1025, %v1029
        %v1031 = vadd.s32 %v1030, 536870912
        %v1032 = vshrl.u32 %v1031, 30
        %v1033 = vshll.u32 %v1032, 30
        %v1034 = vsub.s32 %v1030, %v1033
        %vm1035 = vcmp.lt.s32.totalorder %v1034, 0
        %v1036 = vsub.s32 0, %v1034
        %v1037 = vsel %vm1035, %v1036, %v1034
        %v1038 = vclz %v1037
        %v1039 = vsub.s32 %v1038, 2
        %vm1040 = vcmp.gt.s32.totalorder 0, %v1039
        %v1041 = vsel %vm1040, 0, %v1039
        %v1042 = vsub.s32 32, %v1041
        %v1043 = vshll.u32 %v1034, %v1041
        %v1044 = vshrl.u32 %v1026, %v1042
        %v1045 = vor.u32 %v1043, %v1044
        %v1046 = vsub.s32 4294967266, %v1041
        %v1047 = vadd.s32 %v1046, 127
        %v1048 = vshll.u32 %v1047, 23
        %v1049 = vor.u32 4788187, %v1048
        %v1050 = vand.u32 2147483647, %v1049
        %v1052 = vcvt.s32.f32 %v1045
        %v1053 = vmul.f32 %v1052, %v1050
        %v1054 = vxor.u32 %v1053, 2147483648
        %v1055 = vsel %vm972, %v1054, %v1053
        %v1056 = vsub.s32 4, %v1032
        %v1057 = vsel %vm972, %v1056, %v1032
        %v1058 = vsel %vm971, %v423, %v1055
        %v1059 = vsel %vm971, 0, %v1057
        %v1060 = vcosq.f32.pop %v1058
        %v1061 = vsinq.f32.pop %v1058
        %vm1062 = vweird.f32 %v423
        %v1063 = vadd.s32 %v1059, 3
        %v1064 = vand.u32 %v1063, 3
        %vm1065 = vcmp.lt.s32.totalorder %v1064, 2
        %vm1066 = vcmp.eq.s32.totalorder %v1064, 0
        %v1067 = vxor.u32 %v1061, 2147483648
        %v1068 = vsel %vm1066, %v1060, %v1067
        %vm1069 = vcmp.eq.s32.totalorder %v1064, 2
        %v1070 = vxor.u32 %v1060, 2147483648
        %v1071 = vsel %vm1069, %v1070, %v1061
        %v1072 = vsel %vm1065, %v1068, %v1071
        %v1073 = vsel %vm1062, nan, %v1072
        %v1074 = vand.u32 2147483647, %v424
        %vm1075 = vcmp.le.f32.partialorder %v1074, 0.7853982
        %vm1076 = vcmp.lt.s32.totalorder %v424, 0
        %v1077 = vand.u32 %v424, 2139095040
        %v1078 = vshrl.u32 %v1077, 23
        %v1079 = vsub.s32 %v1078, 127
        %v1080 = vand.u32 2147483647, %v424
        %v1081 = vand.u32 %v1080, 8388607
        %v1082 = vor.u32 %v1081, 8388608
        %v1083 = vsub.s32 0, %v1082
        %v1084 = vadd.s32 %v1079, 1
        %vm1085 = vcmp.gt.s32.totalorder %v1084, 0
        %v1086 = vsel %vm1085, %v1084, 0
        %v1087 = vshrl.u32 %v1086, 5
        %v1088 = vand.u32 %v1086, 31
        %v1089 = vsub.s32 32, %v1088
        %v1090 = vshrl.u32 683565275, %v1089
        %v1091 = vshll.u32 683565275, %v1088
        %v1092 = vshrl.u32 2475754826, %v1089
        %v1093 = vor.u32 %v1091, %v1092
        %v1094 = vshll.u32 2475754826, %v1088
        %v1095 = vshrl.u32 2131351028, %v1089
        %v1096 = vor.u32 %v1094, %v1095
        %v1097 = vshll.u32 2131351028, %v1088
        %v1098 = vshrl.u32 2102212464, %v1089
        %v1099 = vor.u32 %v1097, %v1098
        %v1100 = vshll.u32 2102212464, %v1088
        %v1101 = vshrl.u32 920167782, %v1089
        %v1102 = vor.u32 %v1100, %v1101
        %v1103 = vshll.u32 920167782, %v1088
        %v1104 = vshrl.u32 1326507024, %v1089
        %v1105 = vor.u32 %v1103, %v1104
        %vm1106 = vcmp.lt.s32.totalorder %v1087, 1
        %vm1107 = vcmp.lt.s32.totalorder %v1087, 2
        %vm1108 = vcmp.lt.s32.totalorder %v1087, 3
        %vm1109 = vcmp.lt.s32.totalorder %v1087, 4
        %v1110 = vsel %vm1106, %v1090, %v1093
        %v1111 = vsel %vm1109, %v1099, 2102212464
        %v1112 = vsel %vm1108, %v1096, %v1111
        %v1113 = vsel %vm1107, %v1110, %v1112
        %v1114 = vsel %vm1106, %v1093, %v1096
        %v1115 = vsel %vm1109, %v1102, 920167782
        %v1116 = vsel %vm1108, %v1099, %v1115
        %v1117 = vsel %vm1107, %v1114, %v1116
        %v1118 = vsel %vm1106, %v1096, %v1099
        %v1119 = vsel %vm1109, %v1105, 1326507024
        %v1120 = vsel %vm1108, %v1102, %v1119
        %v1121 = vsel %vm1107, %v1118, %v1120
        %v1122 = vshll.u32 %v1082, 8
        %v1123 = vmul.u32.u64.compose %v1122, %v1121
        %v1124 = vextract.low.u32 %v1123
        %v1125 = vextract.high.u32 %v1123
        %v1126 = vmul.u32.u64.compose %v1122, %v1117
        %v1127 = vextract.low.u32 %v1126
        %v1128 = vextract.high.u32 %v1126
        %v1129 = vmul.u32 %v1122, %v1113
        %v1130 = vadd.s32 %v1125, %v1127
        %vm1131 = vc.u32 %v1125, %v1127
        %v1132 = vadd.s32 %v1128, 1
        %v1133 = vsel %vm1131, %v1132, %v1128
        %v1134 = vadd.s32 %v1129, %v1133
        %v1135 = vadd.s32 %v1134, 536870912
        %v1136 = vshrl.u32 %v1135, 30
        %v1137 = vshll.u32 %v1136, 30
        %v1138 = vsub.s32 %v1134, %v1137
        %vm1139 = vcmp.lt.s32.totalorder %v1138, 0
        %v1140 = vsub.s32 0, %v1138
        %v1141 = vsel %vm1139, %v1140, %v1138
        %v1142 = vclz %v1141
        %v1143 = vsub.s32 %v1142, 2
        %vm1144 = vcmp.gt.s32.totalorder 0, %v1143
        %v1145 = vsel %vm1144, 0, %v1143
        %v1146 = vsub.s32 32, %v1145
        %v1147 = vshll.u32 %v1138, %v1145
        %v1148 = vshrl.u32 %v1130, %v1146
        %v1149 = vor.u32 %v1147, %v1148
        %v1150 = vsub.s32 4294967266, %v1145
        %v1151 = vadd.s32 %v1150, 127
        %v1152 = vshll.u32 %v1151, 23
        %v1153 = vor.u32 4788187, %v1152
        %v1154 = vand.u32 2147483647, %v1153
        %v1156 = vcvt.s32.f32 %v1149
        %v1157 = vmul.f32 %v1156, %v1154
        %v1158 = vxor.u32 %v1157, 2147483648
        %v1159 = vsel %vm1076, %v1158, %v1157
        %v1160 = vsub.s32 4, %v1136
        %v1161 = vsel %vm1076, %v1160, %v1136
        %v1162 = vsel %vm1075, %v424, %v1159
        %v1163 = vsel %vm1075, 0, %v1161
        %v1164 = vcosq.f32.pop %v1162
        %v1165 = vsinq.f32.pop %v1162
        %vm1166 = vweird.f32 %v424
        %v1167 = vadd.s32 %v1163, 3
        %v1168 = vand.u32 %v1167, 3
        %vm1169 = vcmp.lt.s32.totalorder %v1168, 2
        %vm1170 = vcmp.eq.s32.totalorder %v1168, 0
        %v1171 = vxor.u32 %v1165, 2147483648
        %v1172 = vsel %vm1170, %v1164, %v1171
        %vm1173 = vcmp.eq.s32.totalorder %v1168, 2
        %v1174 = vxor.u32 %v1164, 2147483648
        %v1175 = vsel %vm1173, %v1174, %v1165
        %v1176 = vsel %vm1169, %v1172, %v1175
        %v1177 = vsel %vm1166, nan, %v1176
        %v1178 = vand.u32 2147483647, %v425
        %vm1179 = vcmp.le.f32.partialorder %v1178, 0.7853982
        %vm1180 = vcmp.lt.s32.totalorder %v425, 0
        %v1181 = vand.u32 %v425, 2139095040
        %v1182 = vshrl.u32 %v1181, 23
        %v1183 = vsub.s32 %v1182, 127
        %v1184 = vand.u32 2147483647, %v425
        %v1185 = vand.u32 %v1184, 8388607
        %v1186 = vor.u32 %v1185, 8388608
        %v1187 = vsub.s32 0, %v1186
        %v1188 = vadd.s32 %v1183, 1
        %vm1189 = vcmp.gt.s32.totalorder %v1188, 0
        %v1190 = vsel %vm1189, %v1188, 0
        %v1191 = vshrl.u32 %v1190, 5
        %v1192 = vand.u32 %v1190, 31
        %v1193 = vsub.s32 32, %v1192
        %v1194 = vshrl.u32 683565275, %v1193
        %v1195 = vshll.u32 683565275, %v1192
        %v1196 = vshrl.u32 2475754826, %v1193
        %v1197 = vor.u32 %v1195, %v1196
        %v1198 = vshll.u32 2475754826, %v1192
        %v1199 = vshrl.u32 2131351028, %v1193
        %v1200 = vor.u32 %v1198, %v1199
        %v1201 = vshll.u32 2131351028, %v1192
        %v1202 = vshrl.u32 2102212464, %v1193
        %v1203 = vor.u32 %v1201, %v1202
        %v1204 = vshll.u32 2102212464, %v1192
        %v1205 = vshrl.u32 920167782, %v1193
        %v1206 = vor.u32 %v1204, %v1205
        %v1207 = vshll.u32 920167782, %v1192
        %v1208 = vshrl.u32 1326507024, %v1193
        %v1209 = vor.u32 %v1207, %v1208
        %vm1210 = vcmp.lt.s32.totalorder %v1191, 1
        %vm1211 = vcmp.lt.s32.totalorder %v1191, 2
        %vm1212 = vcmp.lt.s32.totalorder %v1191, 3
        %vm1213 = vcmp.lt.s32.totalorder %v1191, 4
        %v1214 = vsel %vm1210, %v1194, %v1197
        %v1215 = vsel %vm1213, %v1203, 2102212464
        %v1216 = vsel %vm1212, %v1200, %v1215
        %v1217 = vsel %vm1211, %v1214, %v1216
        %v1218 = vsel %vm1210, %v1197, %v1200
        %v1219 = vsel %vm1213, %v1206, 920167782
        %v1220 = vsel %vm1212, %v1203, %v1219
        %v1221 = vsel %vm1211, %v1218, %v1220
        %v1222 = vsel %vm1210, %v1200, %v1203
        %v1223 = vsel %vm1213, %v1209, 1326507024
        %v1224 = vsel %vm1212, %v1206, %v1223
        %v1225 = vsel %vm1211, %v1222, %v1224
        %v1226 = vshll.u32 %v1186, 8
        %v1227 = vmul.u32.u64.compose %v1226, %v1225
        %v1228 = vextract.low.u32 %v1227
        %v1229 = vextract.high.u32 %v1227
        %v1230 = vmul.u32.u64.compose %v1226, %v1221
        %v1231 = vextract.low.u32 %v1230
        %v1232 = vextract.high.u32 %v1230
        %v1233 = vmul.u32 %v1226, %v1217
        %v1234 = vadd.s32 %v1229, %v1231
        %vm1235 = vc.u32 %v1229, %v1231
        %v1236 = vadd.s32 %v1232, 1
        %v1237 = vsel %vm1235, %v1236, %v1232
        %v1238 = vadd.s32 %v1233, %v1237
        %v1239 = vadd.s32 %v1238, 536870912
        %v1240 = vshrl.u32 %v1239, 30
        %v1241 = vshll.u32 %v1240, 30
        %v1242 = vsub.s32 %v1238, %v1241
        %vm1243 = vcmp.lt.s32.totalorder %v1242, 0
        %v1244 = vsub.s32 0, %v1242
        %v1245 = vsel %vm1243, %v1244, %v1242
        %v1246 = vclz %v1245
        %v1247 = vsub.s32 %v1246, 2
        %vm1248 = vcmp.gt.s32.totalorder 0, %v1247
        %v1249 = vsel %vm1248, 0, %v1247
        %v1250 = vsub.s32 32, %v1249
        %v1251 = vshll.u32 %v1242, %v1249
        %v1252 = vshrl.u32 %v1234, %v1250
        %v1253 = vor.u32 %v1251, %v1252
        %v1254 = vsub.s32 4294967266, %v1249
        %v1255 = vadd.s32 %v1254, 127
        %v1256 = vshll.u32 %v1255, 23
        %v1257 = vor.u32 4788187, %v1256
        %v1258 = vand.u32 2147483647, %v1257
        %v1260 = vcvt.s32.f32 %v1253
        %v1261 = vmul.f32 %v1260, %v1258
        %v1262 = vxor.u32 %v1261, 2147483648
        %v1263 = vsel %vm1180, %v1262, %v1261
        %v1264 = vsub.s32 4, %v1240
        %v1265 = vsel %vm1180, %v1264, %v1240
        %v1266 = vsel %vm1179, %v425, %v1263
        %v1267 = vsel %vm1179, 0, %v1265
        %v1268 = vcosq.f32.pop %v1266
        %v1269 = vsinq.f32.pop %v1266
        %vm1270 = vweird.f32 %v425
        %v1271 = vadd.s32 %v1267, 3
        %v1272 = vand.u32 %v1271, 3
        %vm1273 = vcmp.lt.s32.totalorder %v1272, 2
        %vm1274 = vcmp.eq.s32.totalorder %v1272, 0
        %v1275 = vxor.u32 %v1269, 2147483648
        %v1276 = vsel %vm1274, %v1268, %v1275
        %vm1277 = vcmp.eq.s32.totalorder %v1272, 2
        %v1278 = vxor.u32 %v1268, 2147483648
        %v1279 = vsel %vm1277, %v1278, %v1269
        %v1280 = vsel %vm1273, %v1276, %v1279
        %v1281 = vsel %vm1270, nan, %v1280
        %v1282 = vand.u32 2147483647, %v426
        %vm1283 = vcmp.le.f32.partialorder %v1282, 0.7853982
        %vm1284 = vcmp.lt.s32.totalorder %v426, 0
        %v1285 = vand.u32 %v426, 2139095040
        %v1286 = vshrl.u32 %v1285, 23
        %v1287 = vsub.s32 %v1286, 127
        %v1288 = vand.u32 2147483647, %v426
        %v1289 = vand.u32 %v1288, 8388607
        %v1290 = vor.u32 %v1289, 8388608
        %v1291 = vsub.s32 0, %v1290
        %v1292 = vadd.s32 %v1287, 1
        %vm1293 = vcmp.gt.s32.totalorder %v1292, 0
        %v1294 = vsel %vm1293, %v1292, 0
        %v1295 = vshrl.u32 %v1294, 5
        %v1296 = vand.u32 %v1294, 31
        %v1297 = vsub.s32 32, %v1296
        %v1298 = vshrl.u32 683565275, %v1297
        %v1299 = vshll.u32 683565275, %v1296
        %v1300 = vshrl.u32 2475754826, %v1297
        %v1301 = vor.u32 %v1299, %v1300
        %v1302 = vshll.u32 2475754826, %v1296
        %v1303 = vshrl.u32 2131351028, %v1297
        %v1304 = vor.u32 %v1302, %v1303
        %v1305 = vshll.u32 2131351028, %v1296
        %v1306 = vshrl.u32 2102212464, %v1297
        %v1307 = vor.u32 %v1305, %v1306
        %v1308 = vshll.u32 2102212464, %v1296
        %v1309 = vshrl.u32 920167782, %v1297
        %v1310 = vor.u32 %v1308, %v1309
        %v1311 = vshll.u32 920167782, %v1296
        %v1312 = vshrl.u32 1326507024, %v1297
        %v1313 = vor.u32 %v1311, %v1312
        %vm1314 = vcmp.lt.s32.totalorder %v1295, 1
        %vm1315 = vcmp.lt.s32.totalorder %v1295, 2
        %vm1316 = vcmp.lt.s32.totalorder %v1295, 3
        %vm1317 = vcmp.lt.s32.totalorder %v1295, 4
        %v1318 = vsel %vm1314, %v1298, %v1301
        %v1319 = vsel %vm1317, %v1307, 2102212464
        %v1320 = vsel %vm1316, %v1304, %v1319
        %v1321 = vsel %vm1315, %v1318, %v1320
        %v1322 = vsel %vm1314, %v1301, %v1304
        %v1323 = vsel %vm1317, %v1310, 920167782
        %v1324 = vsel %vm1316, %v1307, %v1323
        %v1325 = vsel %vm1315, %v1322, %v1324
        %v1326 = vsel %vm1314, %v1304, %v1307
        %v1327 = vsel %vm1317, %v1313, 1326507024
        %v1328 = vsel %vm1316, %v1310, %v1327
        %v1329 = vsel %vm1315, %v1326, %v1328
        %v1330 = vshll.u32 %v1290, 8
        %v1331 = vmul.u32.u64.compose %v1330, %v1329
        %v1332 = vextract.low.u32 %v1331
        %v1333 = vextract.high.u32 %v1331
        %v1334 = vmul.u32.u64.compose %v1330, %v1325
        %v1335 = vextract.low.u32 %v1334
        %v1336 = vextract.high.u32 %v1334
        %v1337 = vmul.u32 %v1330, %v1321
        %v1338 = vadd.s32 %v1333, %v1335
        %vm1339 = vc.u32 %v1333, %v1335
        %v1340 = vadd.s32 %v1336, 1
        %v1341 = vsel %vm1339, %v1340, %v1336
        %v1342 = vadd.s32 %v1337, %v1341
        %v1343 = vadd.s32 %v1342, 536870912
        %v1344 = vshrl.u32 %v1343, 30
        %v1345 = vshll.u32 %v1344, 30
        %v1346 = vsub.s32 %v1342, %v1345
        %vm1347 = vcmp.lt.s32.totalorder %v1346, 0
        %v1348 = vsub.s32 0, %v1346
        %v1349 = vsel %vm1347, %v1348, %v1346
        %v1350 = vclz %v1349
        %v1351 = vsub.s32 %v1350, 2
        %vm1352 = vcmp.gt.s32.totalorder 0, %v1351
        %v1353 = vsel %vm1352, 0, %v1351
        %v1354 = vsub.s32 32, %v1353
        %v1355 = vshll.u32 %v1346, %v1353
        %v1356 = vshrl.u32 %v1338, %v1354
        %v1357 = vor.u32 %v1355, %v1356
        %v1358 = vsub.s32 4294967266, %v1353
        %v1359 = vadd.s32 %v1358, 127
        %v1360 = vshll.u32 %v1359, 23
        %v1361 = vor.u32 4788187, %v1360
        %v1362 = vand.u32 2147483647, %v1361
        %v1364 = vcvt.s32.f32 %v1357
        %v1365 = vmul.f32 %v1364, %v1362
        %v1366 = vxor.u32 %v1365, 2147483648
        %v1367 = vsel %vm1284, %v1366, %v1365
        %v1368 = vsub.s32 4, %v1344
        %v1369 = vsel %vm1284, %v1368, %v1344
        %v1370 = vsel %vm1283, %v426, %v1367
        %v1371 = vsel %vm1283, 0, %v1369
        %v1372 = vcosq.f32.pop %v1370
        %v1373 = vsinq.f32.pop %v1370
        %vm1374 = vweird.f32 %v426
        %v1375 = vadd.s32 %v1371, 3
        %v1376 = vand.u32 %v1375, 3
        %vm1377 = vcmp.lt.s32.totalorder %v1376, 2
        %vm1378 = vcmp.eq.s32.totalorder %v1376, 0
        %v1379 = vxor.u32 %v1373, 2147483648
        %v1380 = vsel %vm1378, %v1372, %v1379
        %vm1381 = vcmp.eq.s32.totalorder %v1376, 2
        %v1382 = vxor.u32 %v1372, 2147483648
        %v1383 = vsel %vm1381, %v1382, %v1373
        %v1384 = vsel %vm1377, %v1380, %v1383
        %v1385 = vsel %vm1374, nan, %v1384
        %v1386 = vand.u32 2147483647, %v427
        %vm1387 = vcmp.le.f32.partialorder %v1386, 0.7853982
        %vm1388 = vcmp.lt.s32.totalorder %v427, 0
        %v1389 = vand.u32 %v427, 2139095040
        %v1390 = vshrl.u32 %v1389, 23
        %v1391 = vsub.s32 %v1390, 127
        %v1392 = vand.u32 2147483647, %v427
        %v1393 = vand.u32 %v1392, 8388607
        %v1394 = vor.u32 %v1393, 8388608
        %v1395 = vsub.s32 0, %v1394
        %v1396 = vadd.s32 %v1391, 1
        %vm1397 = vcmp.gt.s32.totalorder %v1396, 0
        %v1398 = vsel %vm1397, %v1396, 0
        %v1399 = vshrl.u32 %v1398, 5
        %v1400 = vand.u32 %v1398, 31
        %v1401 = vsub.s32 32, %v1400
        %v1402 = vshrl.u32 683565275, %v1401
        %v1403 = vshll.u32 683565275, %v1400
        %v1404 = vshrl.u32 2475754826, %v1401
        %v1405 = vor.u32 %v1403, %v1404
        %v1406 = vshll.u32 2475754826, %v1400
        %v1407 = vshrl.u32 2131351028, %v1401
        %v1408 = vor.u32 %v1406, %v1407
        %v1409 = vshll.u32 2131351028, %v1400
        %v1410 = vshrl.u32 2102212464, %v1401
        %v1411 = vor.u32 %v1409, %v1410
        %v1412 = vshll.u32 2102212464, %v1400
        %v1413 = vshrl.u32 920167782, %v1401
        %v1414 = vor.u32 %v1412, %v1413
        %v1415 = vshll.u32 920167782, %v1400
        %v1416 = vshrl.u32 1326507024, %v1401
        %v1417 = vor.u32 %v1415, %v1416
        %vm1418 = vcmp.lt.s32.totalorder %v1399, 1
        %vm1419 = vcmp.lt.s32.totalorder %v1399, 2
        %vm1420 = vcmp.lt.s32.totalorder %v1399, 3
        %vm1421 = vcmp.lt.s32.totalorder %v1399, 4
        %v1422 = vsel %vm1418, %v1402, %v1405
        %v1423 = vsel %vm1421, %v1411, 2102212464
        %v1424 = vsel %vm1420, %v1408, %v1423
        %v1425 = vsel %vm1419, %v1422, %v1424
        %v1426 = vsel %vm1418, %v1405, %v1408
        %v1427 = vsel %vm1421, %v1414, 920167782
        %v1428 = vsel %vm1420, %v1411, %v1427
        %v1429 = vsel %vm1419, %v1426, %v1428
        %v1430 = vsel %vm1418, %v1408, %v1411
        %v1431 = vsel %vm1421, %v1417, 1326507024
        %v1432 = vsel %vm1420, %v1414, %v1431
        %v1433 = vsel %vm1419, %v1430, %v1432
        %v1434 = vshll.u32 %v1394, 8
        %v1435 = vmul.u32.u64.compose %v1434, %v1433
        %v1436 = vextract.low.u32 %v1435
        %v1437 = vextract.high.u32 %v1435
        %v1438 = vmul.u32.u64.compose %v1434, %v1429
        %v1439 = vextract.low.u32 %v1438
        %v1440 = vextract.high.u32 %v1438
        %v1441 = vmul.u32 %v1434, %v1425
        %v1442 = vadd.s32 %v1437, %v1439
        %vm1443 = vc.u32 %v1437, %v1439
        %v1444 = vadd.s32 %v1440, 1
        %v1445 = vsel %vm1443, %v1444, %v1440
        %v1446 = vadd.s32 %v1441, %v1445
        %v1447 = vadd.s32 %v1446, 536870912
        %v1448 = vshrl.u32 %v1447, 30
        %v1449 = vshll.u32 %v1448, 30
        %v1450 = vsub.s32 %v1446, %v1449
        %vm1451 = vcmp.lt.s32.totalorder %v1450, 0
        %v1452 = vsub.s32 0, %v1450
        %v1453 = vsel %vm1451, %v1452, %v1450
        %v1454 = vclz %v1453
        %v1455 = vsub.s32 %v1454, 2
        %vm1456 = vcmp.gt.s32.totalorder 0, %v1455
        %v1457 = vsel %vm1456, 0, %v1455
        %v1458 = vsub.s32 32, %v1457
        %v1459 = vshll.u32 %v1450, %v1457
        %v1460 = vshrl.u32 %v1442, %v1458
        %v1461 = vor.u32 %v1459, %v1460
        %v1462 = vsub.s32 4294967266, %v1457
        %v1463 = vadd.s32 %v1462, 127
        %v1464 = vshll.u32 %v1463, 23
        %v1465 = vor.u32 4788187, %v1464
        %v1466 = vand.u32 2147483647, %v1465
        %v1468 = vcvt.s32.f32 %v1461
        %v1469 = vmul.f32 %v1468, %v1466
        %v1470 = vxor.u32 %v1469, 2147483648
        %v1471 = vsel %vm1388, %v1470, %v1469
        %v1472 = vsub.s32 4, %v1448
        %v1473 = vsel %vm1388, %v1472, %v1448
        %v1474 = vsel %vm1387, %v427, %v1471
        %v1475 = vsel %vm1387, 0, %v1473
        %v1476 = vcosq.f32.pop %v1474
        %v1477 = vsinq.f32.pop %v1474
        %vm1478 = vweird.f32 %v427
        %v1479 = vadd.s32 %v1475, 3
        %v1480 = vand.u32 %v1479, 3
        %vm1481 = vcmp.lt.s32.totalorder %v1480, 2
        %vm1482 = vcmp.eq.s32.totalorder %v1480, 0
        %v1483 = vxor.u32 %v1477, 2147483648
        %v1484 = vsel %vm1482, %v1476, %v1483
        %vm1485 = vcmp.eq.s32.totalorder %v1480, 2
        %v1486 = vxor.u32 %v1476, 2147483648
        %v1487 = vsel %vm1485, %v1486, %v1477
        %v1488 = vsel %vm1481, %v1484, %v1487
        %v1489 = vsel %vm1478, nan, %v1488
        %v1490 = vand.u32 2147483647, %v428
        %vm1491 = vcmp.le.f32.partialorder %v1490, 0.7853982
        %vm1492 = vcmp.lt.s32.totalorder %v428, 0
        %v1493 = vand.u32 %v428, 2139095040
        %v1494 = vshrl.u32 %v1493, 23
        %v1495 = vsub.s32 %v1494, 127
        %v1496 = vand.u32 2147483647, %v428
        %v1497 = vand.u32 %v1496, 8388607
        %v1498 = vor.u32 %v1497, 8388608
        %v1499 = vsub.s32 0, %v1498
        %v1500 = vadd.s32 %v1495, 1
        %vm1501 = vcmp.gt.s32.totalorder %v1500, 0
        %v1502 = vsel %vm1501, %v1500, 0
        %v1503 = vshrl.u32 %v1502, 5
        %v1504 = vand.u32 %v1502, 31
        %v1505 = vsub.s32 32, %v1504
        %v1506 = vshrl.u32 683565275, %v1505
        %v1507 = vshll.u32 683565275, %v1504
        %v1508 = vshrl.u32 2475754826, %v1505
        %v1509 = vor.u32 %v1507, %v1508
        %v1510 = vshll.u32 2475754826, %v1504
        %v1511 = vshrl.u32 2131351028, %v1505
        %v1512 = vor.u32 %v1510, %v1511
        %v1513 = vshll.u32 2131351028, %v1504
        %v1514 = vshrl.u32 2102212464, %v1505
        %v1515 = vor.u32 %v1513, %v1514
        %v1516 = vshll.u32 2102212464, %v1504
        %v1517 = vshrl.u32 920167782, %v1505
        %v1518 = vor.u32 %v1516, %v1517
        %v1519 = vshll.u32 920167782, %v1504
        %v1520 = vshrl.u32 1326507024, %v1505
        %v1521 = vor.u32 %v1519, %v1520
        %vm1522 = vcmp.lt.s32.totalorder %v1503, 1
        %vm1523 = vcmp.lt.s32.totalorder %v1503, 2
        %vm1524 = vcmp.lt.s32.totalorder %v1503, 3
        %vm1525 = vcmp.lt.s32.totalorder %v1503, 4
        %v1526 = vsel %vm1522, %v1506, %v1509
        %v1527 = vsel %vm1525, %v1515, 2102212464
        %v1528 = vsel %vm1524, %v1512, %v1527
        %v1529 = vsel %vm1523, %v1526, %v1528
        %v1530 = vsel %vm1522, %v1509, %v1512
        %v1531 = vsel %vm1525, %v1518, 920167782
        %v1532 = vsel %vm1524, %v1515, %v1531
        %v1533 = vsel %vm1523, %v1530, %v1532
        %v1534 = vsel %vm1522, %v1512, %v1515
        %v1535 = vsel %vm1525, %v1521, 1326507024
        %v1536 = vsel %vm1524, %v1518, %v1535
        %v1537 = vsel %vm1523, %v1534, %v1536
        %v1538 = vshll.u32 %v1498, 8
        %v1539 = vmul.u32.u64.compose %v1538, %v1537
        %v1540 = vextract.low.u32 %v1539
        %v1541 = vextract.high.u32 %v1539
        %v1542 = vmul.u32.u64.compose %v1538, %v1533
        %v1543 = vextract.low.u32 %v1542
        %v1544 = vextract.high.u32 %v1542
        %v1545 = vmul.u32 %v1538, %v1529
        %v1546 = vadd.s32 %v1541, %v1543
        %vm1547 = vc.u32 %v1541, %v1543
        %v1548 = vadd.s32 %v1544, 1
        %v1549 = vsel %vm1547, %v1548, %v1544
        %v1550 = vadd.s32 %v1545, %v1549
        %v1551 = vadd.s32 %v1550, 536870912
        %v1552 = vshrl.u32 %v1551, 30
        %v1553 = vshll.u32 %v1552, 30
        %v1554 = vsub.s32 %v1550, %v1553
        %vm1555 = vcmp.lt.s32.totalorder %v1554, 0
        %v1556 = vsub.s32 0, %v1554
        %v1557 = vsel %vm1555, %v1556, %v1554
        %v1558 = vclz %v1557
        %v1559 = vsub.s32 %v1558, 2
        %vm1560 = vcmp.gt.s32.totalorder 0, %v1559
        %v1561 = vsel %vm1560, 0, %v1559
        %v1562 = vsub.s32 32, %v1561
        %v1563 = vshll.u32 %v1554, %v1561
        %v1564 = vshrl.u32 %v1546, %v1562
        %v1565 = vor.u32 %v1563, %v1564
        %v1566 = vsub.s32 4294967266, %v1561
        %v1567 = vadd.s32 %v1566, 127
        %v1568 = vshll.u32 %v1567, 23
        %v1569 = vor.u32 4788187, %v1568
        %v1570 = vand.u32 2147483647, %v1569
        %v1572 = vcvt.s32.f32 %v1565
        %v1573 = vmul.f32 %v1572, %v1570
        %v1574 = vxor.u32 %v1573, 2147483648
        %v1575 = vsel %vm1492, %v1574, %v1573
        %v1576 = vsub.s32 4, %v1552
        %v1577 = vsel %vm1492, %v1576, %v1552
        %v1578 = vsel %vm1491, %v428, %v1575
        %v1579 = vsel %vm1491, 0, %v1577
        %v1580 = vcosq.f32.pop %v1578
        %v1581 = vsinq.f32.pop %v1578
        %vm1582 = vweird.f32 %v428
        %v1583 = vadd.s32 %v1579, 3
        %v1584 = vand.u32 %v1583, 3
        %vm1585 = vcmp.lt.s32.totalorder %v1584, 2
        %vm1586 = vcmp.eq.s32.totalorder %v1584, 0
        %v1587 = vxor.u32 %v1581, 2147483648
        %v1588 = vsel %vm1586, %v1580, %v1587
        %vm1589 = vcmp.eq.s32.totalorder %v1584, 2
        %v1590 = vxor.u32 %v1580, 2147483648
        %v1591 = vsel %vm1589, %v1590, %v1581
        %v1592 = vsel %vm1585, %v1588, %v1591
        %v1593 = vsel %vm1582, nan, %v1592
        %v1594 = vand.u32 2147483647, %v429
        %vm1595 = vcmp.le.f32.partialorder %v1594, 0.7853982
        %vm1596 = vcmp.lt.s32.totalorder %v429, 0
        %v1597 = vand.u32 %v429, 2139095040
        %v1598 = vshrl.u32 %v1597, 23
        %v1599 = vsub.s32 %v1598, 127
        %v1600 = vand.u32 2147483647, %v429
        %v1601 = vand.u32 %v1600, 8388607
        %v1602 = vor.u32 %v1601, 8388608
        %v1603 = vsub.s32 0, %v1602
        %v1604 = vadd.s32 %v1599, 1
        %vm1605 = vcmp.gt.s32.totalorder %v1604, 0
        %v1606 = vsel %vm1605, %v1604, 0
        %v1607 = vshrl.u32 %v1606, 5
        %v1608 = vand.u32 %v1606, 31
        %v1609 = vsub.s32 32, %v1608
        %v1610 = vshrl.u32 683565275, %v1609
        %v1611 = vshll.u32 683565275, %v1608
        %v1612 = vshrl.u32 2475754826, %v1609
        %v1613 = vor.u32 %v1611, %v1612
        %v1614 = vshll.u32 2475754826, %v1608
        %v1615 = vshrl.u32 2131351028, %v1609
        %v1616 = vor.u32 %v1614, %v1615
        %v1617 = vshll.u32 2131351028, %v1608
        %v1618 = vshrl.u32 2102212464, %v1609
        %v1619 = vor.u32 %v1617, %v1618
        %v1620 = vshll.u32 2102212464, %v1608
        %v1621 = vshrl.u32 920167782, %v1609
        %v1622 = vor.u32 %v1620, %v1621
        %v1623 = vshll.u32 920167782, %v1608
        %v1624 = vshrl.u32 1326507024, %v1609
        %v1625 = vor.u32 %v1623, %v1624
        %vm1626 = vcmp.lt.s32.totalorder %v1607, 1
        %vm1627 = vcmp.lt.s32.totalorder %v1607, 2
        %vm1628 = vcmp.lt.s32.totalorder %v1607, 3
        %vm1629 = vcmp.lt.s32.totalorder %v1607, 4
        %v1630 = vsel %vm1626, %v1610, %v1613
        %v1631 = vsel %vm1629, %v1619, 2102212464
        %v1632 = vsel %vm1628, %v1616, %v1631
        %v1633 = vsel %vm1627, %v1630, %v1632
        %v1634 = vsel %vm1626, %v1613, %v1616
        %v1635 = vsel %vm1629, %v1622, 920167782
        %v1636 = vsel %vm1628, %v1619, %v1635
        %v1637 = vsel %vm1627, %v1634, %v1636
        %v1638 = vsel %vm1626, %v1616, %v1619
        %v1639 = vsel %vm1629, %v1625, 1326507024
        %v1640 = vsel %vm1628, %v1622, %v1639
        %v1641 = vsel %vm1627, %v1638, %v1640
        %v1642 = vshll.u32 %v1602, 8
        %v1643 = vmul.u32.u64.compose %v1642, %v1641
        %v1644 = vextract.low.u32 %v1643
        %v1645 = vextract.high.u32 %v1643
        %v1646 = vmul.u32.u64.compose %v1642, %v1637
        %v1647 = vextract.low.u32 %v1646
        %v1648 = vextract.high.u32 %v1646
        %v1649 = vmul.u32 %v1642, %v1633
        %v1650 = vadd.s32 %v1645, %v1647
        %vm1651 = vc.u32 %v1645, %v1647
        %v1652 = vadd.s32 %v1648, 1
        %v1653 = vsel %vm1651, %v1652, %v1648
        %v1654 = vadd.s32 %v1649, %v1653
        %v1655 = vadd.s32 %v1654, 536870912
        %v1656 = vshrl.u32 %v1655, 30
        %v1657 = vshll.u32 %v1656, 30
        %v1658 = vsub.s32 %v1654, %v1657
        %vm1659 = vcmp.lt.s32.totalorder %v1658, 0
        %v1660 = vsub.s32 0, %v1658
        %v1661 = vsel %vm1659, %v1660, %v1658
        %v1662 = vclz %v1661
        %v1663 = vsub.s32 %v1662, 2
        %vm1664 = vcmp.gt.s32.totalorder 0, %v1663
        %v1665 = vsel %vm1664, 0, %v1663
        %v1666 = vsub.s32 32, %v1665
        %v1667 = vshll.u32 %v1658, %v1665
        %v1668 = vshrl.u32 %v1650, %v1666
        %v1669 = vor.u32 %v1667, %v1668
        %v1670 = vsub.s32 4294967266, %v1665
        %v1671 = vadd.s32 %v1670, 127
        %v1672 = vshll.u32 %v1671, 23
        %v1673 = vor.u32 4788187, %v1672
        %v1674 = vand.u32 2147483647, %v1673
        %v1676 = vcvt.s32.f32 %v1669
        %v1677 = vmul.f32 %v1676, %v1674
        %v1678 = vxor.u32 %v1677, 2147483648
        %v1679 = vsel %vm1596, %v1678, %v1677
        %v1680 = vsub.s32 4, %v1656
        %v1681 = vsel %vm1596, %v1680, %v1656
        %v1682 = vsel %vm1595, %v429, %v1679
        %v1683 = vsel %vm1595, 0, %v1681
        %v1684 = vcosq.f32.pop %v1682
        %v1685 = vsinq.f32.pop %v1682
        %vm1686 = vweird.f32 %v429
        %v1687 = vadd.s32 %v1683, 3
        %v1688 = vand.u32 %v1687, 3
        %vm1689 = vcmp.lt.s32.totalorder %v1688, 2
        %vm1690 = vcmp.eq.s32.totalorder %v1688, 0
        %v1691 = vxor.u32 %v1685, 2147483648
        %v1692 = vsel %vm1690, %v1684, %v1691
        %vm1693 = vcmp.eq.s32.totalorder %v1688, 2
        %v1694 = vxor.u32 %v1684, 2147483648
        %v1695 = vsel %vm1693, %v1694, %v1685
        %v1696 = vsel %vm1689, %v1692, %v1695
        %v1697 = vsel %vm1686, nan, %v1696
        %v1698 = vand.u32 2147483647, %v430
        %vm1699 = vcmp.le.f32.partialorder %v1698, 0.7853982
        %vm1700 = vcmp.lt.s32.totalorder %v430, 0
        %v1701 = vand.u32 %v430, 2139095040
        %v1702 = vshrl.u32 %v1701, 23
        %v1703 = vsub.s32 %v1702, 127
        %v1704 = vand.u32 2147483647, %v430
        %v1705 = vand.u32 %v1704, 8388607
        %v1706 = vor.u32 %v1705, 8388608
        %v1707 = vsub.s32 0, %v1706
        %v1708 = vadd.s32 %v1703, 1
        %vm1709 = vcmp.gt.s32.totalorder %v1708, 0
        %v1710 = vsel %vm1709, %v1708, 0
        %v1711 = vshrl.u32 %v1710, 5
        %v1712 = vand.u32 %v1710, 31
        %v1713 = vsub.s32 32, %v1712
        %v1714 = vshrl.u32 683565275, %v1713
        %v1715 = vshll.u32 683565275, %v1712
        %v1716 = vshrl.u32 2475754826, %v1713
        %v1717 = vor.u32 %v1715, %v1716
        %v1718 = vshll.u32 2475754826, %v1712
        %v1719 = vshrl.u32 2131351028, %v1713
        %v1720 = vor.u32 %v1718, %v1719
        %v1721 = vshll.u32 2131351028, %v1712
        %v1722 = vshrl.u32 2102212464, %v1713
        %v1723 = vor.u32 %v1721, %v1722
        %v1724 = vshll.u32 2102212464, %v1712
        %v1725 = vshrl.u32 920167782, %v1713
        %v1726 = vor.u32 %v1724, %v1725
        %v1727 = vshll.u32 920167782, %v1712
        %v1728 = vshrl.u32 1326507024, %v1713
        %v1729 = vor.u32 %v1727, %v1728
        %vm1730 = vcmp.lt.s32.totalorder %v1711, 1
        %vm1731 = vcmp.lt.s32.totalorder %v1711, 2
        %vm1732 = vcmp.lt.s32.totalorder %v1711, 3
        %vm1733 = vcmp.lt.s32.totalorder %v1711, 4
        %v1734 = vsel %vm1730, %v1714, %v1717
        %v1735 = vsel %vm1733, %v1723, 2102212464
        %v1736 = vsel %vm1732, %v1720, %v1735
        %v1737 = vsel %vm1731, %v1734, %v1736
        %v1738 = vsel %vm1730, %v1717, %v1720
        %v1739 = vsel %vm1733, %v1726, 920167782
        %v1740 = vsel %vm1732, %v1723, %v1739
        %v1741 = vsel %vm1731, %v1738, %v1740
        %v1742 = vsel %vm1730, %v1720, %v1723
        %v1743 = vsel %vm1733, %v1729, 1326507024
        %v1744 = vsel %vm1732, %v1726, %v1743
        %v1745 = vsel %vm1731, %v1742, %v1744
        %v1746 = vshll.u32 %v1706, 8
        %v1747 = vmul.u32.u64.compose %v1746, %v1745
        %v1748 = vextract.low.u32 %v1747
        %v1749 = vextract.high.u32 %v1747
        %v1750 = vmul.u32.u64.compose %v1746, %v1741
        %v1751 = vextract.low.u32 %v1750
        %v1752 = vextract.high.u32 %v1750
        %v1753 = vmul.u32 %v1746, %v1737
        %v1754 = vadd.s32 %v1749, %v1751
        %vm1755 = vc.u32 %v1749, %v1751
        %v1756 = vadd.s32 %v1752, 1
        %v1757 = vsel %vm1755, %v1756, %v1752
        %v1758 = vadd.s32 %v1753, %v1757
        %v1759 = vadd.s32 %v1758, 536870912
        %v1760 = vshrl.u32 %v1759, 30
        %v1761 = vshll.u32 %v1760, 30
        %v1762 = vsub.s32 %v1758, %v1761
        %vm1763 = vcmp.lt.s32.totalorder %v1762, 0
        %v1764 = vsub.s32 0, %v1762
        %v1765 = vsel %vm1763, %v1764, %v1762
        %v1766 = vclz %v1765
        %v1767 = vsub.s32 %v1766, 2
        %vm1768 = vcmp.gt.s32.totalorder 0, %v1767
        %v1769 = vsel %vm1768, 0, %v1767
        %v1770 = vsub.s32 32, %v1769
        %v1771 = vshll.u32 %v1762, %v1769
        %v1772 = vshrl.u32 %v1754, %v1770
        %v1773 = vor.u32 %v1771, %v1772
        %v1774 = vsub.s32 4294967266, %v1769
        %v1775 = vadd.s32 %v1774, 127
        %v1776 = vshll.u32 %v1775, 23
        %v1777 = vor.u32 4788187, %v1776
        %v1778 = vand.u32 2147483647, %v1777
        %v1780 = vcvt.s32.f32 %v1773
        %v1781 = vmul.f32 %v1780, %v1778
        %v1782 = vxor.u32 %v1781, 2147483648
        %v1783 = vsel %vm1700, %v1782, %v1781
        %v1784 = vsub.s32 4, %v1760
        %v1785 = vsel %vm1700, %v1784, %v1760
        %v1786 = vsel %vm1699, %v430, %v1783
        %v1787 = vsel %vm1699, 0, %v1785
        %v1788 = vcosq.f32.pop %v1786
        %v1789 = vsinq.f32.pop %v1786
        %vm1790 = vweird.f32 %v430
        %v1791 = vadd.s32 %v1787, 3
        %v1792 = vand.u32 %v1791, 3
        %vm1793 = vcmp.lt.s32.totalorder %v1792, 2
        %vm1794 = vcmp.eq.s32.totalorder %v1792, 0
        %v1795 = vxor.u32 %v1789, 2147483648
        %v1796 = vsel %vm1794, %v1788, %v1795
        %vm1797 = vcmp.eq.s32.totalorder %v1792, 2
        %v1798 = vxor.u32 %v1788, 2147483648
        %v1799 = vsel %vm1797, %v1798, %v1789
        %v1800 = vsel %vm1793, %v1796, %v1799
        %v1801 = vsel %vm1790, nan, %v1800
        %v1802 = vand.u32 2147483647, %v431
        %vm1803 = vcmp.le.f32.partialorder %v1802, 0.7853982
        %vm1804 = vcmp.lt.s32.totalorder %v431, 0
        %v1805 = vand.u32 %v431, 2139095040
        %v1806 = vshrl.u32 %v1805, 23
        %v1807 = vsub.s32 %v1806, 127
        %v1808 = vand.u32 2147483647, %v431
        %v1809 = vand.u32 %v1808, 8388607
        %v1810 = vor.u32 %v1809, 8388608
        %v1811 = vsub.s32 0, %v1810
        %v1812 = vadd.s32 %v1807, 1
        %vm1813 = vcmp.gt.s32.totalorder %v1812, 0
        %v1814 = vsel %vm1813, %v1812, 0
        %v1815 = vshrl.u32 %v1814, 5
        %v1816 = vand.u32 %v1814, 31
        %v1817 = vsub.s32 32, %v1816
        %v1818 = vshrl.u32 683565275, %v1817
        %v1819 = vshll.u32 683565275, %v1816
        %v1820 = vshrl.u32 2475754826, %v1817
        %v1821 = vor.u32 %v1819, %v1820
        %v1822 = vshll.u32 2475754826, %v1816
        %v1823 = vshrl.u32 2131351028, %v1817
        %v1824 = vor.u32 %v1822, %v1823
        %v1825 = vshll.u32 2131351028, %v1816
        %v1826 = vshrl.u32 2102212464, %v1817
        %v1827 = vor.u32 %v1825, %v1826
        %v1828 = vshll.u32 2102212464, %v1816
        %v1829 = vshrl.u32 920167782, %v1817
        %v1830 = vor.u32 %v1828, %v1829
        %v1831 = vshll.u32 920167782, %v1816
        %v1832 = vshrl.u32 1326507024, %v1817
        %v1833 = vor.u32 %v1831, %v1832
        %vm1834 = vcmp.lt.s32.totalorder %v1815, 1
        %vm1835 = vcmp.lt.s32.totalorder %v1815, 2
        %vm1836 = vcmp.lt.s32.totalorder %v1815, 3
        %vm1837 = vcmp.lt.s32.totalorder %v1815, 4
        %v1838 = vsel %vm1834, %v1818, %v1821
        %v1839 = vsel %vm1837, %v1827, 2102212464
        %v1840 = vsel %vm1836, %v1824, %v1839
        %v1841 = vsel %vm1835, %v1838, %v1840
        %v1842 = vsel %vm1834, %v1821, %v1824
        %v1843 = vsel %vm1837, %v1830, 920167782
        %v1844 = vsel %vm1836, %v1827, %v1843
        %v1845 = vsel %vm1835, %v1842, %v1844
        %v1846 = vsel %vm1834, %v1824, %v1827
        %v1847 = vsel %vm1837, %v1833, 1326507024
        %v1848 = vsel %vm1836, %v1830, %v1847
        %v1849 = vsel %vm1835, %v1846, %v1848
        %v1850 = vshll.u32 %v1810, 8
        %v1851 = vmul.u32.u64.compose %v1850, %v1849
        %v1852 = vextract.low.u32 %v1851
        %v1853 = vextract.high.u32 %v1851
        %v1854 = vmul.u32.u64.compose %v1850, %v1845
        %v1855 = vextract.low.u32 %v1854
        %v1856 = vextract.high.u32 %v1854
        %v1857 = vmul.u32 %v1850, %v1841
        %v1858 = vadd.s32 %v1853, %v1855
        %vm1859 = vc.u32 %v1853, %v1855
        %v1860 = vadd.s32 %v1856, 1
        %v1861 = vsel %vm1859, %v1860, %v1856
        %v1862 = vadd.s32 %v1857, %v1861
        %v1863 = vadd.s32 %v1862, 536870912
        %v1864 = vshrl.u32 %v1863, 30
        %v1865 = vshll.u32 %v1864, 30
        %v1866 = vsub.s32 %v1862, %v1865
        %vm1867 = vcmp.lt.s32.totalorder %v1866, 0
        %v1868 = vsub.s32 0, %v1866
        %v1869 = vsel %vm1867, %v1868, %v1866
        %v1870 = vclz %v1869
        %v1871 = vsub.s32 %v1870, 2
        %vm1872 = vcmp.gt.s32.totalorder 0, %v1871
        %v1873 = vsel %vm1872, 0, %v1871
        %v1874 = vsub.s32 32, %v1873
        %v1875 = vshll.u32 %v1866, %v1873
        %v1876 = vshrl.u32 %v1858, %v1874
        %v1877 = vor.u32 %v1875, %v1876
        %v1878 = vsub.s32 4294967266, %v1873
        %v1879 = vadd.s32 %v1878, 127
        %v1880 = vshll.u32 %v1879, 23
        %v1881 = vor.u32 4788187, %v1880
        %v1882 = vand.u32 2147483647, %v1881
        %v1884 = vcvt.s32.f32 %v1877
        %v1885 = vmul.f32 %v1884, %v1882
        %v1886 = vxor.u32 %v1885, 2147483648
        %v1887 = vsel %vm1804, %v1886, %v1885
        %v1888 = vsub.s32 4, %v1864
        %v1889 = vsel %vm1804, %v1888, %v1864
        %v1890 = vsel %vm1803, %v431, %v1887
        %v1891 = vsel %vm1803, 0, %v1889
        %v1892 = vcosq.f32.pop %v1890
        %v1893 = vsinq.f32.pop %v1890
        %vm1894 = vweird.f32 %v431
        %v1895 = vadd.s32 %v1891, 3
        %v1896 = vand.u32 %v1895, 3
        %vm1897 = vcmp.lt.s32.totalorder %v1896, 2
        %vm1898 = vcmp.eq.s32.totalorder %v1896, 0
        %v1899 = vxor.u32 %v1893, 2147483648
        %v1900 = vsel %vm1898, %v1892, %v1899
        %vm1901 = vcmp.eq.s32.totalorder %v1896, 2
        %v1902 = vxor.u32 %v1892, 2147483648
        %v1903 = vsel %vm1901, %v1902, %v1893
        %v1904 = vsel %vm1897, %v1900, %v1903
        %v1905 = vsel %vm1894, nan, %v1904
        %v1906 = vand.u32 2147483647, %v432
        %vm1907 = vcmp.le.f32.partialorder %v1906, 0.7853982
        %vm1908 = vcmp.lt.s32.totalorder %v432, 0
        %v1909 = vand.u32 %v432, 2139095040
        %v1910 = vshrl.u32 %v1909, 23
        %v1911 = vsub.s32 %v1910, 127
        %v1912 = vand.u32 2147483647, %v432
        %v1913 = vand.u32 %v1912, 8388607
        %v1914 = vor.u32 %v1913, 8388608
        %v1915 = vsub.s32 0, %v1914
        %v1916 = vadd.s32 %v1911, 1
        %vm1917 = vcmp.gt.s32.totalorder %v1916, 0
        %v1918 = vsel %vm1917, %v1916, 0
        %v1919 = vshrl.u32 %v1918, 5
        %v1920 = vand.u32 %v1918, 31
        %v1921 = vsub.s32 32, %v1920
        %v1922 = vshrl.u32 683565275, %v1921
        %v1923 = vshll.u32 683565275, %v1920
        %v1924 = vshrl.u32 2475754826, %v1921
        %v1925 = vor.u32 %v1923, %v1924
        %v1926 = vshll.u32 2475754826, %v1920
        %v1927 = vshrl.u32 2131351028, %v1921
        %v1928 = vor.u32 %v1926, %v1927
        %v1929 = vshll.u32 2131351028, %v1920
        %v1930 = vshrl.u32 2102212464, %v1921
        %v1931 = vor.u32 %v1929, %v1930
        %v1932 = vshll.u32 2102212464, %v1920
        %v1933 = vshrl.u32 920167782, %v1921
        %v1934 = vor.u32 %v1932, %v1933
        %v1935 = vshll.u32 920167782, %v1920
        %v1936 = vshrl.u32 1326507024, %v1921
        %v1937 = vor.u32 %v1935, %v1936
        %vm1938 = vcmp.lt.s32.totalorder %v1919, 1
        %vm1939 = vcmp.lt.s32.totalorder %v1919, 2
        %vm1940 = vcmp.lt.s32.totalorder %v1919, 3
        %vm1941 = vcmp.lt.s32.totalorder %v1919, 4
        %v1942 = vsel %vm1938, %v1922, %v1925
        %v1943 = vsel %vm1941, %v1931, 2102212464
        %v1944 = vsel %vm1940, %v1928, %v1943
        %v1945 = vsel %vm1939, %v1942, %v1944
        %v1946 = vsel %vm1938, %v1925, %v1928
        %v1947 = vsel %vm1941, %v1934, 920167782
        %v1948 = vsel %vm1940, %v1931, %v1947
        %v1949 = vsel %vm1939, %v1946, %v1948
        %v1950 = vsel %vm1938, %v1928, %v1931
        %v1951 = vsel %vm1941, %v1937, 1326507024
        %v1952 = vsel %vm1940, %v1934, %v1951
        %v1953 = vsel %vm1939, %v1950, %v1952
        %v1954 = vshll.u32 %v1914, 8
        %v1955 = vmul.u32.u64.compose %v1954, %v1953
        %v1956 = vextract.low.u32 %v1955
        %v1957 = vextract.high.u32 %v1955
        %v1958 = vmul.u32.u64.compose %v1954, %v1949
        %v1959 = vextract.low.u32 %v1958
        %v1960 = vextract.high.u32 %v1958
        %v1961 = vmul.u32 %v1954, %v1945
        %v1962 = vadd.s32 %v1957, %v1959
        %vm1963 = vc.u32 %v1957, %v1959
        %v1964 = vadd.s32 %v1960, 1
        %v1965 = vsel %vm1963, %v1964, %v1960
        %v1966 = vadd.s32 %v1961, %v1965
        %v1967 = vadd.s32 %v1966, 536870912
        %v1968 = vshrl.u32 %v1967, 30
        %v1969 = vshll.u32 %v1968, 30
        %v1970 = vsub.s32 %v1966, %v1969
        %vm1971 = vcmp.lt.s32.totalorder %v1970, 0
        %v1972 = vsub.s32 0, %v1970
        %v1973 = vsel %vm1971, %v1972, %v1970
        %v1974 = vclz %v1973
        %v1975 = vsub.s32 %v1974, 2
        %vm1976 = vcmp.gt.s32.totalorder 0, %v1975
        %v1977 = vsel %vm1976, 0, %v1975
        %v1978 = vsub.s32 32, %v1977
        %v1979 = vshll.u32 %v1970, %v1977
        %v1980 = vshrl.u32 %v1962, %v1978
        %v1981 = vor.u32 %v1979, %v1980
        %v1982 = vsub.s32 4294967266, %v1977
        %v1983 = vadd.s32 %v1982, 127
        %v1984 = vshll.u32 %v1983, 23
        %v1985 = vor.u32 4788187, %v1984
        %v1986 = vand.u32 2147483647, %v1985
        %v1988 = vcvt.s32.f32 %v1981
        %v1989 = vmul.f32 %v1988, %v1986
        %v1990 = vxor.u32 %v1989, 2147483648
        %v1991 = vsel %vm1908, %v1990, %v1989
        %v1992 = vsub.s32 4, %v1968
        %v1993 = vsel %vm1908, %v1992, %v1968
        %v1994 = vsel %vm1907, %v432, %v1991
        %v1995 = vsel %vm1907, 0, %v1993
        %v1996 = vcosq.f32.pop %v1994
        %v1997 = vsinq.f32.pop %v1994
        %vm1998 = vweird.f32 %v432
        %v1999 = vadd.s32 %v1995, 3
        %v2000 = vand.u32 %v1999, 3
        %vm2001 = vcmp.lt.s32.totalorder %v2000, 2
        %vm2002 = vcmp.eq.s32.totalorder %v2000, 0
        %v2003 = vxor.u32 %v1997, 2147483648
        %v2004 = vsel %vm2002, %v1996, %v2003
        %vm2005 = vcmp.eq.s32.totalorder %v2000, 2
        %v2006 = vxor.u32 %v1996, 2147483648
        %v2007 = vsel %vm2005, %v2006, %v1997
        %v2008 = vsel %vm2001, %v2004, %v2007
        %v2009 = vsel %vm1998, nan, %v2008
        %v2010 = vand.u32 2147483647, %v433
        %vm2011 = vcmp.le.f32.partialorder %v2010, 0.7853982
        %vm2012 = vcmp.lt.s32.totalorder %v433, 0
        %v2013 = vand.u32 %v433, 2139095040
        %v2014 = vshrl.u32 %v2013, 23
        %v2015 = vsub.s32 %v2014, 127
        %v2016 = vand.u32 2147483647, %v433
        %v2017 = vand.u32 %v2016, 8388607
        %v2018 = vor.u32 %v2017, 8388608
        %v2019 = vsub.s32 0, %v2018
        %v2020 = vadd.s32 %v2015, 1
        %vm2021 = vcmp.gt.s32.totalorder %v2020, 0
        %v2022 = vsel %vm2021, %v2020, 0
        %v2023 = vshrl.u32 %v2022, 5
        %v2024 = vand.u32 %v2022, 31
        %v2025 = vsub.s32 32, %v2024
        %v2026 = vshrl.u32 683565275, %v2025
        %v2027 = vshll.u32 683565275, %v2024
        %v2028 = vshrl.u32 2475754826, %v2025
        %v2029 = vor.u32 %v2027, %v2028
        %v2030 = vshll.u32 2475754826, %v2024
        %v2031 = vshrl.u32 2131351028, %v2025
        %v2032 = vor.u32 %v2030, %v2031
        %v2033 = vshll.u32 2131351028, %v2024
        %v2034 = vshrl.u32 2102212464, %v2025
        %v2035 = vor.u32 %v2033, %v2034
        %v2036 = vshll.u32 2102212464, %v2024
        %v2037 = vshrl.u32 920167782, %v2025
        %v2038 = vor.u32 %v2036, %v2037
        %v2039 = vshll.u32 920167782, %v2024
        %v2040 = vshrl.u32 1326507024, %v2025
        %v2041 = vor.u32 %v2039, %v2040
        %vm2042 = vcmp.lt.s32.totalorder %v2023, 1
        %vm2043 = vcmp.lt.s32.totalorder %v2023, 2
        %vm2044 = vcmp.lt.s32.totalorder %v2023, 3
        %vm2045 = vcmp.lt.s32.totalorder %v2023, 4
        %v2046 = vsel %vm2042, %v2026, %v2029
        %v2047 = vsel %vm2045, %v2035, 2102212464
        %v2048 = vsel %vm2044, %v2032, %v2047
        %v2049 = vsel %vm2043, %v2046, %v2048
        %v2050 = vsel %vm2042, %v2029, %v2032
        %v2051 = vsel %vm2045, %v2038, 920167782
        %v2052 = vsel %vm2044, %v2035, %v2051
        %v2053 = vsel %vm2043, %v2050, %v2052
        %v2054 = vsel %vm2042, %v2032, %v2035
        %v2055 = vsel %vm2045, %v2041, 1326507024
        %v2056 = vsel %vm2044, %v2038, %v2055
        %v2057 = vsel %vm2043, %v2054, %v2056
        %v2058 = vshll.u32 %v2018, 8
        %v2059 = vmul.u32.u64.compose %v2058, %v2057
        %v2060 = vextract.low.u32 %v2059
        %v2061 = vextract.high.u32 %v2059
        %v2062 = vmul.u32.u64.compose %v2058, %v2053
        %v2063 = vextract.low.u32 %v2062
        %v2064 = vextract.high.u32 %v2062
        %v2065 = vmul.u32 %v2058, %v2049
        %v2066 = vadd.s32 %v2061, %v2063
        %vm2067 = vc.u32 %v2061, %v2063
        %v2068 = vadd.s32 %v2064, 1
        %v2069 = vsel %vm2067, %v2068, %v2064
        %v2070 = vadd.s32 %v2065, %v2069
        %v2071 = vadd.s32 %v2070, 536870912
        %v2072 = vshrl.u32 %v2071, 30
        %v2073 = vshll.u32 %v2072, 30
        %v2074 = vsub.s32 %v2070, %v2073
        %vm2075 = vcmp.lt.s32.totalorder %v2074, 0
        %v2076 = vsub.s32 0, %v2074
        %v2077 = vsel %vm2075, %v2076, %v2074
        %v2078 = vclz %v2077
        %v2079 = vsub.s32 %v2078, 2
        %vm2080 = vcmp.gt.s32.totalorder 0, %v2079
        %v2081 = vsel %vm2080, 0, %v2079
        %v2082 = vsub.s32 32, %v2081
        %v2083 = vshll.u32 %v2074, %v2081
        %v2084 = vshrl.u32 %v2066, %v2082
        %v2085 = vor.u32 %v2083, %v2084
        %v2086 = vsub.s32 4294967266, %v2081
        %v2087 = vadd.s32 %v2086, 127
        %v2088 = vshll.u32 %v2087, 23
        %v2089 = vor.u32 4788187, %v2088
        %v2090 = vand.u32 2147483647, %v2089
        %v2092 = vcvt.s32.f32 %v2085
        %v2093 = vmul.f32 %v2092, %v2090
        %v2094 = vxor.u32 %v2093, 2147483648
        %v2095 = vsel %vm2012, %v2094, %v2093
        %v2096 = vsub.s32 4, %v2072
        %v2097 = vsel %vm2012, %v2096, %v2072
        %v2098 = vsel %vm2011, %v433, %v2095
        %v2099 = vsel %vm2011, 0, %v2097
        %v2100 = vcosq.f32.pop %v2098
        %v2101 = vsinq.f32.pop %v2098
        %vm2102 = vweird.f32 %v433
        %v2103 = vadd.s32 %v2099, 3
        %v2104 = vand.u32 %v2103, 3
        %vm2105 = vcmp.lt.s32.totalorder %v2104, 2
        %vm2106 = vcmp.eq.s32.totalorder %v2104, 0
        %v2107 = vxor.u32 %v2101, 2147483648
        %v2108 = vsel %vm2106, %v2100, %v2107
        %vm2109 = vcmp.eq.s32.totalorder %v2104, 2
        %v2110 = vxor.u32 %v2100, 2147483648
        %v2111 = vsel %vm2109, %v2110, %v2101
        %v2112 = vsel %vm2105, %v2108, %v2111
        %v2113 = vsel %vm2102, nan, %v2112
        %v2114 = vand.u32 2147483647, %v434
        %vm2115 = vcmp.le.f32.partialorder %v2114, 0.7853982
        %vm2116 = vcmp.lt.s32.totalorder %v434, 0
        %v2117 = vand.u32 %v434, 2139095040
        %v2118 = vshrl.u32 %v2117, 23
        %v2119 = vsub.s32 %v2118, 127
        %v2120 = vand.u32 2147483647, %v434
        %v2121 = vand.u32 %v2120, 8388607
        %v2122 = vor.u32 %v2121, 8388608
        %v2123 = vsub.s32 0, %v2122
        %v2124 = vadd.s32 %v2119, 1
        %vm2125 = vcmp.gt.s32.totalorder %v2124, 0
        %v2126 = vsel %vm2125, %v2124, 0
        %v2127 = vshrl.u32 %v2126, 5
        %v2128 = vand.u32 %v2126, 31
        %v2129 = vsub.s32 32, %v2128
        %v2130 = vshrl.u32 683565275, %v2129
        %v2131 = vshll.u32 683565275, %v2128
        %v2132 = vshrl.u32 2475754826, %v2129
        %v2133 = vor.u32 %v2131, %v2132
        %v2134 = vshll.u32 2475754826, %v2128
        %v2135 = vshrl.u32 2131351028, %v2129
        %v2136 = vor.u32 %v2134, %v2135
        %v2137 = vshll.u32 2131351028, %v2128
        %v2138 = vshrl.u32 2102212464, %v2129
        %v2139 = vor.u32 %v2137, %v2138
        %v2140 = vshll.u32 2102212464, %v2128
        %v2141 = vshrl.u32 920167782, %v2129
        %v2142 = vor.u32 %v2140, %v2141
        %v2143 = vshll.u32 920167782, %v2128
        %v2144 = vshrl.u32 1326507024, %v2129
        %v2145 = vor.u32 %v2143, %v2144
        %vm2146 = vcmp.lt.s32.totalorder %v2127, 1
        %vm2147 = vcmp.lt.s32.totalorder %v2127, 2
        %vm2148 = vcmp.lt.s32.totalorder %v2127, 3
        %vm2149 = vcmp.lt.s32.totalorder %v2127, 4
        %v2150 = vsel %vm2146, %v2130, %v2133
        %v2151 = vsel %vm2149, %v2139, 2102212464
        %v2152 = vsel %vm2148, %v2136, %v2151
        %v2153 = vsel %vm2147, %v2150, %v2152
        %v2154 = vsel %vm2146, %v2133, %v2136
        %v2155 = vsel %vm2149, %v2142, 920167782
        %v2156 = vsel %vm2148, %v2139, %v2155
        %v2157 = vsel %vm2147, %v2154, %v2156
        %v2158 = vsel %vm2146, %v2136, %v2139
        %v2159 = vsel %vm2149, %v2145, 1326507024
        %v2160 = vsel %vm2148, %v2142, %v2159
        %v2161 = vsel %vm2147, %v2158, %v2160
        %v2162 = vshll.u32 %v2122, 8
        %v2163 = vmul.u32.u64.compose %v2162, %v2161
        %v2164 = vextract.low.u32 %v2163
        %v2165 = vextract.high.u32 %v2163
        %v2166 = vmul.u32.u64.compose %v2162, %v2157
        %v2167 = vextract.low.u32 %v2166
        %v2168 = vextract.high.u32 %v2166
        %v2169 = vmul.u32 %v2162, %v2153
        %v2170 = vadd.s32 %v2165, %v2167
        %vm2171 = vc.u32 %v2165, %v2167
        %v2172 = vadd.s32 %v2168, 1
        %v2173 = vsel %vm2171, %v2172, %v2168
        %v2174 = vadd.s32 %v2169, %v2173
        %v2175 = vadd.s32 %v2174, 536870912
        %v2176 = vshrl.u32 %v2175, 30
        %v2177 = vshll.u32 %v2176, 30
        %v2178 = vsub.s32 %v2174, %v2177
        %vm2179 = vcmp.lt.s32.totalorder %v2178, 0
        %v2180 = vsub.s32 0, %v2178
        %v2181 = vsel %vm2179, %v2180, %v2178
        %v2182 = vclz %v2181
        %v2183 = vsub.s32 %v2182, 2
        %vm2184 = vcmp.gt.s32.totalorder 0, %v2183
        %v2185 = vsel %vm2184, 0, %v2183
        %v2186 = vsub.s32 32, %v2185
        %v2187 = vshll.u32 %v2178, %v2185
        %v2188 = vshrl.u32 %v2170, %v2186
        %v2189 = vor.u32 %v2187, %v2188
        %v2190 = vsub.s32 4294967266, %v2185
        %v2191 = vadd.s32 %v2190, 127
        %v2192 = vshll.u32 %v2191, 23
        %v2193 = vor.u32 4788187, %v2192
        %v2194 = vand.u32 2147483647, %v2193
        %v2196 = vcvt.s32.f32 %v2189
        %v2197 = vmul.f32 %v2196, %v2194
        %v2198 = vxor.u32 %v2197, 2147483648
        %v2199 = vsel %vm2116, %v2198, %v2197
        %v2200 = vsub.s32 4, %v2176
        %v2201 = vsel %vm2116, %v2200, %v2176
        %v2202 = vsel %vm2115, %v434, %v2199
        %v2203 = vsel %vm2115, 0, %v2201
        %v2204 = vcosq.f32.pop %v2202
        %v2205 = vsinq.f32.pop %v2202
        %vm2206 = vweird.f32 %v434
        %v2207 = vadd.s32 %v2203, 3
        %v2208 = vand.u32 %v2207, 3
        %vm2209 = vcmp.lt.s32.totalorder %v2208, 2
        %vm2210 = vcmp.eq.s32.totalorder %v2208, 0
        %v2211 = vxor.u32 %v2205, 2147483648
        %v2212 = vsel %vm2210, %v2204, %v2211
        %vm2213 = vcmp.eq.s32.totalorder %v2208, 2
        %v2214 = vxor.u32 %v2204, 2147483648
        %v2215 = vsel %vm2213, %v2214, %v2205
        %v2216 = vsel %vm2209, %v2212, %v2215
        %v2217 = vsel %vm2206, nan, %v2216
        %v2218 = vand.u32 2147483647, %v435
        %vm2219 = vcmp.le.f32.partialorder %v2218, 0.7853982
        %vm2220 = vcmp.lt.s32.totalorder %v435, 0
        %v2221 = vand.u32 %v435, 2139095040
        %v2222 = vshrl.u32 %v2221, 23
        %v2223 = vsub.s32 %v2222, 127
        %v2224 = vand.u32 2147483647, %v435
        %v2225 = vand.u32 %v2224, 8388607
        %v2226 = vor.u32 %v2225, 8388608
        %v2227 = vsub.s32 0, %v2226
        %v2228 = vadd.s32 %v2223, 1
        %vm2229 = vcmp.gt.s32.totalorder %v2228, 0
        %v2230 = vsel %vm2229, %v2228, 0
        %v2231 = vshrl.u32 %v2230, 5
        %v2232 = vand.u32 %v2230, 31
        %v2233 = vsub.s32 32, %v2232
        %v2234 = vshrl.u32 683565275, %v2233
        %v2235 = vshll.u32 683565275, %v2232
        %v2236 = vshrl.u32 2475754826, %v2233
        %v2237 = vor.u32 %v2235, %v2236
        %v2238 = vshll.u32 2475754826, %v2232
        %v2239 = vshrl.u32 2131351028, %v2233
        %v2240 = vor.u32 %v2238, %v2239
        %v2241 = vshll.u32 2131351028, %v2232
        %v2242 = vshrl.u32 2102212464, %v2233
        %v2243 = vor.u32 %v2241, %v2242
        %v2244 = vshll.u32 2102212464, %v2232
        %v2245 = vshrl.u32 920167782, %v2233
        %v2246 = vor.u32 %v2244, %v2245
        %v2247 = vshll.u32 920167782, %v2232
        %v2248 = vshrl.u32 1326507024, %v2233
        %v2249 = vor.u32 %v2247, %v2248
        %vm2250 = vcmp.lt.s32.totalorder %v2231, 1
        %vm2251 = vcmp.lt.s32.totalorder %v2231, 2
        %vm2252 = vcmp.lt.s32.totalorder %v2231, 3
        %vm2253 = vcmp.lt.s32.totalorder %v2231, 4
        %v2254 = vsel %vm2250, %v2234, %v2237
        %v2255 = vsel %vm2253, %v2243, 2102212464
        %v2256 = vsel %vm2252, %v2240, %v2255
        %v2257 = vsel %vm2251, %v2254, %v2256
        %v2258 = vsel %vm2250, %v2237, %v2240
        %v2259 = vsel %vm2253, %v2246, 920167782
        %v2260 = vsel %vm2252, %v2243, %v2259
        %v2261 = vsel %vm2251, %v2258, %v2260
        %v2262 = vsel %vm2250, %v2240, %v2243
        %v2263 = vsel %vm2253, %v2249, 1326507024
        %v2264 = vsel %vm2252, %v2246, %v2263
        %v2265 = vsel %vm2251, %v2262, %v2264
        %v2266 = vshll.u32 %v2226, 8
        %v2267 = vmul.u32.u64.compose %v2266, %v2265
        %v2268 = vextract.low.u32 %v2267
        %v2269 = vextract.high.u32 %v2267
        %v2270 = vmul.u32.u64.compose %v2266, %v2261
        %v2271 = vextract.low.u32 %v2270
        %v2272 = vextract.high.u32 %v2270
        %v2273 = vmul.u32 %v2266, %v2257
        %v2274 = vadd.s32 %v2269, %v2271
        %vm2275 = vc.u32 %v2269, %v2271
        %v2276 = vadd.s32 %v2272, 1
        %v2277 = vsel %vm2275, %v2276, %v2272
        %v2278 = vadd.s32 %v2273, %v2277
        %v2279 = vadd.s32 %v2278, 536870912
        %v2280 = vshrl.u32 %v2279, 30
        %v2281 = vshll.u32 %v2280, 30
        %v2282 = vsub.s32 %v2278, %v2281
        %vm2283 = vcmp.lt.s32.totalorder %v2282, 0
        %v2284 = vsub.s32 0, %v2282
        %v2285 = vsel %vm2283, %v2284, %v2282
        %v2286 = vclz %v2285
        %v2287 = vsub.s32 %v2286, 2
        %vm2288 = vcmp.gt.s32.totalorder 0, %v2287
        %v2289 = vsel %vm2288, 0, %v2287
        %v2290 = vsub.s32 32, %v2289
        %v2291 = vshll.u32 %v2282, %v2289
        %v2292 = vshrl.u32 %v2274, %v2290
        %v2293 = vor.u32 %v2291, %v2292
        %v2294 = vsub.s32 4294967266, %v2289
        %v2295 = vadd.s32 %v2294, 127
        %v2296 = vshll.u32 %v2295, 23
        %v2297 = vor.u32 4788187, %v2296
        %v2298 = vand.u32 2147483647, %v2297
        %v2300 = vcvt.s32.f32 %v2293
        %v2301 = vmul.f32 %v2300, %v2298
        %v2302 = vxor.u32 %v2301, 2147483648
        %v2303 = vsel %vm2220, %v2302, %v2301
        %v2304 = vsub.s32 4, %v2280
        %v2305 = vsel %vm2220, %v2304, %v2280
        %v2306 = vsel %vm2219, %v435, %v2303
        %v2307 = vsel %vm2219, 0, %v2305
        %v2308 = vcosq.f32.pop %v2306
        %v2309 = vsinq.f32.pop %v2306
        %vm2310 = vweird.f32 %v435
        %v2311 = vadd.s32 %v2307, 3
        %v2312 = vand.u32 %v2311, 3
        %vm2313 = vcmp.lt.s32.totalorder %v2312, 2
        %vm2314 = vcmp.eq.s32.totalorder %v2312, 0
        %v2315 = vxor.u32 %v2309, 2147483648
        %v2316 = vsel %vm2314, %v2308, %v2315
        %vm2317 = vcmp.eq.s32.totalorder %v2312, 2
        %v2318 = vxor.u32 %v2308, 2147483648
        %v2319 = vsel %vm2317, %v2318, %v2309
        %v2320 = vsel %vm2313, %v2316, %v2319
        %v2321 = vsel %vm2310, nan, %v2320
        %v2322 = vand.u32 2147483647, %v436
        %vm2323 = vcmp.le.f32.partialorder %v2322, 0.7853982
        %vm2324 = vcmp.lt.s32.totalorder %v436, 0
        %v2325 = vand.u32 %v436, 2139095040
        %v2326 = vshrl.u32 %v2325, 23
        %v2327 = vsub.s32 %v2326, 127
        %v2328 = vand.u32 2147483647, %v436
        %v2329 = vand.u32 %v2328, 8388607
        %v2330 = vor.u32 %v2329, 8388608
        %v2331 = vsub.s32 0, %v2330
        %v2332 = vadd.s32 %v2327, 1
        %vm2333 = vcmp.gt.s32.totalorder %v2332, 0
        %v2334 = vsel %vm2333, %v2332, 0
        %v2335 = vshrl.u32 %v2334, 5
        %v2336 = vand.u32 %v2334, 31
        %v2337 = vsub.s32 32, %v2336
        %v2338 = vshrl.u32 683565275, %v2337
        %v2339 = vshll.u32 683565275, %v2336
        %v2340 = vshrl.u32 2475754826, %v2337
        %v2341 = vor.u32 %v2339, %v2340
        %v2342 = vshll.u32 2475754826, %v2336
        %v2343 = vshrl.u32 2131351028, %v2337
        %v2344 = vor.u32 %v2342, %v2343
        %v2345 = vshll.u32 2131351028, %v2336
        %v2346 = vshrl.u32 2102212464, %v2337
        %v2347 = vor.u32 %v2345, %v2346
        %v2348 = vshll.u32 2102212464, %v2336
        %v2349 = vshrl.u32 920167782, %v2337
        %v2350 = vor.u32 %v2348, %v2349
        %v2351 = vshll.u32 920167782, %v2336
        %v2352 = vshrl.u32 1326507024, %v2337
        %v2353 = vor.u32 %v2351, %v2352
        %vm2354 = vcmp.lt.s32.totalorder %v2335, 1
        %vm2355 = vcmp.lt.s32.totalorder %v2335, 2
        %vm2356 = vcmp.lt.s32.totalorder %v2335, 3
        %vm2357 = vcmp.lt.s32.totalorder %v2335, 4
        %v2358 = vsel %vm2354, %v2338, %v2341
        %v2359 = vsel %vm2357, %v2347, 2102212464
        %v2360 = vsel %vm2356, %v2344, %v2359
        %v2361 = vsel %vm2355, %v2358, %v2360
        %v2362 = vsel %vm2354, %v2341, %v2344
        %v2363 = vsel %vm2357, %v2350, 920167782
        %v2364 = vsel %vm2356, %v2347, %v2363
        %v2365 = vsel %vm2355, %v2362, %v2364
        %v2366 = vsel %vm2354, %v2344, %v2347
        %v2367 = vsel %vm2357, %v2353, 1326507024
        %v2368 = vsel %vm2356, %v2350, %v2367
        %v2369 = vsel %vm2355, %v2366, %v2368
        %v2370 = vshll.u32 %v2330, 8
        %v2371 = vmul.u32.u64.compose %v2370, %v2369
        %v2372 = vextract.low.u32 %v2371
        %v2373 = vextract.high.u32 %v2371
        %v2374 = vmul.u32.u64.compose %v2370, %v2365
        %v2375 = vextract.low.u32 %v2374
        %v2376 = vextract.high.u32 %v2374
        %v2377 = vmul.u32 %v2370, %v2361
        %v2378 = vadd.s32 %v2373, %v2375
        %vm2379 = vc.u32 %v2373, %v2375
        %v2380 = vadd.s32 %v2376, 1
        %v2381 = vsel %vm2379, %v2380, %v2376
        %v2382 = vadd.s32 %v2377, %v2381
        %v2383 = vadd.s32 %v2382, 536870912
        %v2384 = vshrl.u32 %v2383, 30
        %v2385 = vshll.u32 %v2384, 30
        %v2386 = vsub.s32 %v2382, %v2385
        %vm2387 = vcmp.lt.s32.totalorder %v2386, 0
        %v2388 = vsub.s32 0, %v2386
        %v2389 = vsel %vm2387, %v2388, %v2386
        %v2390 = vclz %v2389
        %v2391 = vsub.s32 %v2390, 2
        %vm2392 = vcmp.gt.s32.totalorder 0, %v2391
        %v2393 = vsel %vm2392, 0, %v2391
        %v2394 = vsub.s32 32, %v2393
        %v2395 = vshll.u32 %v2386, %v2393
        %v2396 = vshrl.u32 %v2378, %v2394
        %v2397 = vor.u32 %v2395, %v2396
        %v2398 = vsub.s32 4294967266, %v2393
        %v2399 = vadd.s32 %v2398, 127
        %v2400 = vshll.u32 %v2399, 23
        %v2401 = vor.u32 4788187, %v2400
        %v2402 = vand.u32 2147483647, %v2401
        %v2404 = vcvt.s32.f32 %v2397
        %v2405 = vmul.f32 %v2404, %v2402
        %v2406 = vxor.u32 %v2405, 2147483648
        %v2407 = vsel %vm2324, %v2406, %v2405
        %v2408 = vsub.s32 4, %v2384
        %v2409 = vsel %vm2324, %v2408, %v2384
        %v2410 = vsel %vm2323, %v436, %v2407
        %v2411 = vsel %vm2323, 0, %v2409
        %v2412 = vcosq.f32.pop %v2410
        %v2413 = vsinq.f32.pop %v2410
        %vm2414 = vweird.f32 %v436
        %v2415 = vadd.s32 %v2411, 3
        %v2416 = vand.u32 %v2415, 3
        %vm2417 = vcmp.lt.s32.totalorder %v2416, 2
        %vm2418 = vcmp.eq.s32.totalorder %v2416, 0
        %v2419 = vxor.u32 %v2413, 2147483648
        %v2420 = vsel %vm2418, %v2412, %v2419
        %vm2421 = vcmp.eq.s32.totalorder %v2416, 2
        %v2422 = vxor.u32 %v2412, 2147483648
        %v2423 = vsel %vm2421, %v2422, %v2413
        %v2424 = vsel %vm2417, %v2420, %v2423
        %v2425 = vsel %vm2414, nan, %v2424
        %v2426 = vand.u32 2147483647, %v437
        %vm2427 = vcmp.le.f32.partialorder %v2426, 0.7853982
        %vm2428 = vcmp.lt.s32.totalorder %v437, 0
        %v2429 = vand.u32 %v437, 2139095040
        %v2430 = vshrl.u32 %v2429, 23
        %v2431 = vsub.s32 %v2430, 127
        %v2432 = vand.u32 2147483647, %v437
        %v2433 = vand.u32 %v2432, 8388607
        %v2434 = vor.u32 %v2433, 8388608
        %v2435 = vsub.s32 0, %v2434
        %v2436 = vadd.s32 %v2431, 1
        %vm2437 = vcmp.gt.s32.totalorder %v2436, 0
        %v2438 = vsel %vm2437, %v2436, 0
        %v2439 = vshrl.u32 %v2438, 5
        %v2440 = vand.u32 %v2438, 31
        %v2441 = vsub.s32 32, %v2440
        %v2442 = vshrl.u32 683565275, %v2441
        %v2443 = vshll.u32 683565275, %v2440
        %v2444 = vshrl.u32 2475754826, %v2441
        %v2445 = vor.u32 %v2443, %v2444
        %v2446 = vshll.u32 2475754826, %v2440
        %v2447 = vshrl.u32 2131351028, %v2441
        %v2448 = vor.u32 %v2446, %v2447
        %v2449 = vshll.u32 2131351028, %v2440
        %v2450 = vshrl.u32 2102212464, %v2441
        %v2451 = vor.u32 %v2449, %v2450
        %v2452 = vshll.u32 2102212464, %v2440
        %v2453 = vshrl.u32 920167782, %v2441
        %v2454 = vor.u32 %v2452, %v2453
        %v2455 = vshll.u32 920167782, %v2440
        %v2456 = vshrl.u32 1326507024, %v2441
        %v2457 = vor.u32 %v2455, %v2456
        %vm2458 = vcmp.lt.s32.totalorder %v2439, 1
        %vm2459 = vcmp.lt.s32.totalorder %v2439, 2
        %vm2460 = vcmp.lt.s32.totalorder %v2439, 3
        %vm2461 = vcmp.lt.s32.totalorder %v2439, 4
        %v2462 = vsel %vm2458, %v2442, %v2445
        %v2463 = vsel %vm2461, %v2451, 2102212464
        %v2464 = vsel %vm2460, %v2448, %v2463
        %v2465 = vsel %vm2459, %v2462, %v2464
        %v2466 = vsel %vm2458, %v2445, %v2448
        %v2467 = vsel %vm2461, %v2454, 920167782
        %v2468 = vsel %vm2460, %v2451, %v2467
        %v2469 = vsel %vm2459, %v2466, %v2468
        %v2470 = vsel %vm2458, %v2448, %v2451
        %v2471 = vsel %vm2461, %v2457, 1326507024
        %v2472 = vsel %vm2460, %v2454, %v2471
        %v2473 = vsel %vm2459, %v2470, %v2472
        %v2474 = vshll.u32 %v2434, 8
        %v2475 = vmul.u32.u64.compose %v2474, %v2473
        %v2476 = vextract.low.u32 %v2475
        %v2477 = vextract.high.u32 %v2475
        %v2478 = vmul.u32.u64.compose %v2474, %v2469
        %v2479 = vextract.low.u32 %v2478
        %v2480 = vextract.high.u32 %v2478
        %v2481 = vmul.u32 %v2474, %v2465
        %v2482 = vadd.s32 %v2477, %v2479
        %vm2483 = vc.u32 %v2477, %v2479
        %v2484 = vadd.s32 %v2480, 1
        %v2485 = vsel %vm2483, %v2484, %v2480
        %v2486 = vadd.s32 %v2481, %v2485
        %v2487 = vadd.s32 %v2486, 536870912
        %v2488 = vshrl.u32 %v2487, 30
        %v2489 = vshll.u32 %v2488, 30
        %v2490 = vsub.s32 %v2486, %v2489
        %vm2491 = vcmp.lt.s32.totalorder %v2490, 0
        %v2492 = vsub.s32 0, %v2490
        %v2493 = vsel %vm2491, %v2492, %v2490
        %v2494 = vclz %v2493
        %v2495 = vsub.s32 %v2494, 2
        %vm2496 = vcmp.gt.s32.totalorder 0, %v2495
        %v2497 = vsel %vm2496, 0, %v2495
        %v2498 = vsub.s32 32, %v2497
        %v2499 = vshll.u32 %v2490, %v2497
        %v2500 = vshrl.u32 %v2482, %v2498
        %v2501 = vor.u32 %v2499, %v2500
        %v2502 = vsub.s32 4294967266, %v2497
        %v2503 = vadd.s32 %v2502, 127
        %v2504 = vshll.u32 %v2503, 23
        %v2505 = vor.u32 4788187, %v2504
        %v2506 = vand.u32 2147483647, %v2505
        %v2508 = vcvt.s32.f32 %v2501
        %v2509 = vmul.f32 %v2508, %v2506
        %v2510 = vxor.u32 %v2509, 2147483648
        %v2511 = vsel %vm2428, %v2510, %v2509
        %v2512 = vsub.s32 4, %v2488
        %v2513 = vsel %vm2428, %v2512, %v2488
        %v2514 = vsel %vm2427, %v437, %v2511
        %v2515 = vsel %vm2427, 0, %v2513
        %v2516 = vcosq.f32.pop %v2514
        %v2517 = vsinq.f32.pop %v2514
        %vm2518 = vweird.f32 %v437
        %v2519 = vadd.s32 %v2515, 3
        %v2520 = vand.u32 %v2519, 3
        %vm2521 = vcmp.lt.s32.totalorder %v2520, 2
        %vm2522 = vcmp.eq.s32.totalorder %v2520, 0
        %v2523 = vxor.u32 %v2517, 2147483648
        %v2524 = vsel %vm2522, %v2516, %v2523
        %vm2525 = vcmp.eq.s32.totalorder %v2520, 2
        %v2526 = vxor.u32 %v2516, 2147483648
        %v2527 = vsel %vm2525, %v2526, %v2517
        %v2528 = vsel %vm2521, %v2524, %v2527
        %v2529 = vsel %vm2518, nan, %v2528
        %v2530 = vand.u32 2147483647, %v438
        %vm2531 = vcmp.le.f32.partialorder %v2530, 0.7853982
        %vm2532 = vcmp.lt.s32.totalorder %v438, 0
        %v2533 = vand.u32 %v438, 2139095040
        %v2534 = vshrl.u32 %v2533, 23
        %v2535 = vsub.s32 %v2534, 127
        %v2536 = vand.u32 2147483647, %v438
        %v2537 = vand.u32 %v2536, 8388607
        %v2538 = vor.u32 %v2537, 8388608
        %v2539 = vsub.s32 0, %v2538
        %v2540 = vadd.s32 %v2535, 1
        %vm2541 = vcmp.gt.s32.totalorder %v2540, 0
        %v2542 = vsel %vm2541, %v2540, 0
        %v2543 = vshrl.u32 %v2542, 5
        %v2544 = vand.u32 %v2542, 31
        %v2545 = vsub.s32 32, %v2544
        %v2546 = vshrl.u32 683565275, %v2545
        %v2547 = vshll.u32 683565275, %v2544
        %v2548 = vshrl.u32 2475754826, %v2545
        %v2549 = vor.u32 %v2547, %v2548
        %v2550 = vshll.u32 2475754826, %v2544
        %v2551 = vshrl.u32 2131351028, %v2545
        %v2552 = vor.u32 %v2550, %v2551
        %v2553 = vshll.u32 2131351028, %v2544
        %v2554 = vshrl.u32 2102212464, %v2545
        %v2555 = vor.u32 %v2553, %v2554
        %v2556 = vshll.u32 2102212464, %v2544
        %v2557 = vshrl.u32 920167782, %v2545
        %v2558 = vor.u32 %v2556, %v2557
        %v2559 = vshll.u32 920167782, %v2544
        %v2560 = vshrl.u32 1326507024, %v2545
        %v2561 = vor.u32 %v2559, %v2560
        %vm2562 = vcmp.lt.s32.totalorder %v2543, 1
        %vm2563 = vcmp.lt.s32.totalorder %v2543, 2
        %vm2564 = vcmp.lt.s32.totalorder %v2543, 3
        %vm2565 = vcmp.lt.s32.totalorder %v2543, 4
        %v2566 = vsel %vm2562, %v2546, %v2549
        %v2567 = vsel %vm2565, %v2555, 2102212464
        %v2568 = vsel %vm2564, %v2552, %v2567
        %v2569 = vsel %vm2563, %v2566, %v2568
        %v2570 = vsel %vm2562, %v2549, %v2552
        %v2571 = vsel %vm2565, %v2558, 920167782
        %v2572 = vsel %vm2564, %v2555, %v2571
        %v2573 = vsel %vm2563, %v2570, %v2572
        %v2574 = vsel %vm2562, %v2552, %v2555
        %v2575 = vsel %vm2565, %v2561, 1326507024
        %v2576 = vsel %vm2564, %v2558, %v2575
        %v2577 = vsel %vm2563, %v2574, %v2576
        %v2578 = vshll.u32 %v2538, 8
        %v2579 = vmul.u32.u64.compose %v2578, %v2577
        %v2580 = vextract.low.u32 %v2579
        %v2581 = vextract.high.u32 %v2579
        %v2582 = vmul.u32.u64.compose %v2578, %v2573
        %v2583 = vextract.low.u32 %v2582
        %v2584 = vextract.high.u32 %v2582
        %v2585 = vmul.u32 %v2578, %v2569
        %v2586 = vadd.s32 %v2581, %v2583
        %vm2587 = vc.u32 %v2581, %v2583
        %v2588 = vadd.s32 %v2584, 1
        %v2589 = vsel %vm2587, %v2588, %v2584
        %v2590 = vadd.s32 %v2585, %v2589
        %v2591 = vadd.s32 %v2590, 536870912
        %v2592 = vshrl.u32 %v2591, 30
        %v2593 = vshll.u32 %v2592, 30
        %v2594 = vsub.s32 %v2590, %v2593
        %vm2595 = vcmp.lt.s32.totalorder %v2594, 0
        %v2596 = vsub.s32 0, %v2594
        %v2597 = vsel %vm2595, %v2596, %v2594
        %v2598 = vclz %v2597
        %v2599 = vsub.s32 %v2598, 2
        %vm2600 = vcmp.gt.s32.totalorder 0, %v2599
        %v2601 = vsel %vm2600, 0, %v2599
        %v2602 = vsub.s32 32, %v2601
        %v2603 = vshll.u32 %v2594, %v2601
        %v2604 = vshrl.u32 %v2586, %v2602
        %v2605 = vor.u32 %v2603, %v2604
        %v2606 = vsub.s32 4294967266, %v2601
        %v2607 = vadd.s32 %v2606, 127
        %v2608 = vshll.u32 %v2607, 23
        %v2609 = vor.u32 4788187, %v2608
        %v2610 = vand.u32 2147483647, %v2609
        %v2612 = vcvt.s32.f32 %v2605
        %v2613 = vmul.f32 %v2612, %v2610
        %v2614 = vxor.u32 %v2613, 2147483648
        %v2615 = vsel %vm2532, %v2614, %v2613
        %v2616 = vsub.s32 4, %v2592
        %v2617 = vsel %vm2532, %v2616, %v2592
        %v2618 = vsel %vm2531, %v438, %v2615
        %v2619 = vsel %vm2531, 0, %v2617
        %v2620 = vcosq.f32.pop %v2618
        %v2621 = vsinq.f32.pop %v2618
        %vm2622 = vweird.f32 %v438
        %v2623 = vadd.s32 %v2619, 3
        %v2624 = vand.u32 %v2623, 3
        %vm2625 = vcmp.lt.s32.totalorder %v2624, 2
        %vm2626 = vcmp.eq.s32.totalorder %v2624, 0
        %v2627 = vxor.u32 %v2621, 2147483648
        %v2628 = vsel %vm2626, %v2620, %v2627
        %vm2629 = vcmp.eq.s32.totalorder %v2624, 2
        %v2630 = vxor.u32 %v2620, 2147483648
        %v2631 = vsel %vm2629, %v2630, %v2621
        %v2632 = vsel %vm2625, %v2628, %v2631
        %v2633 = vsel %vm2622, nan, %v2632
        %v2634 = vand.u32 2147483647, %v439
        %vm2635 = vcmp.le.f32.partialorder %v2634, 0.7853982
        %vm2636 = vcmp.lt.s32.totalorder %v439, 0
        %v2637 = vand.u32 %v439, 2139095040
        %v2638 = vshrl.u32 %v2637, 23
        %v2639 = vsub.s32 %v2638, 127
        %v2640 = vand.u32 2147483647, %v439
        %v2641 = vand.u32 %v2640, 8388607
        %v2642 = vor.u32 %v2641, 8388608
        %v2643 = vsub.s32 0, %v2642
        %v2644 = vadd.s32 %v2639, 1
        %vm2645 = vcmp.gt.s32.totalorder %v2644, 0
        %v2646 = vsel %vm2645, %v2644, 0
        %v2647 = vshrl.u32 %v2646, 5
        %v2648 = vand.u32 %v2646, 31
        %v2649 = vsub.s32 32, %v2648
        %v2650 = vshrl.u32 683565275, %v2649
        %v2651 = vshll.u32 683565275, %v2648
        %v2652 = vshrl.u32 2475754826, %v2649
        %v2653 = vor.u32 %v2651, %v2652
        %v2654 = vshll.u32 2475754826, %v2648
        %v2655 = vshrl.u32 2131351028, %v2649
        %v2656 = vor.u32 %v2654, %v2655
        %v2657 = vshll.u32 2131351028, %v2648
        %v2658 = vshrl.u32 2102212464, %v2649
        %v2659 = vor.u32 %v2657, %v2658
        %v2660 = vshll.u32 2102212464, %v2648
        %v2661 = vshrl.u32 920167782, %v2649
        %v2662 = vor.u32 %v2660, %v2661
        %v2663 = vshll.u32 920167782, %v2648
        %v2664 = vshrl.u32 1326507024, %v2649
        %v2665 = vor.u32 %v2663, %v2664
        %vm2666 = vcmp.lt.s32.totalorder %v2647, 1
        %vm2667 = vcmp.lt.s32.totalorder %v2647, 2
        %vm2668 = vcmp.lt.s32.totalorder %v2647, 3
        %vm2669 = vcmp.lt.s32.totalorder %v2647, 4
        %v2670 = vsel %vm2666, %v2650, %v2653
        %v2671 = vsel %vm2669, %v2659, 2102212464
        %v2672 = vsel %vm2668, %v2656, %v2671
        %v2673 = vsel %vm2667, %v2670, %v2672
        %v2674 = vsel %vm2666, %v2653, %v2656
        %v2675 = vsel %vm2669, %v2662, 920167782
        %v2676 = vsel %vm2668, %v2659, %v2675
        %v2677 = vsel %vm2667, %v2674, %v2676
        %v2678 = vsel %vm2666, %v2656, %v2659
        %v2679 = vsel %vm2669, %v2665, 1326507024
        %v2680 = vsel %vm2668, %v2662, %v2679
        %v2681 = vsel %vm2667, %v2678, %v2680
        %v2682 = vshll.u32 %v2642, 8
        %v2683 = vmul.u32.u64.compose %v2682, %v2681
        %v2684 = vextract.low.u32 %v2683
        %v2685 = vextract.high.u32 %v2683
        %v2686 = vmul.u32.u64.compose %v2682, %v2677
        %v2687 = vextract.low.u32 %v2686
        %v2688 = vextract.high.u32 %v2686
        %v2689 = vmul.u32 %v2682, %v2673
        %v2690 = vadd.s32 %v2685, %v2687
        %vm2691 = vc.u32 %v2685, %v2687
        %v2692 = vadd.s32 %v2688, 1
        %v2693 = vsel %vm2691, %v2692, %v2688
        %v2694 = vadd.s32 %v2689, %v2693
        %v2695 = vadd.s32 %v2694, 536870912
        %v2696 = vshrl.u32 %v2695, 30
        %v2697 = vshll.u32 %v2696, 30
        %v2698 = vsub.s32 %v2694, %v2697
        %vm2699 = vcmp.lt.s32.totalorder %v2698, 0
        %v2700 = vsub.s32 0, %v2698
        %v2701 = vsel %vm2699, %v2700, %v2698
        %v2702 = vclz %v2701
        %v2703 = vsub.s32 %v2702, 2
        %vm2704 = vcmp.gt.s32.totalorder 0, %v2703
        %v2705 = vsel %vm2704, 0, %v2703
        %v2706 = vsub.s32 32, %v2705
        %v2707 = vshll.u32 %v2698, %v2705
        %v2708 = vshrl.u32 %v2690, %v2706
        %v2709 = vor.u32 %v2707, %v2708
        %v2710 = vsub.s32 4294967266, %v2705
        %v2711 = vadd.s32 %v2710, 127
        %v2712 = vshll.u32 %v2711, 23
        %v2713 = vor.u32 4788187, %v2712
        %v2714 = vand.u32 2147483647, %v2713
        %v2716 = vcvt.s32.f32 %v2709
        %v2717 = vmul.f32 %v2716, %v2714
        %v2718 = vxor.u32 %v2717, 2147483648
        %v2719 = vsel %vm2636, %v2718, %v2717
        %v2720 = vsub.s32 4, %v2696
        %v2721 = vsel %vm2636, %v2720, %v2696
        %v2722 = vsel %vm2635, %v439, %v2719
        %v2723 = vsel %vm2635, 0, %v2721
        %v2724 = vcosq.f32.pop %v2722
        %v2725 = vsinq.f32.pop %v2722
        %vm2726 = vweird.f32 %v439
        %v2727 = vadd.s32 %v2723, 3
        %v2728 = vand.u32 %v2727, 3
        %vm2729 = vcmp.lt.s32.totalorder %v2728, 2
        %vm2730 = vcmp.eq.s32.totalorder %v2728, 0
        %v2731 = vxor.u32 %v2725, 2147483648
        %v2732 = vsel %vm2730, %v2724, %v2731
        %vm2733 = vcmp.eq.s32.totalorder %v2728, 2
        %v2734 = vxor.u32 %v2724, 2147483648
        %v2735 = vsel %vm2733, %v2734, %v2725
        %v2736 = vsel %vm2729, %v2732, %v2735
        %v2737 = vsel %vm2726, nan, %v2736
        %v2738 = vand.u32 2147483647, %v440
        %vm2739 = vcmp.le.f32.partialorder %v2738, 0.7853982
        %vm2740 = vcmp.lt.s32.totalorder %v440, 0
        %v2741 = vand.u32 %v440, 2139095040
        %v2742 = vshrl.u32 %v2741, 23
        %v2743 = vsub.s32 %v2742, 127
        %v2744 = vand.u32 2147483647, %v440
        %v2745 = vand.u32 %v2744, 8388607
        %v2746 = vor.u32 %v2745, 8388608
        %v2747 = vsub.s32 0, %v2746
        %v2748 = vadd.s32 %v2743, 1
        %vm2749 = vcmp.gt.s32.totalorder %v2748, 0
        %v2750 = vsel %vm2749, %v2748, 0
        %v2751 = vshrl.u32 %v2750, 5
        %v2752 = vand.u32 %v2750, 31
        %v2753 = vsub.s32 32, %v2752
        %v2754 = vshrl.u32 683565275, %v2753
        %v2755 = vshll.u32 683565275, %v2752
        %v2756 = vshrl.u32 2475754826, %v2753
        %v2757 = vor.u32 %v2755, %v2756
        %v2758 = vshll.u32 2475754826, %v2752
        %v2759 = vshrl.u32 2131351028, %v2753
        %v2760 = vor.u32 %v2758, %v2759
        %v2761 = vshll.u32 2131351028, %v2752
        %v2762 = vshrl.u32 2102212464, %v2753
        %v2763 = vor.u32 %v2761, %v2762
        %v2764 = vshll.u32 2102212464, %v2752
        %v2765 = vshrl.u32 920167782, %v2753
        %v2766 = vor.u32 %v2764, %v2765
        %v2767 = vshll.u32 920167782, %v2752
        %v2768 = vshrl.u32 1326507024, %v2753
        %v2769 = vor.u32 %v2767, %v2768
        %vm2770 = vcmp.lt.s32.totalorder %v2751, 1
        %vm2771 = vcmp.lt.s32.totalorder %v2751, 2
        %vm2772 = vcmp.lt.s32.totalorder %v2751, 3
        %vm2773 = vcmp.lt.s32.totalorder %v2751, 4
        %v2774 = vsel %vm2770, %v2754, %v2757
        %v2775 = vsel %vm2773, %v2763, 2102212464
        %v2776 = vsel %vm2772, %v2760, %v2775
        %v2777 = vsel %vm2771, %v2774, %v2776
        %v2778 = vsel %vm2770, %v2757, %v2760
        %v2779 = vsel %vm2773, %v2766, 920167782
        %v2780 = vsel %vm2772, %v2763, %v2779
        %v2781 = vsel %vm2771, %v2778, %v2780
        %v2782 = vsel %vm2770, %v2760, %v2763
        %v2783 = vsel %vm2773, %v2769, 1326507024
        %v2784 = vsel %vm2772, %v2766, %v2783
        %v2785 = vsel %vm2771, %v2782, %v2784
        %v2786 = vshll.u32 %v2746, 8
        %v2787 = vmul.u32.u64.compose %v2786, %v2785
        %v2788 = vextract.low.u32 %v2787
        %v2789 = vextract.high.u32 %v2787
        %v2790 = vmul.u32.u64.compose %v2786, %v2781
        %v2791 = vextract.low.u32 %v2790
        %v2792 = vextract.high.u32 %v2790
        %v2793 = vmul.u32 %v2786, %v2777
        %v2794 = vadd.s32 %v2789, %v2791
        %vm2795 = vc.u32 %v2789, %v2791
        %v2796 = vadd.s32 %v2792, 1
        %v2797 = vsel %vm2795, %v2796, %v2792
        %v2798 = vadd.s32 %v2793, %v2797
        %v2799 = vadd.s32 %v2798, 536870912
        %v2800 = vshrl.u32 %v2799, 30
        %v2801 = vshll.u32 %v2800, 30
        %v2802 = vsub.s32 %v2798, %v2801
        %vm2803 = vcmp.lt.s32.totalorder %v2802, 0
        %v2804 = vsub.s32 0, %v2802
        %v2805 = vsel %vm2803, %v2804, %v2802
        %v2806 = vclz %v2805
        %v2807 = vsub.s32 %v2806, 2
        %vm2808 = vcmp.gt.s32.totalorder 0, %v2807
        %v2809 = vsel %vm2808, 0, %v2807
        %v2810 = vsub.s32 32, %v2809
        %v2811 = vshll.u32 %v2802, %v2809
        %v2812 = vshrl.u32 %v2794, %v2810
        %v2813 = vor.u32 %v2811, %v2812
        %v2814 = vsub.s32 4294967266, %v2809
        %v2815 = vadd.s32 %v2814, 127
        %v2816 = vshll.u32 %v2815, 23
        %v2817 = vor.u32 4788187, %v2816
        %v2818 = vand.u32 2147483647, %v2817
        %v2820 = vcvt.s32.f32 %v2813
        %v2821 = vmul.f32 %v2820, %v2818
        %v2822 = vxor.u32 %v2821, 2147483648
        %v2823 = vsel %vm2740, %v2822, %v2821
        %v2824 = vsub.s32 4, %v2800
        %v2825 = vsel %vm2740, %v2824, %v2800
        %v2826 = vsel %vm2739, %v440, %v2823
        %v2827 = vsel %vm2739, 0, %v2825
        %v2828 = vcosq.f32.pop %v2826
        %v2829 = vsinq.f32.pop %v2826
        %vm2830 = vweird.f32 %v440
        %v2831 = vadd.s32 %v2827, 3
        %v2832 = vand.u32 %v2831, 3
        %vm2833 = vcmp.lt.s32.totalorder %v2832, 2
        %vm2834 = vcmp.eq.s32.totalorder %v2832, 0
        %v2835 = vxor.u32 %v2829, 2147483648
        %v2836 = vsel %vm2834, %v2828, %v2835
        %vm2837 = vcmp.eq.s32.totalorder %v2832, 2
        %v2838 = vxor.u32 %v2828, 2147483648
        %v2839 = vsel %vm2837, %v2838, %v2829
        %v2840 = vsel %vm2833, %v2836, %v2839
        %v2841 = vsel %vm2830, nan, %v2840
        %v2842 = vand.u32 2147483647, %v441
        %vm2843 = vcmp.le.f32.partialorder %v2842, 0.7853982
        %vm2844 = vcmp.lt.s32.totalorder %v441, 0
        %v2845 = vand.u32 %v441, 2139095040
        %v2846 = vshrl.u32 %v2845, 23
        %v2847 = vsub.s32 %v2846, 127
        %v2848 = vand.u32 2147483647, %v441
        %v2849 = vand.u32 %v2848, 8388607
        %v2850 = vor.u32 %v2849, 8388608
        %v2851 = vsub.s32 0, %v2850
        %v2852 = vadd.s32 %v2847, 1
        %vm2853 = vcmp.gt.s32.totalorder %v2852, 0
        %v2854 = vsel %vm2853, %v2852, 0
        %v2855 = vshrl.u32 %v2854, 5
        %v2856 = vand.u32 %v2854, 31
        %v2857 = vsub.s32 32, %v2856
        %v2858 = vshrl.u32 683565275, %v2857
        %v2859 = vshll.u32 683565275, %v2856
        %v2860 = vshrl.u32 2475754826, %v2857
        %v2861 = vor.u32 %v2859, %v2860
        %v2862 = vshll.u32 2475754826, %v2856
        %v2863 = vshrl.u32 2131351028, %v2857
        %v2864 = vor.u32 %v2862, %v2863
        %v2865 = vshll.u32 2131351028, %v2856
        %v2866 = vshrl.u32 2102212464, %v2857
        %v2867 = vor.u32 %v2865, %v2866
        %v2868 = vshll.u32 2102212464, %v2856
        %v2869 = vshrl.u32 920167782, %v2857
        %v2870 = vor.u32 %v2868, %v2869
        %v2871 = vshll.u32 920167782, %v2856
        %v2872 = vshrl.u32 1326507024, %v2857
        %v2873 = vor.u32 %v2871, %v2872
        %vm2874 = vcmp.lt.s32.totalorder %v2855, 1
        %vm2875 = vcmp.lt.s32.totalorder %v2855, 2
        %vm2876 = vcmp.lt.s32.totalorder %v2855, 3
        %vm2877 = vcmp.lt.s32.totalorder %v2855, 4
        %v2878 = vsel %vm2874, %v2858, %v2861
        %v2879 = vsel %vm2877, %v2867, 2102212464
        %v2880 = vsel %vm2876, %v2864, %v2879
        %v2881 = vsel %vm2875, %v2878, %v2880
        %v2882 = vsel %vm2874, %v2861, %v2864
        %v2883 = vsel %vm2877, %v2870, 920167782
        %v2884 = vsel %vm2876, %v2867, %v2883
        %v2885 = vsel %vm2875, %v2882, %v2884
        %v2886 = vsel %vm2874, %v2864, %v2867
        %v2887 = vsel %vm2877, %v2873, 1326507024
        %v2888 = vsel %vm2876, %v2870, %v2887
        %v2889 = vsel %vm2875, %v2886, %v2888
        %v2890 = vshll.u32 %v2850, 8
        %v2891 = vmul.u32.u64.compose %v2890, %v2889
        %v2892 = vextract.low.u32 %v2891
        %v2893 = vextract.high.u32 %v2891
        %v2894 = vmul.u32.u64.compose %v2890, %v2885
        %v2895 = vextract.low.u32 %v2894
        %v2896 = vextract.high.u32 %v2894
        %v2897 = vmul.u32 %v2890, %v2881
        %v2898 = vadd.s32 %v2893, %v2895
        %vm2899 = vc.u32 %v2893, %v2895
        %v2900 = vadd.s32 %v2896, 1
        %v2901 = vsel %vm2899, %v2900, %v2896
        %v2902 = vadd.s32 %v2897, %v2901
        %v2903 = vadd.s32 %v2902, 536870912
        %v2904 = vshrl.u32 %v2903, 30
        %v2905 = vshll.u32 %v2904, 30
        %v2906 = vsub.s32 %v2902, %v2905
        %vm2907 = vcmp.lt.s32.totalorder %v2906, 0
        %v2908 = vsub.s32 0, %v2906
        %v2909 = vsel %vm2907, %v2908, %v2906
        %v2910 = vclz %v2909
        %v2911 = vsub.s32 %v2910, 2
        %vm2912 = vcmp.gt.s32.totalorder 0, %v2911
        %v2913 = vsel %vm2912, 0, %v2911
        %v2914 = vsub.s32 32, %v2913
        %v2915 = vshll.u32 %v2906, %v2913
        %v2916 = vshrl.u32 %v2898, %v2914
        %v2917 = vor.u32 %v2915, %v2916
        %v2918 = vsub.s32 4294967266, %v2913
        %v2919 = vadd.s32 %v2918, 127
        %v2920 = vshll.u32 %v2919, 23
        %v2921 = vor.u32 4788187, %v2920
        %v2922 = vand.u32 2147483647, %v2921
        %v2924 = vcvt.s32.f32 %v2917
        %v2925 = vmul.f32 %v2924, %v2922
        %v2926 = vxor.u32 %v2925, 2147483648
        %v2927 = vsel %vm2844, %v2926, %v2925
        %v2928 = vsub.s32 4, %v2904
        %v2929 = vsel %vm2844, %v2928, %v2904
        %v2930 = vsel %vm2843, %v441, %v2927
        %v2931 = vsel %vm2843, 0, %v2929
        %v2932 = vcosq.f32.pop %v2930
        %v2933 = vsinq.f32.pop %v2930
        %vm2934 = vweird.f32 %v441
        %v2935 = vadd.s32 %v2931, 3
        %v2936 = vand.u32 %v2935, 3
        %vm2937 = vcmp.lt.s32.totalorder %v2936, 2
        %vm2938 = vcmp.eq.s32.totalorder %v2936, 0
        %v2939 = vxor.u32 %v2933, 2147483648
        %v2940 = vsel %vm2938, %v2932, %v2939
        %vm2941 = vcmp.eq.s32.totalorder %v2936, 2
        %v2942 = vxor.u32 %v2932, 2147483648
        %v2943 = vsel %vm2941, %v2942, %v2933
        %v2944 = vsel %vm2937, %v2940, %v2943
        %v2945 = vsel %vm2934, nan, %v2944
        %v2946 = vand.u32 2147483647, %v442
        %vm2947 = vcmp.le.f32.partialorder %v2946, 0.7853982
        %vm2948 = vcmp.lt.s32.totalorder %v442, 0
        %v2949 = vand.u32 %v442, 2139095040
        %v2950 = vshrl.u32 %v2949, 23
        %v2951 = vsub.s32 %v2950, 127
        %v2952 = vand.u32 2147483647, %v442
        %v2953 = vand.u32 %v2952, 8388607
        %v2954 = vor.u32 %v2953, 8388608
        %v2955 = vsub.s32 0, %v2954
        %v2956 = vadd.s32 %v2951, 1
        %vm2957 = vcmp.gt.s32.totalorder %v2956, 0
        %v2958 = vsel %vm2957, %v2956, 0
        %v2959 = vshrl.u32 %v2958, 5
        %v2960 = vand.u32 %v2958, 31
        %v2961 = vsub.s32 32, %v2960
        %v2962 = vshrl.u32 683565275, %v2961
        %v2963 = vshll.u32 683565275, %v2960
        %v2964 = vshrl.u32 2475754826, %v2961
        %v2965 = vor.u32 %v2963, %v2964
        %v2966 = vshll.u32 2475754826, %v2960
        %v2967 = vshrl.u32 2131351028, %v2961
        %v2968 = vor.u32 %v2966, %v2967
        %v2969 = vshll.u32 2131351028, %v2960
        %v2970 = vshrl.u32 2102212464, %v2961
        %v2971 = vor.u32 %v2969, %v2970
        %v2972 = vshll.u32 2102212464, %v2960
        %v2973 = vshrl.u32 920167782, %v2961
        %v2974 = vor.u32 %v2972, %v2973
        %v2975 = vshll.u32 920167782, %v2960
        %v2976 = vshrl.u32 1326507024, %v2961
        %v2977 = vor.u32 %v2975, %v2976
        %vm2978 = vcmp.lt.s32.totalorder %v2959, 1
        %vm2979 = vcmp.lt.s32.totalorder %v2959, 2
        %vm2980 = vcmp.lt.s32.totalorder %v2959, 3
        %vm2981 = vcmp.lt.s32.totalorder %v2959, 4
        %v2982 = vsel %vm2978, %v2962, %v2965
        %v2983 = vsel %vm2981, %v2971, 2102212464
        %v2984 = vsel %vm2980, %v2968, %v2983
        %v2985 = vsel %vm2979, %v2982, %v2984
        %v2986 = vsel %vm2978, %v2965, %v2968
        %v2987 = vsel %vm2981, %v2974, 920167782
        %v2988 = vsel %vm2980, %v2971, %v2987
        %v2989 = vsel %vm2979, %v2986, %v2988
        %v2990 = vsel %vm2978, %v2968, %v2971
        %v2991 = vsel %vm2981, %v2977, 1326507024
        %v2992 = vsel %vm2980, %v2974, %v2991
        %v2993 = vsel %vm2979, %v2990, %v2992
        %v2994 = vshll.u32 %v2954, 8
        %v2995 = vmul.u32.u64.compose %v2994, %v2993
        %v2996 = vextract.low.u32 %v2995
        %v2997 = vextract.high.u32 %v2995
        %v2998 = vmul.u32.u64.compose %v2994, %v2989
        %v2999 = vextract.low.u32 %v2998
        %v3000 = vextract.high.u32 %v2998
        %v3001 = vmul.u32 %v2994, %v2985
        %v3002 = vadd.s32 %v2997, %v2999
        %vm3003 = vc.u32 %v2997, %v2999
        %v3004 = vadd.s32 %v3000, 1
        %v3005 = vsel %vm3003, %v3004, %v3000
        %v3006 = vadd.s32 %v3001, %v3005
        %v3007 = vadd.s32 %v3006, 536870912
        %v3008 = vshrl.u32 %v3007, 30
        %v3009 = vshll.u32 %v3008, 30
        %v3010 = vsub.s32 %v3006, %v3009
        %vm3011 = vcmp.lt.s32.totalorder %v3010, 0
        %v3012 = vsub.s32 0, %v3010
        %v3013 = vsel %vm3011, %v3012, %v3010
        %v3014 = vclz %v3013
        %v3015 = vsub.s32 %v3014, 2
        %vm3016 = vcmp.gt.s32.totalorder 0, %v3015
        %v3017 = vsel %vm3016, 0, %v3015
        %v3018 = vsub.s32 32, %v3017
        %v3019 = vshll.u32 %v3010, %v3017
        %v3020 = vshrl.u32 %v3002, %v3018
        %v3021 = vor.u32 %v3019, %v3020
        %v3022 = vsub.s32 4294967266, %v3017
        %v3023 = vadd.s32 %v3022, 127
        %v3024 = vshll.u32 %v3023, 23
        %v3025 = vor.u32 4788187, %v3024
        %v3026 = vand.u32 2147483647, %v3025
        %v3028 = vcvt.s32.f32 %v3021
        %v3029 = vmul.f32 %v3028, %v3026
        %v3030 = vxor.u32 %v3029, 2147483648
        %v3031 = vsel %vm2948, %v3030, %v3029
        %v3032 = vsub.s32 4, %v3008
        %v3033 = vsel %vm2948, %v3032, %v3008
        %v3034 = vsel %vm2947, %v442, %v3031
        %v3035 = vsel %vm2947, 0, %v3033
        %v3036 = vcosq.f32.pop %v3034
        %v3037 = vsinq.f32.pop %v3034
        %vm3038 = vweird.f32 %v442
        %v3039 = vadd.s32 %v3035, 3
        %v3040 = vand.u32 %v3039, 3
        %vm3041 = vcmp.lt.s32.totalorder %v3040, 2
        %vm3042 = vcmp.eq.s32.totalorder %v3040, 0
        %v3043 = vxor.u32 %v3037, 2147483648
        %v3044 = vsel %vm3042, %v3036, %v3043
        %vm3045 = vcmp.eq.s32.totalorder %v3040, 2
        %v3046 = vxor.u32 %v3036, 2147483648
        %v3047 = vsel %vm3045, %v3046, %v3037
        %v3048 = vsel %vm3041, %v3044, %v3047
        %v3049 = vsel %vm3038, nan, %v3048
        %v3050 = vand.u32 2147483647, %v443
        %vm3051 = vcmp.le.f32.partialorder %v3050, 0.7853982
        %vm3052 = vcmp.lt.s32.totalorder %v443, 0
        %v3053 = vand.u32 %v443, 2139095040
        %v3054 = vshrl.u32 %v3053, 23
        %v3055 = vsub.s32 %v3054, 127
        %v3056 = vand.u32 2147483647, %v443
        %v3057 = vand.u32 %v3056, 8388607
        %v3058 = vor.u32 %v3057, 8388608
        %v3059 = vsub.s32 0, %v3058
        %v3060 = vadd.s32 %v3055, 1
        %vm3061 = vcmp.gt.s32.totalorder %v3060, 0
        %v3062 = vsel %vm3061, %v3060, 0
        %v3063 = vshrl.u32 %v3062, 5
        %v3064 = vand.u32 %v3062, 31
        %v3065 = vsub.s32 32, %v3064
        %v3066 = vshrl.u32 683565275, %v3065
        %v3067 = vshll.u32 683565275, %v3064
        %v3068 = vshrl.u32 2475754826, %v3065
        %v3069 = vor.u32 %v3067, %v3068
        %v3070 = vshll.u32 2475754826, %v3064
        %v3071 = vshrl.u32 2131351028, %v3065
        %v3072 = vor.u32 %v3070, %v3071
        %v3073 = vshll.u32 2131351028, %v3064
        %v3074 = vshrl.u32 2102212464, %v3065
        %v3075 = vor.u32 %v3073, %v3074
        %v3076 = vshll.u32 2102212464, %v3064
        %v3077 = vshrl.u32 920167782, %v3065
        %v3078 = vor.u32 %v3076, %v3077
        %v3079 = vshll.u32 920167782, %v3064
        %v3080 = vshrl.u32 1326507024, %v3065
        %v3081 = vor.u32 %v3079, %v3080
        %vm3082 = vcmp.lt.s32.totalorder %v3063, 1
        %vm3083 = vcmp.lt.s32.totalorder %v3063, 2
        %vm3084 = vcmp.lt.s32.totalorder %v3063, 3
        %vm3085 = vcmp.lt.s32.totalorder %v3063, 4
        %v3086 = vsel %vm3082, %v3066, %v3069
        %v3087 = vsel %vm3085, %v3075, 2102212464
        %v3088 = vsel %vm3084, %v3072, %v3087
        %v3089 = vsel %vm3083, %v3086, %v3088
        %v3090 = vsel %vm3082, %v3069, %v3072
        %v3091 = vsel %vm3085, %v3078, 920167782
        %v3092 = vsel %vm3084, %v3075, %v3091
        %v3093 = vsel %vm3083, %v3090, %v3092
        %v3094 = vsel %vm3082, %v3072, %v3075
        %v3095 = vsel %vm3085, %v3081, 1326507024
        %v3096 = vsel %vm3084, %v3078, %v3095
        %v3097 = vsel %vm3083, %v3094, %v3096
        %v3098 = vshll.u32 %v3058, 8
        %v3099 = vmul.u32.u64.compose %v3098, %v3097
        %v3100 = vextract.low.u32 %v3099
        %v3101 = vextract.high.u32 %v3099
        %v3102 = vmul.u32.u64.compose %v3098, %v3093
        %v3103 = vextract.low.u32 %v3102
        %v3104 = vextract.high.u32 %v3102
        %v3105 = vmul.u32 %v3098, %v3089
        %v3106 = vadd.s32 %v3101, %v3103
        %vm3107 = vc.u32 %v3101, %v3103
        %v3108 = vadd.s32 %v3104, 1
        %v3109 = vsel %vm3107, %v3108, %v3104
        %v3110 = vadd.s32 %v3105, %v3109
        %v3111 = vadd.s32 %v3110, 536870912
        %v3112 = vshrl.u32 %v3111, 30
        %v3113 = vshll.u32 %v3112, 30
        %v3114 = vsub.s32 %v3110, %v3113
        %vm3115 = vcmp.lt.s32.totalorder %v3114, 0
        %v3116 = vsub.s32 0, %v3114
        %v3117 = vsel %vm3115, %v3116, %v3114
        %v3118 = vclz %v3117
        %v3119 = vsub.s32 %v3118, 2
        %vm3120 = vcmp.gt.s32.totalorder 0, %v3119
        %v3121 = vsel %vm3120, 0, %v3119
        %v3122 = vsub.s32 32, %v3121
        %v3123 = vshll.u32 %v3114, %v3121
        %v3124 = vshrl.u32 %v3106, %v3122
        %v3125 = vor.u32 %v3123, %v3124
        %v3126 = vsub.s32 4294967266, %v3121
        %v3127 = vadd.s32 %v3126, 127
        %v3128 = vshll.u32 %v3127, 23
        %v3129 = vor.u32 4788187, %v3128
        %v3130 = vand.u32 2147483647, %v3129
        %v3132 = vcvt.s32.f32 %v3125
        %v3133 = vmul.f32 %v3132, %v3130
        %v3134 = vxor.u32 %v3133, 2147483648
        %v3135 = vsel %vm3052, %v3134, %v3133
        %v3136 = vsub.s32 4, %v3112
        %v3137 = vsel %vm3052, %v3136, %v3112
        %v3138 = vsel %vm3051, %v443, %v3135
        %v3139 = vsel %vm3051, 0, %v3137
        %v3140 = vcosq.f32.pop %v3138
        %v3141 = vsinq.f32.pop %v3138
        %vm3142 = vweird.f32 %v443
        %v3143 = vadd.s32 %v3139, 3
        %v3144 = vand.u32 %v3143, 3
        %vm3145 = vcmp.lt.s32.totalorder %v3144, 2
        %vm3146 = vcmp.eq.s32.totalorder %v3144, 0
        %v3147 = vxor.u32 %v3141, 2147483648
        %v3148 = vsel %vm3146, %v3140, %v3147
        %vm3149 = vcmp.eq.s32.totalorder %v3144, 2
        %v3150 = vxor.u32 %v3140, 2147483648
        %v3151 = vsel %vm3149, %v3150, %v3141
        %v3152 = vsel %vm3145, %v3148, %v3151
        %v3153 = vsel %vm3142, nan, %v3152
        %v3154 = vand.u32 2147483647, %v444
        %vm3155 = vcmp.le.f32.partialorder %v3154, 0.7853982
        %vm3156 = vcmp.lt.s32.totalorder %v444, 0
        %v3157 = vand.u32 %v444, 2139095040
        %v3158 = vshrl.u32 %v3157, 23
        %v3159 = vsub.s32 %v3158, 127
        %v3160 = vand.u32 2147483647, %v444
        %v3161 = vand.u32 %v3160, 8388607
        %v3162 = vor.u32 %v3161, 8388608
        %v3163 = vsub.s32 0, %v3162
        %v3164 = vadd.s32 %v3159, 1
        %vm3165 = vcmp.gt.s32.totalorder %v3164, 0
        %v3166 = vsel %vm3165, %v3164, 0
        %v3167 = vshrl.u32 %v3166, 5
        %v3168 = vand.u32 %v3166, 31
        %v3169 = vsub.s32 32, %v3168
        %v3170 = vshrl.u32 683565275, %v3169
        %v3171 = vshll.u32 683565275, %v3168
        %v3172 = vshrl.u32 2475754826, %v3169
        %v3173 = vor.u32 %v3171, %v3172
        %v3174 = vshll.u32 2475754826, %v3168
        %v3175 = vshrl.u32 2131351028, %v3169
        %v3176 = vor.u32 %v3174, %v3175
        %v3177 = vshll.u32 2131351028, %v3168
        %v3178 = vshrl.u32 2102212464, %v3169
        %v3179 = vor.u32 %v3177, %v3178
        %v3180 = vshll.u32 2102212464, %v3168
        %v3181 = vshrl.u32 920167782, %v3169
        %v3182 = vor.u32 %v3180, %v3181
        %v3183 = vshll.u32 920167782, %v3168
        %v3184 = vshrl.u32 1326507024, %v3169
        %v3185 = vor.u32 %v3183, %v3184
        %vm3186 = vcmp.lt.s32.totalorder %v3167, 1
        %vm3187 = vcmp.lt.s32.totalorder %v3167, 2
        %vm3188 = vcmp.lt.s32.totalorder %v3167, 3
        %vm3189 = vcmp.lt.s32.totalorder %v3167, 4
        %v3190 = vsel %vm3186, %v3170, %v3173
        %v3191 = vsel %vm3189, %v3179, 2102212464
        %v3192 = vsel %vm3188, %v3176, %v3191
        %v3193 = vsel %vm3187, %v3190, %v3192
        %v3194 = vsel %vm3186, %v3173, %v3176
        %v3195 = vsel %vm3189, %v3182, 920167782
        %v3196 = vsel %vm3188, %v3179, %v3195
        %v3197 = vsel %vm3187, %v3194, %v3196
        %v3198 = vsel %vm3186, %v3176, %v3179
        %v3199 = vsel %vm3189, %v3185, 1326507024
        %v3200 = vsel %vm3188, %v3182, %v3199
        %v3201 = vsel %vm3187, %v3198, %v3200
        %v3202 = vshll.u32 %v3162, 8
        %v3203 = vmul.u32.u64.compose %v3202, %v3201
        %v3204 = vextract.low.u32 %v3203
        %v3205 = vextract.high.u32 %v3203
        %v3206 = vmul.u32.u64.compose %v3202, %v3197
        %v3207 = vextract.low.u32 %v3206
        %v3208 = vextract.high.u32 %v3206
        %v3209 = vmul.u32 %v3202, %v3193
        %v3210 = vadd.s32 %v3205, %v3207
        %vm3211 = vc.u32 %v3205, %v3207
        %v3212 = vadd.s32 %v3208, 1
        %v3213 = vsel %vm3211, %v3212, %v3208
        %v3214 = vadd.s32 %v3209, %v3213
        %v3215 = vadd.s32 %v3214, 536870912
        %v3216 = vshrl.u32 %v3215, 30
        %v3217 = vshll.u32 %v3216, 30
        %v3218 = vsub.s32 %v3214, %v3217
        %vm3219 = vcmp.lt.s32.totalorder %v3218, 0
        %v3220 = vsub.s32 0, %v3218
        %v3221 = vsel %vm3219, %v3220, %v3218
        %v3222 = vclz %v3221
        %v3223 = vsub.s32 %v3222, 2
        %vm3224 = vcmp.gt.s32.totalorder 0, %v3223
        %v3225 = vsel %vm3224, 0, %v3223
        %v3226 = vsub.s32 32, %v3225
        %v3227 = vshll.u32 %v3218, %v3225
        %v3228 = vshrl.u32 %v3210, %v3226
        %v3229 = vor.u32 %v3227, %v3228
        %v3230 = vsub.s32 4294967266, %v3225
        %v3231 = vadd.s32 %v3230, 127
        %v3232 = vshll.u32 %v3231, 23
        %v3233 = vor.u32 4788187, %v3232
        %v3234 = vand.u32 2147483647, %v3233
        %v3236 = vcvt.s32.f32 %v3229
        %v3237 = vmul.f32 %v3236, %v3234
        %v3238 = vxor.u32 %v3237, 2147483648
        %v3239 = vsel %vm3156, %v3238, %v3237
        %v3240 = vsub.s32 4, %v3216
        %v3241 = vsel %vm3156, %v3240, %v3216
        %v3242 = vsel %vm3155, %v444, %v3239
        %v3243 = vsel %vm3155, 0, %v3241
        %v3244 = vcosq.f32.pop %v3242
        %v3245 = vsinq.f32.pop %v3242
        %vm3246 = vweird.f32 %v444
        %v3247 = vadd.s32 %v3243, 3
        %v3248 = vand.u32 %v3247, 3
        %vm3249 = vcmp.lt.s32.totalorder %v3248, 2
        %vm3250 = vcmp.eq.s32.totalorder %v3248, 0
        %v3251 = vxor.u32 %v3245, 2147483648
        %v3252 = vsel %vm3250, %v3244, %v3251
        %vm3253 = vcmp.eq.s32.totalorder %v3248, 2
        %v3254 = vxor.u32 %v3244, 2147483648
        %v3255 = vsel %vm3253, %v3254, %v3245
        %v3256 = vsel %vm3249, %v3252, %v3255
        %v3257 = vsel %vm3246, nan, %v3256
        %v3258 = vand.u32 2147483647, %v445
        %vm3259 = vcmp.le.f32.partialorder %v3258, 0.7853982
        %vm3260 = vcmp.lt.s32.totalorder %v445, 0
        %v3261 = vand.u32 %v445, 2139095040
        %v3262 = vshrl.u32 %v3261, 23
        %v3263 = vsub.s32 %v3262, 127
        %v3264 = vand.u32 2147483647, %v445
        %v3265 = vand.u32 %v3264, 8388607
        %v3266 = vor.u32 %v3265, 8388608
        %v3267 = vsub.s32 0, %v3266
        %v3268 = vadd.s32 %v3263, 1
        %vm3269 = vcmp.gt.s32.totalorder %v3268, 0
        %v3270 = vsel %vm3269, %v3268, 0
        %v3271 = vshrl.u32 %v3270, 5
        %v3272 = vand.u32 %v3270, 31
        %v3273 = vsub.s32 32, %v3272
        %v3274 = vshrl.u32 683565275, %v3273
        %v3275 = vshll.u32 683565275, %v3272
        %v3276 = vshrl.u32 2475754826, %v3273
        %v3277 = vor.u32 %v3275, %v3276
        %v3278 = vshll.u32 2475754826, %v3272
        %v3279 = vshrl.u32 2131351028, %v3273
        %v3280 = vor.u32 %v3278, %v3279
        %v3281 = vshll.u32 2131351028, %v3272
        %v3282 = vshrl.u32 2102212464, %v3273
        %v3283 = vor.u32 %v3281, %v3282
        %v3284 = vshll.u32 2102212464, %v3272
        %v3285 = vshrl.u32 920167782, %v3273
        %v3286 = vor.u32 %v3284, %v3285
        %v3287 = vshll.u32 920167782, %v3272
        %v3288 = vshrl.u32 1326507024, %v3273
        %v3289 = vor.u32 %v3287, %v3288
        %vm3290 = vcmp.lt.s32.totalorder %v3271, 1
        %vm3291 = vcmp.lt.s32.totalorder %v3271, 2
        %vm3292 = vcmp.lt.s32.totalorder %v3271, 3
        %vm3293 = vcmp.lt.s32.totalorder %v3271, 4
        %v3294 = vsel %vm3290, %v3274, %v3277
        %v3295 = vsel %vm3293, %v3283, 2102212464
        %v3296 = vsel %vm3292, %v3280, %v3295
        %v3297 = vsel %vm3291, %v3294, %v3296
        %v3298 = vsel %vm3290, %v3277, %v3280
        %v3299 = vsel %vm3293, %v3286, 920167782
        %v3300 = vsel %vm3292, %v3283, %v3299
        %v3301 = vsel %vm3291, %v3298, %v3300
        %v3302 = vsel %vm3290, %v3280, %v3283
        %v3303 = vsel %vm3293, %v3289, 1326507024
        %v3304 = vsel %vm3292, %v3286, %v3303
        %v3305 = vsel %vm3291, %v3302, %v3304
        %v3306 = vshll.u32 %v3266, 8
        %v3307 = vmul.u32.u64.compose %v3306, %v3305
        %v3308 = vextract.low.u32 %v3307
        %v3309 = vextract.high.u32 %v3307
        %v3310 = vmul.u32.u64.compose %v3306, %v3301
        %v3311 = vextract.low.u32 %v3310
        %v3312 = vextract.high.u32 %v3310
        %v3313 = vmul.u32 %v3306, %v3297
        %v3314 = vadd.s32 %v3309, %v3311
        %vm3315 = vc.u32 %v3309, %v3311
        %v3316 = vadd.s32 %v3312, 1
        %v3317 = vsel %vm3315, %v3316, %v3312
        %v3318 = vadd.s32 %v3313, %v3317
        %v3319 = vadd.s32 %v3318, 536870912
        %v3320 = vshrl.u32 %v3319, 30
        %v3321 = vshll.u32 %v3320, 30
        %v3322 = vsub.s32 %v3318, %v3321
        %vm3323 = vcmp.lt.s32.totalorder %v3322, 0
        %v3324 = vsub.s32 0, %v3322
        %v3325 = vsel %vm3323, %v3324, %v3322
        %v3326 = vclz %v3325
        %v3327 = vsub.s32 %v3326, 2
        %vm3328 = vcmp.gt.s32.totalorder 0, %v3327
        %v3329 = vsel %vm3328, 0, %v3327
        %v3330 = vsub.s32 32, %v3329
        %v3331 = vshll.u32 %v3322, %v3329
        %v3332 = vshrl.u32 %v3314, %v3330
        %v3333 = vor.u32 %v3331, %v3332
        %v3334 = vsub.s32 4294967266, %v3329
        %v3335 = vadd.s32 %v3334, 127
        %v3336 = vshll.u32 %v3335, 23
        %v3337 = vor.u32 4788187, %v3336
        %v3338 = vand.u32 2147483647, %v3337
        %v3340 = vcvt.s32.f32 %v3333
        %v3341 = vmul.f32 %v3340, %v3338
        %v3342 = vxor.u32 %v3341, 2147483648
        %v3343 = vsel %vm3260, %v3342, %v3341
        %v3344 = vsub.s32 4, %v3320
        %v3345 = vsel %vm3260, %v3344, %v3320
        %v3346 = vsel %vm3259, %v445, %v3343
        %v3347 = vsel %vm3259, 0, %v3345
        %v3348 = vcosq.f32.pop %v3346
        %v3349 = vsinq.f32.pop %v3346
        %vm3350 = vweird.f32 %v445
        %v3351 = vadd.s32 %v3347, 3
        %v3352 = vand.u32 %v3351, 3
        %vm3353 = vcmp.lt.s32.totalorder %v3352, 2
        %vm3354 = vcmp.eq.s32.totalorder %v3352, 0
        %v3355 = vxor.u32 %v3349, 2147483648
        %v3356 = vsel %vm3354, %v3348, %v3355
        %vm3357 = vcmp.eq.s32.totalorder %v3352, 2
        %v3358 = vxor.u32 %v3348, 2147483648
        %v3359 = vsel %vm3357, %v3358, %v3349
        %v3360 = vsel %vm3353, %v3356, %v3359
        %v3361 = vsel %vm3350, nan, %v3360
        %v3362 = vand.u32 2147483647, %v446
        %vm3363 = vcmp.le.f32.partialorder %v3362, 0.7853982
        %vm3364 = vcmp.lt.s32.totalorder %v446, 0
        %v3365 = vand.u32 %v446, 2139095040
        %v3366 = vshrl.u32 %v3365, 23
        %v3367 = vsub.s32 %v3366, 127
        %v3368 = vand.u32 2147483647, %v446
        %v3369 = vand.u32 %v3368, 8388607
        %v3370 = vor.u32 %v3369, 8388608
        %v3371 = vsub.s32 0, %v3370
        %v3372 = vadd.s32 %v3367, 1
        %vm3373 = vcmp.gt.s32.totalorder %v3372, 0
        %v3374 = vsel %vm3373, %v3372, 0
        %v3375 = vshrl.u32 %v3374, 5
        %v3376 = vand.u32 %v3374, 31
        %v3377 = vsub.s32 32, %v3376
        %v3378 = vshrl.u32 683565275, %v3377
        %v3379 = vshll.u32 683565275, %v3376
        %v3380 = vshrl.u32 2475754826, %v3377
        %v3381 = vor.u32 %v3379, %v3380
        %v3382 = vshll.u32 2475754826, %v3376
        %v3383 = vshrl.u32 2131351028, %v3377
        %v3384 = vor.u32 %v3382, %v3383
        %v3385 = vshll.u32 2131351028, %v3376
        %v3386 = vshrl.u32 2102212464, %v3377
        %v3387 = vor.u32 %v3385, %v3386
        %v3388 = vshll.u32 2102212464, %v3376
        %v3389 = vshrl.u32 920167782, %v3377
        %v3390 = vor.u32 %v3388, %v3389
        %v3391 = vshll.u32 920167782, %v3376
        %v3392 = vshrl.u32 1326507024, %v3377
        %v3393 = vor.u32 %v3391, %v3392
        %vm3394 = vcmp.lt.s32.totalorder %v3375, 1
        %vm3395 = vcmp.lt.s32.totalorder %v3375, 2
        %vm3396 = vcmp.lt.s32.totalorder %v3375, 3
        %vm3397 = vcmp.lt.s32.totalorder %v3375, 4
        %v3398 = vsel %vm3394, %v3378, %v3381
        %v3399 = vsel %vm3397, %v3387, 2102212464
        %v3400 = vsel %vm3396, %v3384, %v3399
        %v3401 = vsel %vm3395, %v3398, %v3400
        %v3402 = vsel %vm3394, %v3381, %v3384
        %v3403 = vsel %vm3397, %v3390, 920167782
        %v3404 = vsel %vm3396, %v3387, %v3403
        %v3405 = vsel %vm3395, %v3402, %v3404
        %v3406 = vsel %vm3394, %v3384, %v3387
        %v3407 = vsel %vm3397, %v3393, 1326507024
        %v3408 = vsel %vm3396, %v3390, %v3407
        %v3409 = vsel %vm3395, %v3406, %v3408
        %v3410 = vshll.u32 %v3370, 8
        %v3411 = vmul.u32.u64.compose %v3410, %v3409
        %v3412 = vextract.low.u32 %v3411
        %v3413 = vextract.high.u32 %v3411
        %v3414 = vmul.u32.u64.compose %v3410, %v3405
        %v3415 = vextract.low.u32 %v3414
        %v3416 = vextract.high.u32 %v3414
        %v3417 = vmul.u32 %v3410, %v3401
        %v3418 = vadd.s32 %v3413, %v3415
        %vm3419 = vc.u32 %v3413, %v3415
        %v3420 = vadd.s32 %v3416, 1
        %v3421 = vsel %vm3419, %v3420, %v3416
        %v3422 = vadd.s32 %v3417, %v3421
        %v3423 = vadd.s32 %v3422, 536870912
        %v3424 = vshrl.u32 %v3423, 30
        %v3425 = vshll.u32 %v3424, 30
        %v3426 = vsub.s32 %v3422, %v3425
        %vm3427 = vcmp.lt.s32.totalorder %v3426, 0
        %v3428 = vsub.s32 0, %v3426
        %v3429 = vsel %vm3427, %v3428, %v3426
        %v3430 = vclz %v3429
        %v3431 = vsub.s32 %v3430, 2
        %vm3432 = vcmp.gt.s32.totalorder 0, %v3431
        %v3433 = vsel %vm3432, 0, %v3431
        %v3434 = vsub.s32 32, %v3433
        %v3435 = vshll.u32 %v3426, %v3433
        %v3436 = vshrl.u32 %v3418, %v3434
        %v3437 = vor.u32 %v3435, %v3436
        %v3438 = vsub.s32 4294967266, %v3433
        %v3439 = vadd.s32 %v3438, 127
        %v3440 = vshll.u32 %v3439, 23
        %v3441 = vor.u32 4788187, %v3440
        %v3442 = vand.u32 2147483647, %v3441
        %v3444 = vcvt.s32.f32 %v3437
        %v3445 = vmul.f32 %v3444, %v3442
        %v3446 = vxor.u32 %v3445, 2147483648
        %v3447 = vsel %vm3364, %v3446, %v3445
        %v3448 = vsub.s32 4, %v3424
        %v3449 = vsel %vm3364, %v3448, %v3424
        %v3450 = vsel %vm3363, %v446, %v3447
        %v3451 = vsel %vm3363, 0, %v3449
        %v3452 = vcosq.f32.pop %v3450
        %v3453 = vsinq.f32.pop %v3450
        %vm3454 = vweird.f32 %v446
        %v3455 = vadd.s32 %v3451, 3
        %v3456 = vand.u32 %v3455, 3
        %vm3457 = vcmp.lt.s32.totalorder %v3456, 2
        %vm3458 = vcmp.eq.s32.totalorder %v3456, 0
        %v3459 = vxor.u32 %v3453, 2147483648
        %v3460 = vsel %vm3458, %v3452, %v3459
        %vm3461 = vcmp.eq.s32.totalorder %v3456, 2
        %v3462 = vxor.u32 %v3452, 2147483648
        %v3463 = vsel %vm3461, %v3462, %v3453
        %v3464 = vsel %vm3457, %v3460, %v3463
        %v3465 = vsel %vm3454, nan, %v3464
        %v3466 = vand.u32 2147483647, %v447
        %vm3467 = vcmp.le.f32.partialorder %v3466, 0.7853982
        %vm3468 = vcmp.lt.s32.totalorder %v447, 0
        %v3469 = vand.u32 %v447, 2139095040
        %v3470 = vshrl.u32 %v3469, 23
        %v3471 = vsub.s32 %v3470, 127
        %v3472 = vand.u32 2147483647, %v447
        %v3473 = vand.u32 %v3472, 8388607
        %v3474 = vor.u32 %v3473, 8388608
        %v3475 = vsub.s32 0, %v3474
        %v3476 = vadd.s32 %v3471, 1
        %vm3477 = vcmp.gt.s32.totalorder %v3476, 0
        %v3478 = vsel %vm3477, %v3476, 0
        %v3479 = vshrl.u32 %v3478, 5
        %v3480 = vand.u32 %v3478, 31
        %v3481 = vsub.s32 32, %v3480
        %v3482 = vshrl.u32 683565275, %v3481
        %v3483 = vshll.u32 683565275, %v3480
        %v3484 = vshrl.u32 2475754826, %v3481
        %v3485 = vor.u32 %v3483, %v3484
        %v3486 = vshll.u32 2475754826, %v3480
        %v3487 = vshrl.u32 2131351028, %v3481
        %v3488 = vor.u32 %v3486, %v3487
        %v3489 = vshll.u32 2131351028, %v3480
        %v3490 = vshrl.u32 2102212464, %v3481
        %v3491 = vor.u32 %v3489, %v3490
        %v3492 = vshll.u32 2102212464, %v3480
        %v3493 = vshrl.u32 920167782, %v3481
        %v3494 = vor.u32 %v3492, %v3493
        %v3495 = vshll.u32 920167782, %v3480
        %v3496 = vshrl.u32 1326507024, %v3481
        %v3497 = vor.u32 %v3495, %v3496
        %vm3498 = vcmp.lt.s32.totalorder %v3479, 1
        %vm3499 = vcmp.lt.s32.totalorder %v3479, 2
        %vm3500 = vcmp.lt.s32.totalorder %v3479, 3
        %vm3501 = vcmp.lt.s32.totalorder %v3479, 4
        %v3502 = vsel %vm3498, %v3482, %v3485
        %v3503 = vsel %vm3501, %v3491, 2102212464
        %v3504 = vsel %vm3500, %v3488, %v3503
        %v3505 = vsel %vm3499, %v3502, %v3504
        %v3506 = vsel %vm3498, %v3485, %v3488
        %v3507 = vsel %vm3501, %v3494, 920167782
        %v3508 = vsel %vm3500, %v3491, %v3507
        %v3509 = vsel %vm3499, %v3506, %v3508
        %v3510 = vsel %vm3498, %v3488, %v3491
        %v3511 = vsel %vm3501, %v3497, 1326507024
        %v3512 = vsel %vm3500, %v3494, %v3511
        %v3513 = vsel %vm3499, %v3510, %v3512
        %v3514 = vshll.u32 %v3474, 8
        %v3515 = vmul.u32.u64.compose %v3514, %v3513
        %v3516 = vextract.low.u32 %v3515
        %v3517 = vextract.high.u32 %v3515
        %v3518 = vmul.u32.u64.compose %v3514, %v3509
        %v3519 = vextract.low.u32 %v3518
        %v3520 = vextract.high.u32 %v3518
        %v3521 = vmul.u32 %v3514, %v3505
        %v3522 = vadd.s32 %v3517, %v3519
        %vm3523 = vc.u32 %v3517, %v3519
        %v3524 = vadd.s32 %v3520, 1
        %v3525 = vsel %vm3523, %v3524, %v3520
        %v3526 = vadd.s32 %v3521, %v3525
        %v3527 = vadd.s32 %v3526, 536870912
        %v3528 = vshrl.u32 %v3527, 30
        %v3529 = vshll.u32 %v3528, 30
        %v3530 = vsub.s32 %v3526, %v3529
        %vm3531 = vcmp.lt.s32.totalorder %v3530, 0
        %v3532 = vsub.s32 0, %v3530
        %v3533 = vsel %vm3531, %v3532, %v3530
        %v3534 = vclz %v3533
        %v3535 = vsub.s32 %v3534, 2
        %vm3536 = vcmp.gt.s32.totalorder 0, %v3535
        %v3537 = vsel %vm3536, 0, %v3535
        %v3538 = vsub.s32 32, %v3537
        %v3539 = vshll.u32 %v3530, %v3537
        %v3540 = vshrl.u32 %v3522, %v3538
        %v3541 = vor.u32 %v3539, %v3540
        %v3542 = vsub.s32 4294967266, %v3537
        %v3543 = vadd.s32 %v3542, 127
        %v3544 = vshll.u32 %v3543, 23
        %v3545 = vor.u32 4788187, %v3544
        %v3546 = vand.u32 2147483647, %v3545
        %v3548 = vcvt.s32.f32 %v3541
        %v3549 = vmul.f32 %v3548, %v3546
        %v3550 = vxor.u32 %v3549, 2147483648
        %v3551 = vsel %vm3468, %v3550, %v3549
        %v3552 = vsub.s32 4, %v3528
        %v3553 = vsel %vm3468, %v3552, %v3528
        %v3554 = vsel %vm3467, %v447, %v3551
        %v3555 = vsel %vm3467, 0, %v3553
        %v3556 = vcosq.f32.pop %v3554
        %v3557 = vsinq.f32.pop %v3554
        %vm3558 = vweird.f32 %v447
        %v3559 = vadd.s32 %v3555, 3
        %v3560 = vand.u32 %v3559, 3
        %vm3561 = vcmp.lt.s32.totalorder %v3560, 2
        %vm3562 = vcmp.eq.s32.totalorder %v3560, 0
        %v3563 = vxor.u32 %v3557, 2147483648
        %v3564 = vsel %vm3562, %v3556, %v3563
        %vm3565 = vcmp.eq.s32.totalorder %v3560, 2
        %v3566 = vxor.u32 %v3556, 2147483648
        %v3567 = vsel %vm3565, %v3566, %v3557
        %v3568 = vsel %vm3561, %v3564, %v3567
        %v3569 = vsel %vm3558, nan, %v3568
        %v3570 = vand.u32 2147483647, %v448
        %vm3571 = vcmp.le.f32.partialorder %v3570, 0.7853982
        %vm3572 = vcmp.lt.s32.totalorder %v448, 0
        %v3573 = vand.u32 %v448, 2139095040
        %v3574 = vshrl.u32 %v3573, 23
        %v3575 = vsub.s32 %v3574, 127
        %v3576 = vand.u32 2147483647, %v448
        %v3577 = vand.u32 %v3576, 8388607
        %v3578 = vor.u32 %v3577, 8388608
        %v3579 = vsub.s32 0, %v3578
        %v3580 = vadd.s32 %v3575, 1
        %vm3581 = vcmp.gt.s32.totalorder %v3580, 0
        %v3582 = vsel %vm3581, %v3580, 0
        %v3583 = vshrl.u32 %v3582, 5
        %v3584 = vand.u32 %v3582, 31
        %v3585 = vsub.s32 32, %v3584
        %v3586 = vshrl.u32 683565275, %v3585
        %v3587 = vshll.u32 683565275, %v3584
        %v3588 = vshrl.u32 2475754826, %v3585
        %v3589 = vor.u32 %v3587, %v3588
        %v3590 = vshll.u32 2475754826, %v3584
        %v3591 = vshrl.u32 2131351028, %v3585
        %v3592 = vor.u32 %v3590, %v3591
        %v3593 = vshll.u32 2131351028, %v3584
        %v3594 = vshrl.u32 2102212464, %v3585
        %v3595 = vor.u32 %v3593, %v3594
        %v3596 = vshll.u32 2102212464, %v3584
        %v3597 = vshrl.u32 920167782, %v3585
        %v3598 = vor.u32 %v3596, %v3597
        %v3599 = vshll.u32 920167782, %v3584
        %v3600 = vshrl.u32 1326507024, %v3585
        %v3601 = vor.u32 %v3599, %v3600
        %vm3602 = vcmp.lt.s32.totalorder %v3583, 1
        %vm3603 = vcmp.lt.s32.totalorder %v3583, 2
        %vm3604 = vcmp.lt.s32.totalorder %v3583, 3
        %vm3605 = vcmp.lt.s32.totalorder %v3583, 4
        %v3606 = vsel %vm3602, %v3586, %v3589
        %v3607 = vsel %vm3605, %v3595, 2102212464
        %v3608 = vsel %vm3604, %v3592, %v3607
        %v3609 = vsel %vm3603, %v3606, %v3608
        %v3610 = vsel %vm3602, %v3589, %v3592
        %v3611 = vsel %vm3605, %v3598, 920167782
        %v3612 = vsel %vm3604, %v3595, %v3611
        %v3613 = vsel %vm3603, %v3610, %v3612
        %v3614 = vsel %vm3602, %v3592, %v3595
        %v3615 = vsel %vm3605, %v3601, 1326507024
        %v3616 = vsel %vm3604, %v3598, %v3615
        %v3617 = vsel %vm3603, %v3614, %v3616
        %v3618 = vshll.u32 %v3578, 8
        %v3619 = vmul.u32.u64.compose %v3618, %v3617
        %v3620 = vextract.low.u32 %v3619
        %v3621 = vextract.high.u32 %v3619
        %v3622 = vmul.u32.u64.compose %v3618, %v3613
        %v3623 = vextract.low.u32 %v3622
        %v3624 = vextract.high.u32 %v3622
        %v3625 = vmul.u32 %v3618, %v3609
        %v3626 = vadd.s32 %v3621, %v3623
        %vm3627 = vc.u32 %v3621, %v3623
        %v3628 = vadd.s32 %v3624, 1
        %v3629 = vsel %vm3627, %v3628, %v3624
        %v3630 = vadd.s32 %v3625, %v3629
        %v3631 = vadd.s32 %v3630, 536870912
        %v3632 = vshrl.u32 %v3631, 30
        %v3633 = vshll.u32 %v3632, 30
        %v3634 = vsub.s32 %v3630, %v3633
        %vm3635 = vcmp.lt.s32.totalorder %v3634, 0
        %v3636 = vsub.s32 0, %v3634
        %v3637 = vsel %vm3635, %v3636, %v3634
        %v3638 = vclz %v3637
        %v3639 = vsub.s32 %v3638, 2
        %vm3640 = vcmp.gt.s32.totalorder 0, %v3639
        %v3641 = vsel %vm3640, 0, %v3639
        %v3642 = vsub.s32 32, %v3641
        %v3643 = vshll.u32 %v3634, %v3641
        %v3644 = vshrl.u32 %v3626, %v3642
        %v3645 = vor.u32 %v3643, %v3644
        %v3646 = vsub.s32 4294967266, %v3641
        %v3647 = vadd.s32 %v3646, 127
        %v3648 = vshll.u32 %v3647, 23
        %v3649 = vor.u32 4788187, %v3648
        %v3650 = vand.u32 2147483647, %v3649
        %v3652 = vcvt.s32.f32 %v3645
        %v3653 = vmul.f32 %v3652, %v3650
        %v3654 = vxor.u32 %v3653, 2147483648
        %v3655 = vsel %vm3572, %v3654, %v3653
        %v3656 = vsub.s32 4, %v3632
        %v3657 = vsel %vm3572, %v3656, %v3632
        %v3658 = vsel %vm3571, %v448, %v3655
        %v3659 = vsel %vm3571, 0, %v3657
        %v3660 = vcosq.f32.pop %v3658
        %v3661 = vsinq.f32.pop %v3658
        %vm3662 = vweird.f32 %v448
        %v3663 = vadd.s32 %v3659, 3
        %v3664 = vand.u32 %v3663, 3
        %vm3665 = vcmp.lt.s32.totalorder %v3664, 2
        %vm3666 = vcmp.eq.s32.totalorder %v3664, 0
        %v3667 = vxor.u32 %v3661, 2147483648
        %v3668 = vsel %vm3666, %v3660, %v3667
        %vm3669 = vcmp.eq.s32.totalorder %v3664, 2
        %v3670 = vxor.u32 %v3660, 2147483648
        %v3671 = vsel %vm3669, %v3670, %v3661
        %v3672 = vsel %vm3665, %v3668, %v3671
        %v3673 = vsel %vm3662, nan, %v3672
        %v3674 = vand.u32 2147483647, %v449
        %vm3675 = vcmp.le.f32.partialorder %v3674, 0.7853982
        %vm3676 = vcmp.lt.s32.totalorder %v449, 0
        %v3677 = vand.u32 %v449, 2139095040
        %v3678 = vshrl.u32 %v3677, 23
        %v3679 = vsub.s32 %v3678, 127
        %v3680 = vand.u32 2147483647, %v449
        %v3681 = vand.u32 %v3680, 8388607
        %v3682 = vor.u32 %v3681, 8388608
        %v3683 = vsub.s32 0, %v3682
        %v3684 = vadd.s32 %v3679, 1
        %vm3685 = vcmp.gt.s32.totalorder %v3684, 0
        %v3686 = vsel %vm3685, %v3684, 0
        %v3687 = vshrl.u32 %v3686, 5
        %v3688 = vand.u32 %v3686, 31
        %v3689 = vsub.s32 32, %v3688
        %v3690 = vshrl.u32 683565275, %v3689
        %v3691 = vshll.u32 683565275, %v3688
        %v3692 = vshrl.u32 2475754826, %v3689
        %v3693 = vor.u32 %v3691, %v3692
        %v3694 = vshll.u32 2475754826, %v3688
        %v3695 = vshrl.u32 2131351028, %v3689
        %v3696 = vor.u32 %v3694, %v3695
        %v3697 = vshll.u32 2131351028, %v3688
        %v3698 = vshrl.u32 2102212464, %v3689
        %v3699 = vor.u32 %v3697, %v3698
        %v3700 = vshll.u32 2102212464, %v3688
        %v3701 = vshrl.u32 920167782, %v3689
        %v3702 = vor.u32 %v3700, %v3701
        %v3703 = vshll.u32 920167782, %v3688
        %v3704 = vshrl.u32 1326507024, %v3689
        %v3705 = vor.u32 %v3703, %v3704
        %vm3706 = vcmp.lt.s32.totalorder %v3687, 1
        %vm3707 = vcmp.lt.s32.totalorder %v3687, 2
        %vm3708 = vcmp.lt.s32.totalorder %v3687, 3
        %vm3709 = vcmp.lt.s32.totalorder %v3687, 4
        %v3710 = vsel %vm3706, %v3690, %v3693
        %v3711 = vsel %vm3709, %v3699, 2102212464
        %v3712 = vsel %vm3708, %v3696, %v3711
        %v3713 = vsel %vm3707, %v3710, %v3712
        %v3714 = vsel %vm3706, %v3693, %v3696
        %v3715 = vsel %vm3709, %v3702, 920167782
        %v3716 = vsel %vm3708, %v3699, %v3715
        %v3717 = vsel %vm3707, %v3714, %v3716
        %v3718 = vsel %vm3706, %v3696, %v3699
        %v3719 = vsel %vm3709, %v3705, 1326507024
        %v3720 = vsel %vm3708, %v3702, %v3719
        %v3721 = vsel %vm3707, %v3718, %v3720
        %v3722 = vshll.u32 %v3682, 8
        %v3723 = vmul.u32.u64.compose %v3722, %v3721
        %v3724 = vextract.low.u32 %v3723
        %v3725 = vextract.high.u32 %v3723
        %v3726 = vmul.u32.u64.compose %v3722, %v3717
        %v3727 = vextract.low.u32 %v3726
        %v3728 = vextract.high.u32 %v3726
        %v3729 = vmul.u32 %v3722, %v3713
        %v3730 = vadd.s32 %v3725, %v3727
        %vm3731 = vc.u32 %v3725, %v3727
        %v3732 = vadd.s32 %v3728, 1
        %v3733 = vsel %vm3731, %v3732, %v3728
        %v3734 = vadd.s32 %v3729, %v3733
        %v3735 = vadd.s32 %v3734, 536870912
        %v3736 = vshrl.u32 %v3735, 30
        %v3737 = vshll.u32 %v3736, 30
        %v3738 = vsub.s32 %v3734, %v3737
        %vm3739 = vcmp.lt.s32.totalorder %v3738, 0
        %v3740 = vsub.s32 0, %v3738
        %v3741 = vsel %vm3739, %v3740, %v3738
        %v3742 = vclz %v3741
        %v3743 = vsub.s32 %v3742, 2
        %vm3744 = vcmp.gt.s32.totalorder 0, %v3743
        %v3745 = vsel %vm3744, 0, %v3743
        %v3746 = vsub.s32 32, %v3745
        %v3747 = vshll.u32 %v3738, %v3745
        %v3748 = vshrl.u32 %v3730, %v3746
        %v3749 = vor.u32 %v3747, %v3748
        %v3750 = vsub.s32 4294967266, %v3745
        %v3751 = vadd.s32 %v3750, 127
        %v3752 = vshll.u32 %v3751, 23
        %v3753 = vor.u32 4788187, %v3752
        %v3754 = vand.u32 2147483647, %v3753
        %v3756 = vcvt.s32.f32 %v3749
        %v3757 = vmul.f32 %v3756, %v3754
        %v3758 = vxor.u32 %v3757, 2147483648
        %v3759 = vsel %vm3676, %v3758, %v3757
        %v3760 = vsub.s32 4, %v3736
        %v3761 = vsel %vm3676, %v3760, %v3736
        %v3762 = vsel %vm3675, %v449, %v3759
        %v3763 = vsel %vm3675, 0, %v3761
        %v3764 = vcosq.f32.pop %v3762
        %v3765 = vsinq.f32.pop %v3762
        %vm3766 = vweird.f32 %v449
        %v3767 = vadd.s32 %v3763, 3
        %v3768 = vand.u32 %v3767, 3
        %vm3769 = vcmp.lt.s32.totalorder %v3768, 2
        %vm3770 = vcmp.eq.s32.totalorder %v3768, 0
        %v3771 = vxor.u32 %v3765, 2147483648
        %v3772 = vsel %vm3770, %v3764, %v3771
        %vm3773 = vcmp.eq.s32.totalorder %v3768, 2
        %v3774 = vxor.u32 %v3764, 2147483648
        %v3775 = vsel %vm3773, %v3774, %v3765
        %v3776 = vsel %vm3769, %v3772, %v3775
        %v3777 = vsel %vm3766, nan, %v3776
        %3779 = vset.pattern.permute.xlu0 0
        %3780 = vperm.xlu0 %3779, %v553
        %v3781 = vpop.permute.xlu0 %3780
        %3784 = vset.pattern.permute.xlu0 0
        %3785 = vperm.xlu0 %3784, %v657
        %v3786 = vpop.permute.xlu0 %3785
        %3789 = vset.pattern.permute.xlu0 0
        %3790 = vperm.xlu0 %3789, %v761
        %v3791 = vpop.permute.xlu0 %3790
        %3794 = vset.pattern.permute.xlu0 0
        %3795 = vperm.xlu0 %3794, %v865
        %v3796 = vpop.permute.xlu0 %3795
        %3799 = vset.pattern.permute.xlu0 0
        %3800 = vperm.xlu0 %3799, %v969
        %v3801 = vpop.permute.xlu0 %3800
        %3804 = vset.pattern.permute.xlu0 0
        %3805 = vperm.xlu0 %3804, %v1073
        %v3806 = vpop.permute.xlu0 %3805
        %3809 = vset.pattern.permute.xlu0 0
        %3810 = vperm.xlu0 %3809, %v1177
        %v3811 = vpop.permute.xlu0 %3810
        %3814 = vset.pattern.permute.xlu0 0
        %3815 = vperm.xlu0 %3814, %v1281
        %v3816 = vpop.permute.xlu0 %3815
        %3819 = vset.pattern.permute.xlu0 0
        %3820 = vperm.xlu0 %3819, %v1385
        %v3821 = vpop.permute.xlu0 %3820
        %3824 = vset.pattern.permute.xlu0 0
        %3825 = vperm.xlu0 %3824, %v1489
        %v3826 = vpop.permute.xlu0 %3825
        %3829 = vset.pattern.permute.xlu0 0
        %3830 = vperm.xlu0 %3829, %v1593
        %v3831 = vpop.permute.xlu0 %3830
        %3834 = vset.pattern.permute.xlu0 0
        %3835 = vperm.xlu0 %3834, %v1697
        %v3836 = vpop.permute.xlu0 %3835
        %3839 = vset.pattern.permute.xlu0 0
        %3840 = vperm.xlu0 %3839, %v1801
        %v3841 = vpop.permute.xlu0 %3840
        %3844 = vset.pattern.permute.xlu0 0
        %3845 = vperm.xlu0 %3844, %v1905
        %v3846 = vpop.permute.xlu0 %3845
        %3849 = vset.pattern.permute.xlu0 0
        %3850 = vperm.xlu0 %3849, %v2009
        %v3851 = vpop.permute.xlu0 %3850
        %3854 = vset.pattern.permute.xlu0 0
        %3855 = vperm.xlu0 %3854, %v2113
        %v3856 = vpop.permute.xlu0 %3855
        %3859 = vset.pattern.permute.xlu0 0
        %3860 = vperm.xlu0 %3859, %v2217
        %v3861 = vpop.permute.xlu0 %3860
        %3864 = vset.pattern.permute.xlu0 0
        %3865 = vperm.xlu0 %3864, %v2321
        %v3866 = vpop.permute.xlu0 %3865
        %3869 = vset.pattern.permute.xlu0 0
        %3870 = vperm.xlu0 %3869, %v2425
        %v3871 = vpop.permute.xlu0 %3870
        %3874 = vset.pattern.permute.xlu0 0
        %3875 = vperm.xlu0 %3874, %v2529
        %v3876 = vpop.permute.xlu0 %3875
        %3879 = vset.pattern.permute.xlu0 0
        %3880 = vperm.xlu0 %3879, %v2633
        %v3881 = vpop.permute.xlu0 %3880
        %3884 = vset.pattern.permute.xlu0 0
        %3885 = vperm.xlu0 %3884, %v2737
        %v3886 = vpop.permute.xlu0 %3885
        %3889 = vset.pattern.permute.xlu0 0
        %3890 = vperm.xlu0 %3889, %v2841
        %v3891 = vpop.permute.xlu0 %3890
        %3894 = vset.pattern.permute.xlu0 0
        %3895 = vperm.xlu0 %3894, %v2945
        %v3896 = vpop.permute.xlu0 %3895
        %3899 = vset.pattern.permute.xlu0 0
        %3900 = vperm.xlu0 %3899, %v3049
        %v3901 = vpop.permute.xlu0 %3900
        %3904 = vset.pattern.permute.xlu0 0
        %3905 = vperm.xlu0 %3904, %v3153
        %v3906 = vpop.permute.xlu0 %3905
        %3909 = vset.pattern.permute.xlu0 0
        %3910 = vperm.xlu0 %3909, %v3257
        %v3911 = vpop.permute.xlu0 %3910
        %3914 = vset.pattern.permute.xlu0 0
        %3915 = vperm.xlu0 %3914, %v3361
        %v3916 = vpop.permute.xlu0 %3915
        %3919 = vset.pattern.permute.xlu0 0
        %3920 = vperm.xlu0 %3919, %v3465
        %v3921 = vpop.permute.xlu0 %3920
        %3924 = vset.pattern.permute.xlu0 0
        %3925 = vperm.xlu0 %3924, %v3569
        %v3926 = vpop.permute.xlu0 %3925
        %3929 = vset.pattern.permute.xlu0 0
        %3930 = vperm.xlu0 %3929, %v3673
        %v3931 = vpop.permute.xlu0 %3930
        %3934 = vset.pattern.permute.xlu0 0
        %3935 = vperm.xlu0 %3934, %v3777
        %v3936 = vpop.permute.xlu0 %3935
        %vm3938 = vcmask 130048
        %3939 = vst.msk [vmem:[%s147] sm:$0xff] %vm3938, %v3781
        %3940 = vst.msk [vmem:[%s147 + $0x8] sm:$0xff] %vm3938, %v3786
        %3941 = vst.msk [vmem:[%s147 + $0x10] sm:$0xff] %vm3938, %v3791
        %3942 = vst.msk [vmem:[%s147 + $0x18] sm:$0xff] %vm3938, %v3796
        %3943 = vst.msk [vmem:[%s147 + $0x20] sm:$0xff] %vm3938, %v3801
        %3944 = vst.msk [vmem:[%s147 + $0x28] sm:$0xff] %vm3938, %v3806
        %3945 = vst.msk [vmem:[%s147 + $0x30] sm:$0xff] %vm3938, %v3811
        %3946 = vst.msk [vmem:[%s147 + $0x38] sm:$0xff] %vm3938, %v3816
        %3947 = vst.msk [vmem:[%s147 + $0x40] sm:$0xff] %vm3938, %v3821
        %3948 = vst.msk [vmem:[%s147 + $0x48] sm:$0xff] %vm3938, %v3826
        %3949 = vst.msk [vmem:[%s147 + $0x50] sm:$0xff] %vm3938, %v3831
        %3950 = vst.msk [vmem:[%s147 + $0x58] sm:$0xff] %vm3938, %v3836
        %3951 = vst.msk [vmem:[%s147 + $0x60] sm:$0xff] %vm3938, %v3841
        %3952 = vst.msk [vmem:[%s147 + $0x68] sm:$0xff] %vm3938, %v3846
        %3953 = vst.msk [vmem:[%s147 + $0x70] sm:$0xff] %vm3938, %v3851
        %3954 = vst.msk [vmem:[%s147 + $0x78] sm:$0xff] %vm3938, %v3856
        %3955 = vst.msk [vmem:[%s147 + $0x80] sm:$0xff] %vm3938, %v3861
        %3956 = vst.msk [vmem:[%s147 + $0x88] sm:$0xff] %vm3938, %v3866
        %3957 = vst.msk [vmem:[%s147 + $0x90] sm:$0xff] %vm3938, %v3871
        %3958 = vst.msk [vmem:[%s147 + $0x98] sm:$0xff] %vm3938, %v3876
        %3959 = vst.msk [vmem:[%s147 + $0xa0] sm:$0xff] %vm3938, %v3881
        %3960 = vst.msk [vmem:[%s147 + $0xa8] sm:$0xff] %vm3938, %v3886
        %3961 = vst.msk [vmem:[%s147 + $0xb0] sm:$0xff] %vm3938, %v3891
        %3962 = vst.msk [vmem:[%s147 + $0xb8] sm:$0xff] %vm3938, %v3896
        %3963 = vst.msk [vmem:[%s147 + $0xc0] sm:$0xff] %vm3938, %v3901
        %3964 = vst.msk [vmem:[%s147 + $0xc8] sm:$0xff] %vm3938, %v3906
        %3965 = vst.msk [vmem:[%s147 + $0xd0] sm:$0xff] %vm3938, %v3911
        %3966 = vst.msk [vmem:[%s147 + $0xd8] sm:$0xff] %vm3938, %v3916
        %3967 = vst.msk [vmem:[%s147 + $0xe0] sm:$0xff] %vm3938, %v3921
        %3968 = vst.msk [vmem:[%s147 + $0xe8] sm:$0xff] %vm3938, %v3926
        %3969 = vst.msk [vmem:[%s147 + $0xf0] sm:$0xff] %vm3938, %v3931
        %3970 = vst.msk [vmem:[%s147 + $0xf8] sm:$0xff] %vm3938, %v3936
      $region32: #{tpu_custom_call.1} parent=27 // pred_fallthru
        _
      %p3971 = scmp.eq.s32.totalorder %s18, 1
      // Predicated region
      $region33: #{tpu_custom_call.1} parent=27 // pred_check
        %p3972 = pneg %p3971
      $region34: #{tpu_custom_call.1} parent=27 // pred_check_branch
        %3974 = sbr.rel (%p3972) target = $region36
      $region35: #{tpu_custom_call.1} parent=27 // pred_region
        %v3975 = vlaneseq
        %v3976 = vand.u32 %v3975, 127
        %v3977 = vcvt.s32.f32 %v3976
        %v3978 = vadd.f32 %v3977, 1.0
        %v3979 = vmul.f32 %v3978, 0.39269906
        %3981 = vset.pattern.permute.xlu0 0
        %3982 = vperm.xlu0 %3981, %v149
        %v3983 = vpop.permute.xlu0 %3982
        %v3985 = vlaneseq
        %v3986 = vshrl.u32 %v3985, 7
        %v3987 = vsub.s32 0, %v3986
        %v3988 = vrot.slane %v3983, %v3987
        %3990 = vset.pattern.permute.xlu0 0
        %3991 = vperm.xlu0 %3990, %v150
        %v3992 = vpop.permute.xlu0 %3991
        %v3994 = vlaneseq
        %v3995 = vshrl.u32 %v3994, 7
        %v3996 = vsub.s32 0, %v3995
        %v3997 = vrot.slane %v3992, %v3996
        %3999 = vset.pattern.permute.xlu0 0
        %4000 = vperm.xlu0 %3999, %v151
        %v4001 = vpop.permute.xlu0 %4000
        %v4003 = vlaneseq
        %v4004 = vshrl.u32 %v4003, 7
        %v4005 = vsub.s32 0, %v4004
        %v4006 = vrot.slane %v4001, %v4005
        %4008 = vset.pattern.permute.xlu0 0
        %4009 = vperm.xlu0 %4008, %v152
        %v4010 = vpop.permute.xlu0 %4009
        %v4012 = vlaneseq
        %v4013 = vshrl.u32 %v4012, 7
        %v4014 = vsub.s32 0, %v4013
        %v4015 = vrot.slane %v4010, %v4014
        %4017 = vset.pattern.permute.xlu0 0
        %4018 = vperm.xlu0 %4017, %v153
        %v4019 = vpop.permute.xlu0 %4018
        %v4021 = vlaneseq
        %v4022 = vshrl.u32 %v4021, 7
        %v4023 = vsub.s32 0, %v4022
        %v4024 = vrot.slane %v4019, %v4023
        %4026 = vset.pattern.permute.xlu0 0
        %4027 = vperm.xlu0 %4026, %v154
        %v4028 = vpop.permute.xlu0 %4027
        %v4030 = vlaneseq
        %v4031 = vshrl.u32 %v4030, 7
        %v4032 = vsub.s32 0, %v4031
        %v4033 = vrot.slane %v4028, %v4032
        %4035 = vset.pattern.permute.xlu0 0
        %4036 = vperm.xlu0 %4035, %v155
        %v4037 = vpop.permute.xlu0 %4036
        %v4039 = vlaneseq
        %v4040 = vshrl.u32 %v4039, 7
        %v4041 = vsub.s32 0, %v4040
        %v4042 = vrot.slane %v4037, %v4041
        %4044 = vset.pattern.permute.xlu0 0
        %4045 = vperm.xlu0 %4044, %v156
        %v4046 = vpop.permute.xlu0 %4045
        %v4048 = vlaneseq
        %v4049 = vshrl.u32 %v4048, 7
        %v4050 = vsub.s32 0, %v4049
        %v4051 = vrot.slane %v4046, %v4050
        %4053 = vset.pattern.permute.xlu0 0
        %4054 = vperm.xlu0 %4053, %v157
        %v4055 = vpop.permute.xlu0 %4054
        %v4057 = vlaneseq
        %v4058 = vshrl.u32 %v4057, 7
        %v4059 = vsub.s32 0, %v4058
        %v4060 = vrot.slane %v4055, %v4059
        %4062 = vset.pattern.permute.xlu0 0
        %4063 = vperm.xlu0 %4062, %v158
        %v4064 = vpop.permute.xlu0 %4063
        %v4066 = vlaneseq
        %v4067 = vshrl.u32 %v4066, 7
        %v4068 = vsub.s32 0, %v4067
        %v4069 = vrot.slane %v4064, %v4068
        %4071 = vset.pattern.permute.xlu0 0
        %4072 = vperm.xlu0 %4071, %v159
        %v4073 = vpop.permute.xlu0 %4072
        %v4075 = vlaneseq
        %v4076 = vshrl.u32 %v4075, 7
        %v4077 = vsub.s32 0, %v4076
        %v4078 = vrot.slane %v4073, %v4077
        %4080 = vset.pattern.permute.xlu0 0
        %4081 = vperm.xlu0 %4080, %v160
        %v4082 = vpop.permute.xlu0 %4081
        %v4084 = vlaneseq
        %v4085 = vshrl.u32 %v4084, 7
        %v4086 = vsub.s32 0, %v4085
        %v4087 = vrot.slane %v4082, %v4086
        %4089 = vset.pattern.permute.xlu0 0
        %4090 = vperm.xlu0 %4089, %v161
        %v4091 = vpop.permute.xlu0 %4090
        %v4093 = vlaneseq
        %v4094 = vshrl.u32 %v4093, 7
        %v4095 = vsub.s32 0, %v4094
        %v4096 = vrot.slane %v4091, %v4095
        %4098 = vset.pattern.permute.xlu0 0
        %4099 = vperm.xlu0 %4098, %v162
        %v4100 = vpop.permute.xlu0 %4099
        %v4102 = vlaneseq
        %v4103 = vshrl.u32 %v4102, 7
        %v4104 = vsub.s32 0, %v4103
        %v4105 = vrot.slane %v4100, %v4104
        %4107 = vset.pattern.permute.xlu0 0
        %4108 = vperm.xlu0 %4107, %v163
        %v4109 = vpop.permute.xlu0 %4108
        %v4111 = vlaneseq
        %v4112 = vshrl.u32 %v4111, 7
        %v4113 = vsub.s32 0, %v4112
        %v4114 = vrot.slane %v4109, %v4113
        %4116 = vset.pattern.permute.xlu0 0
        %4117 = vperm.xlu0 %4116, %v164
        %v4118 = vpop.permute.xlu0 %4117
        %v4120 = vlaneseq
        %v4121 = vshrl.u32 %v4120, 7
        %v4122 = vsub.s32 0, %v4121
        %v4123 = vrot.slane %v4118, %v4122
        %v4124 = vmul.f32 %v3979, %v3988
        %v4125 = vmul.f32 %v3979, %v3997
        %v4126 = vmul.f32 %v3979, %v4006
        %v4127 = vmul.f32 %v3979, %v4015
        %v4128 = vmul.f32 %v3979, %v4024
        %v4129 = vmul.f32 %v3979, %v4033
        %v4130 = vmul.f32 %v3979, %v4042
        %v4131 = vmul.f32 %v3979, %v4051
        %v4132 = vmul.f32 %v3979, %v4060
        %v4133 = vmul.f32 %v3979, %v4069
        %v4134 = vmul.f32 %v3979, %v4078
        %v4135 = vmul.f32 %v3979, %v4087
        %v4136 = vmul.f32 %v3979, %v4096
        %v4137 = vmul.f32 %v3979, %v4105
        %v4138 = vmul.f32 %v3979, %v4114
        %v4139 = vmul.f32 %v3979, %v4123
        %4141 = vset.pattern.permute.xlu0 0
        %4142 = vperm.xlu0 %4141, %v165
        %v4143 = vpop.permute.xlu0 %4142
        %v4145 = vlaneseq
        %v4146 = vshrl.u32 %v4145, 7
        %v4147 = vsub.s32 0, %v4146
        %v4148 = vrot.slane %v4143, %v4147
        %4150 = vset.pattern.permute.xlu0 0
        %4151 = vperm.xlu0 %4150, %v166
        %v4152 = vpop.permute.xlu0 %4151
        %v4154 = vlaneseq
        %v4155 = vshrl.u32 %v4154, 7
        %v4156 = vsub.s32 0, %v4155
        %v4157 = vrot.slane %v4152, %v4156
        %4159 = vset.pattern.permute.xlu0 0
        %4160 = vperm.xlu0 %4159, %v167
        %v4161 = vpop.permute.xlu0 %4160
        %v4163 = vlaneseq
        %v4164 = vshrl.u32 %v4163, 7
        %v4165 = vsub.s32 0, %v4164
        %v4166 = vrot.slane %v4161, %v4165
        %4168 = vset.pattern.permute.xlu0 0
        %4169 = vperm.xlu0 %4168, %v168
        %v4170 = vpop.permute.xlu0 %4169
        %v4172 = vlaneseq
        %v4173 = vshrl.u32 %v4172, 7
        %v4174 = vsub.s32 0, %v4173
        %v4175 = vrot.slane %v4170, %v4174
        %4177 = vset.pattern.permute.xlu0 0
        %4178 = vperm.xlu0 %4177, %v169
        %v4179 = vpop.permute.xlu0 %4178
        %v4181 = vlaneseq
        %v4182 = vshrl.u32 %v4181, 7
        %v4183 = vsub.s32 0, %v4182
        %v4184 = vrot.slane %v4179, %v4183
        %4186 = vset.pattern.permute.xlu0 0
        %4187 = vperm.xlu0 %4186, %v170
        %v4188 = vpop.permute.xlu0 %4187
        %v4190 = vlaneseq
        %v4191 = vshrl.u32 %v4190, 7
        %v4192 = vsub.s32 0, %v4191
        %v4193 = vrot.slane %v4188, %v4192
        %4195 = vset.pattern.permute.xlu0 0
        %4196 = vperm.xlu0 %4195, %v171
        %v4197 = vpop.permute.xlu0 %4196
        %v4199 = vlaneseq
        %v4200 = vshrl.u32 %v4199, 7
        %v4201 = vsub.s32 0, %v4200
        %v4202 = vrot.slane %v4197, %v4201
        %4204 = vset.pattern.permute.xlu0 0
        %4205 = vperm.xlu0 %4204, %v172
        %v4206 = vpop.permute.xlu0 %4205
        %v4208 = vlaneseq
        %v4209 = vshrl.u32 %v4208, 7
        %v4210 = vsub.s32 0, %v4209
        %v4211 = vrot.slane %v4206, %v4210
        %4213 = vset.pattern.permute.xlu0 0
        %4214 = vperm.xlu0 %4213, %v173
        %v4215 = vpop.permute.xlu0 %4214
        %v4217 = vlaneseq
        %v4218 = vshrl.u32 %v4217, 7
        %v4219 = vsub.s32 0, %v4218
        %v4220 = vrot.slane %v4215, %v4219
        %4222 = vset.pattern.permute.xlu0 0
        %4223 = vperm.xlu0 %4222, %v174
        %v4224 = vpop.permute.xlu0 %4223
        %v4226 = vlaneseq
        %v4227 = vshrl.u32 %v4226, 7
        %v4228 = vsub.s32 0, %v4227
        %v4229 = vrot.slane %v4224, %v4228
        %4231 = vset.pattern.permute.xlu0 0
        %4232 = vperm.xlu0 %4231, %v175
        %v4233 = vpop.permute.xlu0 %4232
        %v4235 = vlaneseq
        %v4236 = vshrl.u32 %v4235, 7
        %v4237 = vsub.s32 0, %v4236
        %v4238 = vrot.slane %v4233, %v4237
        %4240 = vset.pattern.permute.xlu0 0
        %4241 = vperm.xlu0 %4240, %v176
        %v4242 = vpop.permute.xlu0 %4241
        %v4244 = vlaneseq
        %v4245 = vshrl.u32 %v4244, 7
        %v4246 = vsub.s32 0, %v4245
        %v4247 = vrot.slane %v4242, %v4246
        %4249 = vset.pattern.permute.xlu0 0
        %4250 = vperm.xlu0 %4249, %v177
        %v4251 = vpop.permute.xlu0 %4250
        %v4253 = vlaneseq
        %v4254 = vshrl.u32 %v4253, 7
        %v4255 = vsub.s32 0, %v4254
        %v4256 = vrot.slane %v4251, %v4255
        %4258 = vset.pattern.permute.xlu0 0
        %4259 = vperm.xlu0 %4258, %v178
        %v4260 = vpop.permute.xlu0 %4259
        %v4262 = vlaneseq
        %v4263 = vshrl.u32 %v4262, 7
        %v4264 = vsub.s32 0, %v4263
        %v4265 = vrot.slane %v4260, %v4264
        %4267 = vset.pattern.permute.xlu0 0
        %4268 = vperm.xlu0 %4267, %v179
        %v4269 = vpop.permute.xlu0 %4268
        %v4271 = vlaneseq
        %v4272 = vshrl.u32 %v4271, 7
        %v4273 = vsub.s32 0, %v4272
        %v4274 = vrot.slane %v4269, %v4273
        %4276 = vset.pattern.permute.xlu0 0
        %4277 = vperm.xlu0 %4276, %v180
        %v4278 = vpop.permute.xlu0 %4277
        %v4280 = vlaneseq
        %v4281 = vshrl.u32 %v4280, 7
        %v4282 = vsub.s32 0, %v4281
        %v4283 = vrot.slane %v4278, %v4282
        %v4284 = vadd.f32 %v4124, %v4148
        %v4285 = vadd.f32 %v4125, %v4157
        %v4286 = vadd.f32 %v4126, %v4166
        %v4287 = vadd.f32 %v4127, %v4175
        %v4288 = vadd.f32 %v4128, %v4184
        %v4289 = vadd.f32 %v4129, %v4193
        %v4290 = vadd.f32 %v4130, %v4202
        %v4291 = vadd.f32 %v4131, %v4211
        %v4292 = vadd.f32 %v4132, %v4220
        %v4293 = vadd.f32 %v4133, %v4229
        %v4294 = vadd.f32 %v4134, %v4238
        %v4295 = vadd.f32 %v4135, %v4247
        %v4296 = vadd.f32 %v4136, %v4256
        %v4297 = vadd.f32 %v4137, %v4265
        %v4298 = vadd.f32 %v4138, %v4274
        %v4299 = vadd.f32 %v4139, %v4283
        %v4300 = vand.u32 2147483647, %v4284
        %vm4301 = vcmp.le.f32.partialorder %v4300, 0.7853982
        %vm4302 = vcmp.lt.s32.totalorder %v4284, 0
        %v4303 = vand.u32 %v4284, 2139095040
        %v4304 = vshrl.u32 %v4303, 23
        %v4305 = vsub.s32 %v4304, 127
        %v4306 = vand.u32 2147483647, %v4284
        %v4307 = vand.u32 %v4306, 8388607
        %v4308 = vor.u32 %v4307, 8388608
        %v4309 = vsub.s32 0, %v4308
        %v4310 = vadd.s32 %v4305, 1
        %vm4311 = vcmp.gt.s32.totalorder %v4310, 0
        %v4312 = vsel %vm4311, %v4310, 0
        %v4313 = vshrl.u32 %v4312, 5
        %v4314 = vand.u32 %v4312, 31
        %v4315 = vsub.s32 32, %v4314
        %v4316 = vshrl.u32 683565275, %v4315
        %v4317 = vshll.u32 683565275, %v4314
        %v4318 = vshrl.u32 2475754826, %v4315
        %v4319 = vor.u32 %v4317, %v4318
        %v4320 = vshll.u32 2475754826, %v4314
        %v4321 = vshrl.u32 2131351028, %v4315
        %v4322 = vor.u32 %v4320, %v4321
        %v4323 = vshll.u32 2131351028, %v4314
        %v4324 = vshrl.u32 2102212464, %v4315
        %v4325 = vor.u32 %v4323, %v4324
        %v4326 = vshll.u32 2102212464, %v4314
        %v4327 = vshrl.u32 920167782, %v4315
        %v4328 = vor.u32 %v4326, %v4327
        %v4329 = vshll.u32 920167782, %v4314
        %v4330 = vshrl.u32 1326507024, %v4315
        %v4331 = vor.u32 %v4329, %v4330
        %vm4332 = vcmp.lt.s32.totalorder %v4313, 1
        %vm4333 = vcmp.lt.s32.totalorder %v4313, 2
        %vm4334 = vcmp.lt.s32.totalorder %v4313, 3
        %vm4335 = vcmp.lt.s32.totalorder %v4313, 4
        %v4336 = vsel %vm4332, %v4316, %v4319
        %v4337 = vsel %vm4335, %v4325, 2102212464
        %v4338 = vsel %vm4334, %v4322, %v4337
        %v4339 = vsel %vm4333, %v4336, %v4338
        %v4340 = vsel %vm4332, %v4319, %v4322
        %v4341 = vsel %vm4335, %v4328, 920167782
        %v4342 = vsel %vm4334, %v4325, %v4341
        %v4343 = vsel %vm4333, %v4340, %v4342
        %v4344 = vsel %vm4332, %v4322, %v4325
        %v4345 = vsel %vm4335, %v4331, 1326507024
        %v4346 = vsel %vm4334, %v4328, %v4345
        %v4347 = vsel %vm4333, %v4344, %v4346
        %v4348 = vshll.u32 %v4308, 8
        %v4349 = vmul.u32.u64.compose %v4348, %v4347
        %v4350 = vextract.low.u32 %v4349
        %v4351 = vextract.high.u32 %v4349
        %v4352 = vmul.u32.u64.compose %v4348, %v4343
        %v4353 = vextract.low.u32 %v4352
        %v4354 = vextract.high.u32 %v4352
        %v4355 = vmul.u32 %v4348, %v4339
        %v4356 = vadd.s32 %v4351, %v4353
        %vm4357 = vc.u32 %v4351, %v4353
        %v4358 = vadd.s32 %v4354, 1
        %v4359 = vsel %vm4357, %v4358, %v4354
        %v4360 = vadd.s32 %v4355, %v4359
        %v4361 = vadd.s32 %v4360, 536870912
        %v4362 = vshrl.u32 %v4361, 30
        %v4363 = vshll.u32 %v4362, 30
        %v4364 = vsub.s32 %v4360, %v4363
        %vm4365 = vcmp.lt.s32.totalorder %v4364, 0
        %v4366 = vsub.s32 0, %v4364
        %v4367 = vsel %vm4365, %v4366, %v4364
        %v4368 = vclz %v4367
        %v4369 = vsub.s32 %v4368, 2
        %vm4370 = vcmp.gt.s32.totalorder 0, %v4369
        %v4371 = vsel %vm4370, 0, %v4369
        %v4372 = vsub.s32 32, %v4371
        %v4373 = vshll.u32 %v4364, %v4371
        %v4374 = vshrl.u32 %v4356, %v4372
        %v4375 = vor.u32 %v4373, %v4374
        %v4376 = vsub.s32 4294967266, %v4371
        %v4377 = vadd.s32 %v4376, 127
        %v4378 = vshll.u32 %v4377, 23
        %v4379 = vor.u32 4788187, %v4378
        %v4380 = vand.u32 2147483647, %v4379
        %v4382 = vcvt.s32.f32 %v4375
        %v4383 = vmul.f32 %v4382, %v4380
        %v4384 = vxor.u32 %v4383, 2147483648
        %v4385 = vsel %vm4302, %v4384, %v4383
        %v4386 = vsub.s32 4, %v4362
        %v4387 = vsel %vm4302, %v4386, %v4362
        %v4388 = vsel %vm4301, %v4284, %v4385
        %v4389 = vsel %vm4301, 0, %v4387
        %v4390 = vcosq.f32.pop %v4388
        %v4391 = vsinq.f32.pop %v4388
        %vm4392 = vweird.f32 %v4284
        %v4393 = vadd.s32 %v4389, 3
        %v4394 = vand.u32 %v4393, 3
        %vm4395 = vcmp.lt.s32.totalorder %v4394, 2
        %vm4396 = vcmp.eq.s32.totalorder %v4394, 0
        %v4397 = vxor.u32 %v4391, 2147483648
        %v4398 = vsel %vm4396, %v4390, %v4397
        %vm4399 = vcmp.eq.s32.totalorder %v4394, 2
        %v4400 = vxor.u32 %v4390, 2147483648
        %v4401 = vsel %vm4399, %v4400, %v4391
        %v4402 = vsel %vm4395, %v4398, %v4401
        %v4403 = vsel %vm4392, nan, %v4402
        %v4404 = vand.u32 2147483647, %v4285
        %vm4405 = vcmp.le.f32.partialorder %v4404, 0.7853982
        %vm4406 = vcmp.lt.s32.totalorder %v4285, 0
        %v4407 = vand.u32 %v4285, 2139095040
        %v4408 = vshrl.u32 %v4407, 23
        %v4409 = vsub.s32 %v4408, 127
        %v4410 = vand.u32 2147483647, %v4285
        %v4411 = vand.u32 %v4410, 8388607
        %v4412 = vor.u32 %v4411, 8388608
        %v4413 = vsub.s32 0, %v4412
        %v4414 = vadd.s32 %v4409, 1
        %vm4415 = vcmp.gt.s32.totalorder %v4414, 0
        %v4416 = vsel %vm4415, %v4414, 0
        %v4417 = vshrl.u32 %v4416, 5
        %v4418 = vand.u32 %v4416, 31
        %v4419 = vsub.s32 32, %v4418
        %v4420 = vshrl.u32 683565275, %v4419
        %v4421 = vshll.u32 683565275, %v4418
        %v4422 = vshrl.u32 2475754826, %v4419
        %v4423 = vor.u32 %v4421, %v4422
        %v4424 = vshll.u32 2475754826, %v4418
        %v4425 = vshrl.u32 2131351028, %v4419
        %v4426 = vor.u32 %v4424, %v4425
        %v4427 = vshll.u32 2131351028, %v4418
        %v4428 = vshrl.u32 2102212464, %v4419
        %v4429 = vor.u32 %v4427, %v4428
        %v4430 = vshll.u32 2102212464, %v4418
        %v4431 = vshrl.u32 920167782, %v4419
        %v4432 = vor.u32 %v4430, %v4431
        %v4433 = vshll.u32 920167782, %v4418
        %v4434 = vshrl.u32 1326507024, %v4419
        %v4435 = vor.u32 %v4433, %v4434
        %vm4436 = vcmp.lt.s32.totalorder %v4417, 1
        %vm4437 = vcmp.lt.s32.totalorder %v4417, 2
        %vm4438 = vcmp.lt.s32.totalorder %v4417, 3
        %vm4439 = vcmp.lt.s32.totalorder %v4417, 4
        %v4440 = vsel %vm4436, %v4420, %v4423
        %v4441 = vsel %vm4439, %v4429, 2102212464
        %v4442 = vsel %vm4438, %v4426, %v4441
        %v4443 = vsel %vm4437, %v4440, %v4442
        %v4444 = vsel %vm4436, %v4423, %v4426
        %v4445 = vsel %vm4439, %v4432, 920167782
        %v4446 = vsel %vm4438, %v4429, %v4445
        %v4447 = vsel %vm4437, %v4444, %v4446
        %v4448 = vsel %vm4436, %v4426, %v4429
        %v4449 = vsel %vm4439, %v4435, 1326507024
        %v4450 = vsel %vm4438, %v4432, %v4449
        %v4451 = vsel %vm4437, %v4448, %v4450
        %v4452 = vshll.u32 %v4412, 8
        %v4453 = vmul.u32.u64.compose %v4452, %v4451
        %v4454 = vextract.low.u32 %v4453
        %v4455 = vextract.high.u32 %v4453
        %v4456 = vmul.u32.u64.compose %v4452, %v4447
        %v4457 = vextract.low.u32 %v4456
        %v4458 = vextract.high.u32 %v4456
        %v4459 = vmul.u32 %v4452, %v4443
        %v4460 = vadd.s32 %v4455, %v4457
        %vm4461 = vc.u32 %v4455, %v4457
        %v4462 = vadd.s32 %v4458, 1
        %v4463 = vsel %vm4461, %v4462, %v4458
        %v4464 = vadd.s32 %v4459, %v4463
        %v4465 = vadd.s32 %v4464, 536870912
        %v4466 = vshrl.u32 %v4465, 30
        %v4467 = vshll.u32 %v4466, 30
        %v4468 = vsub.s32 %v4464, %v4467
        %vm4469 = vcmp.lt.s32.totalorder %v4468, 0
        %v4470 = vsub.s32 0, %v4468
        %v4471 = vsel %vm4469, %v4470, %v4468
        %v4472 = vclz %v4471
        %v4473 = vsub.s32 %v4472, 2
        %vm4474 = vcmp.gt.s32.totalorder 0, %v4473
        %v4475 = vsel %vm4474, 0, %v4473
        %v4476 = vsub.s32 32, %v4475
        %v4477 = vshll.u32 %v4468, %v4475
        %v4478 = vshrl.u32 %v4460, %v4476
        %v4479 = vor.u32 %v4477, %v4478
        %v4480 = vsub.s32 4294967266, %v4475
        %v4481 = vadd.s32 %v4480, 127
        %v4482 = vshll.u32 %v4481, 23
        %v4483 = vor.u32 4788187, %v4482
        %v4484 = vand.u32 2147483647, %v4483
        %v4486 = vcvt.s32.f32 %v4479
        %v4487 = vmul.f32 %v4486, %v4484
        %v4488 = vxor.u32 %v4487, 2147483648
        %v4489 = vsel %vm4406, %v4488, %v4487
        %v4490 = vsub.s32 4, %v4466
        %v4491 = vsel %vm4406, %v4490, %v4466
        %v4492 = vsel %vm4405, %v4285, %v4489
        %v4493 = vsel %vm4405, 0, %v4491
        %v4494 = vcosq.f32.pop %v4492
        %v4495 = vsinq.f32.pop %v4492
        %vm4496 = vweird.f32 %v4285
        %v4497 = vadd.s32 %v4493, 3
        %v4498 = vand.u32 %v4497, 3
        %vm4499 = vcmp.lt.s32.totalorder %v4498, 2
        %vm4500 = vcmp.eq.s32.totalorder %v4498, 0
        %v4501 = vxor.u32 %v4495, 2147483648
        %v4502 = vsel %vm4500, %v4494, %v4501
        %vm4503 = vcmp.eq.s32.totalorder %v4498, 2
        %v4504 = vxor.u32 %v4494, 2147483648
        %v4505 = vsel %vm4503, %v4504, %v4495
        %v4506 = vsel %vm4499, %v4502, %v4505
        %v4507 = vsel %vm4496, nan, %v4506
        %v4508 = vand.u32 2147483647, %v4286
        %vm4509 = vcmp.le.f32.partialorder %v4508, 0.7853982
        %vm4510 = vcmp.lt.s32.totalorder %v4286, 0
        %v4511 = vand.u32 %v4286, 2139095040
        %v4512 = vshrl.u32 %v4511, 23
        %v4513 = vsub.s32 %v4512, 127
        %v4514 = vand.u32 2147483647, %v4286
        %v4515 = vand.u32 %v4514, 8388607
        %v4516 = vor.u32 %v4515, 8388608
        %v4517 = vsub.s32 0, %v4516
        %v4518 = vadd.s32 %v4513, 1
        %vm4519 = vcmp.gt.s32.totalorder %v4518, 0
        %v4520 = vsel %vm4519, %v4518, 0
        %v4521 = vshrl.u32 %v4520, 5
        %v4522 = vand.u32 %v4520, 31
        %v4523 = vsub.s32 32, %v4522
        %v4524 = vshrl.u32 683565275, %v4523
        %v4525 = vshll.u32 683565275, %v4522
        %v4526 = vshrl.u32 2475754826, %v4523
        %v4527 = vor.u32 %v4525, %v4526
        %v4528 = vshll.u32 2475754826, %v4522
        %v4529 = vshrl.u32 2131351028, %v4523
        %v4530 = vor.u32 %v4528, %v4529
        %v4531 = vshll.u32 2131351028, %v4522
        %v4532 = vshrl.u32 2102212464, %v4523
        %v4533 = vor.u32 %v4531, %v4532
        %v4534 = vshll.u32 2102212464, %v4522
        %v4535 = vshrl.u32 920167782, %v4523
        %v4536 = vor.u32 %v4534, %v4535
        %v4537 = vshll.u32 920167782, %v4522
        %v4538 = vshrl.u32 1326507024, %v4523
        %v4539 = vor.u32 %v4537, %v4538
        %vm4540 = vcmp.lt.s32.totalorder %v4521, 1
        %vm4541 = vcmp.lt.s32.totalorder %v4521, 2
        %vm4542 = vcmp.lt.s32.totalorder %v4521, 3
        %vm4543 = vcmp.lt.s32.totalorder %v4521, 4
        %v4544 = vsel %vm4540, %v4524, %v4527
        %v4545 = vsel %vm4543, %v4533, 2102212464
        %v4546 = vsel %vm4542, %v4530, %v4545
        %v4547 = vsel %vm4541, %v4544, %v4546
        %v4548 = vsel %vm4540, %v4527, %v4530
        %v4549 = vsel %vm4543, %v4536, 920167782
        %v4550 = vsel %vm4542, %v4533, %v4549
        %v4551 = vsel %vm4541, %v4548, %v4550
        %v4552 = vsel %vm4540, %v4530, %v4533
        %v4553 = vsel %vm4543, %v4539, 1326507024
        %v4554 = vsel %vm4542, %v4536, %v4553
        %v4555 = vsel %vm4541, %v4552, %v4554
        %v4556 = vshll.u32 %v4516, 8
        %v4557 = vmul.u32.u64.compose %v4556, %v4555
        %v4558 = vextract.low.u32 %v4557
        %v4559 = vextract.high.u32 %v4557
        %v4560 = vmul.u32.u64.compose %v4556, %v4551
        %v4561 = vextract.low.u32 %v4560
        %v4562 = vextract.high.u32 %v4560
        %v4563 = vmul.u32 %v4556, %v4547
        %v4564 = vadd.s32 %v4559, %v4561
        %vm4565 = vc.u32 %v4559, %v4561
        %v4566 = vadd.s32 %v4562, 1
        %v4567 = vsel %vm4565, %v4566, %v4562
        %v4568 = vadd.s32 %v4563, %v4567
        %v4569 = vadd.s32 %v4568, 536870912
        %v4570 = vshrl.u32 %v4569, 30
        %v4571 = vshll.u32 %v4570, 30
        %v4572 = vsub.s32 %v4568, %v4571
        %vm4573 = vcmp.lt.s32.totalorder %v4572, 0
        %v4574 = vsub.s32 0, %v4572
        %v4575 = vsel %vm4573, %v4574, %v4572
        %v4576 = vclz %v4575
        %v4577 = vsub.s32 %v4576, 2
        %vm4578 = vcmp.gt.s32.totalorder 0, %v4577
        %v4579 = vsel %vm4578, 0, %v4577
        %v4580 = vsub.s32 32, %v4579
        %v4581 = vshll.u32 %v4572, %v4579
        %v4582 = vshrl.u32 %v4564, %v4580
        %v4583 = vor.u32 %v4581, %v4582
        %v4584 = vsub.s32 4294967266, %v4579
        %v4585 = vadd.s32 %v4584, 127
        %v4586 = vshll.u32 %v4585, 23
        %v4587 = vor.u32 4788187, %v4586
        %v4588 = vand.u32 2147483647, %v4587
        %v4590 = vcvt.s32.f32 %v4583
        %v4591 = vmul.f32 %v4590, %v4588
        %v4592 = vxor.u32 %v4591, 2147483648
        %v4593 = vsel %vm4510, %v4592, %v4591
        %v4594 = vsub.s32 4, %v4570
        %v4595 = vsel %vm4510, %v4594, %v4570
        %v4596 = vsel %vm4509, %v4286, %v4593
        %v4597 = vsel %vm4509, 0, %v4595
        %v4598 = vcosq.f32.pop %v4596
        %v4599 = vsinq.f32.pop %v4596
        %vm4600 = vweird.f32 %v4286
        %v4601 = vadd.s32 %v4597, 3
        %v4602 = vand.u32 %v4601, 3
        %vm4603 = vcmp.lt.s32.totalorder %v4602, 2
        %vm4604 = vcmp.eq.s32.totalorder %v4602, 0
        %v4605 = vxor.u32 %v4599, 2147483648
        %v4606 = vsel %vm4604, %v4598, %v4605
        %vm4607 = vcmp.eq.s32.totalorder %v4602, 2
        %v4608 = vxor.u32 %v4598, 2147483648
        %v4609 = vsel %vm4607, %v4608, %v4599
        %v4610 = vsel %vm4603, %v4606, %v4609
        %v4611 = vsel %vm4600, nan, %v4610
        %v4612 = vand.u32 2147483647, %v4287
        %vm4613 = vcmp.le.f32.partialorder %v4612, 0.7853982
        %vm4614 = vcmp.lt.s32.totalorder %v4287, 0
        %v4615 = vand.u32 %v4287, 2139095040
        %v4616 = vshrl.u32 %v4615, 23
        %v4617 = vsub.s32 %v4616, 127
        %v4618 = vand.u32 2147483647, %v4287
        %v4619 = vand.u32 %v4618, 8388607
        %v4620 = vor.u32 %v4619, 8388608
        %v4621 = vsub.s32 0, %v4620
        %v4622 = vadd.s32 %v4617, 1
        %vm4623 = vcmp.gt.s32.totalorder %v4622, 0
        %v4624 = vsel %vm4623, %v4622, 0
        %v4625 = vshrl.u32 %v4624, 5
        %v4626 = vand.u32 %v4624, 31
        %v4627 = vsub.s32 32, %v4626
        %v4628 = vshrl.u32 683565275, %v4627
        %v4629 = vshll.u32 683565275, %v4626
        %v4630 = vshrl.u32 2475754826, %v4627
        %v4631 = vor.u32 %v4629, %v4630
        %v4632 = vshll.u32 2475754826, %v4626
        %v4633 = vshrl.u32 2131351028, %v4627
        %v4634 = vor.u32 %v4632, %v4633
        %v4635 = vshll.u32 2131351028, %v4626
        %v4636 = vshrl.u32 2102212464, %v4627
        %v4637 = vor.u32 %v4635, %v4636
        %v4638 = vshll.u32 2102212464, %v4626
        %v4639 = vshrl.u32 920167782, %v4627
        %v4640 = vor.u32 %v4638, %v4639
        %v4641 = vshll.u32 920167782, %v4626
        %v4642 = vshrl.u32 1326507024, %v4627
        %v4643 = vor.u32 %v4641, %v4642
        %vm4644 = vcmp.lt.s32.totalorder %v4625, 1
        %vm4645 = vcmp.lt.s32.totalorder %v4625, 2
        %vm4646 = vcmp.lt.s32.totalorder %v4625, 3
        %vm4647 = vcmp.lt.s32.totalorder %v4625, 4
        %v4648 = vsel %vm4644, %v4628, %v4631
        %v4649 = vsel %vm4647, %v4637, 2102212464
        %v4650 = vsel %vm4646, %v4634, %v4649
        %v4651 = vsel %vm4645, %v4648, %v4650
        %v4652 = vsel %vm4644, %v4631, %v4634
        %v4653 = vsel %vm4647, %v4640, 920167782
        %v4654 = vsel %vm4646, %v4637, %v4653
        %v4655 = vsel %vm4645, %v4652, %v4654
        %v4656 = vsel %vm4644, %v4634, %v4637
        %v4657 = vsel %vm4647, %v4643, 1326507024
        %v4658 = vsel %vm4646, %v4640, %v4657
        %v4659 = vsel %vm4645, %v4656, %v4658
        %v4660 = vshll.u32 %v4620, 8
        %v4661 = vmul.u32.u64.compose %v4660, %v4659
        %v4662 = vextract.low.u32 %v4661
        %v4663 = vextract.high.u32 %v4661
        %v4664 = vmul.u32.u64.compose %v4660, %v4655
        %v4665 = vextract.low.u32 %v4664
        %v4666 = vextract.high.u32 %v4664
        %v4667 = vmul.u32 %v4660, %v4651
        %v4668 = vadd.s32 %v4663, %v4665
        %vm4669 = vc.u32 %v4663, %v4665
        %v4670 = vadd.s32 %v4666, 1
        %v4671 = vsel %vm4669, %v4670, %v4666
        %v4672 = vadd.s32 %v4667, %v4671
        %v4673 = vadd.s32 %v4672, 536870912
        %v4674 = vshrl.u32 %v4673, 30
        %v4675 = vshll.u32 %v4674, 30
        %v4676 = vsub.s32 %v4672, %v4675
        %vm4677 = vcmp.lt.s32.totalorder %v4676, 0
        %v4678 = vsub.s32 0, %v4676
        %v4679 = vsel %vm4677, %v4678, %v4676
        %v4680 = vclz %v4679
        %v4681 = vsub.s32 %v4680, 2
        %vm4682 = vcmp.gt.s32.totalorder 0, %v4681
        %v4683 = vsel %vm4682, 0, %v4681
        %v4684 = vsub.s32 32, %v4683
        %v4685 = vshll.u32 %v4676, %v4683
        %v4686 = vshrl.u32 %v4668, %v4684
        %v4687 = vor.u32 %v4685, %v4686
        %v4688 = vsub.s32 4294967266, %v4683
        %v4689 = vadd.s32 %v4688, 127
        %v4690 = vshll.u32 %v4689, 23
        %v4691 = vor.u32 4788187, %v4690
        %v4692 = vand.u32 2147483647, %v4691
        %v4694 = vcvt.s32.f32 %v4687
        %v4695 = vmul.f32 %v4694, %v4692
        %v4696 = vxor.u32 %v4695, 2147483648
        %v4697 = vsel %vm4614, %v4696, %v4695
        %v4698 = vsub.s32 4, %v4674
        %v4699 = vsel %vm4614, %v4698, %v4674
        %v4700 = vsel %vm4613, %v4287, %v4697
        %v4701 = vsel %vm4613, 0, %v4699
        %v4702 = vcosq.f32.pop %v4700
        %v4703 = vsinq.f32.pop %v4700
        %vm4704 = vweird.f32 %v4287
        %v4705 = vadd.s32 %v4701, 3
        %v4706 = vand.u32 %v4705, 3
        %vm4707 = vcmp.lt.s32.totalorder %v4706, 2
        %vm4708 = vcmp.eq.s32.totalorder %v4706, 0
        %v4709 = vxor.u32 %v4703, 2147483648
        %v4710 = vsel %vm4708, %v4702, %v4709
        %vm4711 = vcmp.eq.s32.totalorder %v4706, 2
        %v4712 = vxor.u32 %v4702, 2147483648
        %v4713 = vsel %vm4711, %v4712, %v4703
        %v4714 = vsel %vm4707, %v4710, %v4713
        %v4715 = vsel %vm4704, nan, %v4714
        %v4716 = vand.u32 2147483647, %v4288
        %vm4717 = vcmp.le.f32.partialorder %v4716, 0.7853982
        %vm4718 = vcmp.lt.s32.totalorder %v4288, 0
        %v4719 = vand.u32 %v4288, 2139095040
        %v4720 = vshrl.u32 %v4719, 23
        %v4721 = vsub.s32 %v4720, 127
        %v4722 = vand.u32 2147483647, %v4288
        %v4723 = vand.u32 %v4722, 8388607
        %v4724 = vor.u32 %v4723, 8388608
        %v4725 = vsub.s32 0, %v4724
        %v4726 = vadd.s32 %v4721, 1
        %vm4727 = vcmp.gt.s32.totalorder %v4726, 0
        %v4728 = vsel %vm4727, %v4726, 0
        %v4729 = vshrl.u32 %v4728, 5
        %v4730 = vand.u32 %v4728, 31
        %v4731 = vsub.s32 32, %v4730
        %v4732 = vshrl.u32 683565275, %v4731
        %v4733 = vshll.u32 683565275, %v4730
        %v4734 = vshrl.u32 2475754826, %v4731
        %v4735 = vor.u32 %v4733, %v4734
        %v4736 = vshll.u32 2475754826, %v4730
        %v4737 = vshrl.u32 2131351028, %v4731
        %v4738 = vor.u32 %v4736, %v4737
        %v4739 = vshll.u32 2131351028, %v4730
        %v4740 = vshrl.u32 2102212464, %v4731
        %v4741 = vor.u32 %v4739, %v4740
        %v4742 = vshll.u32 2102212464, %v4730
        %v4743 = vshrl.u32 920167782, %v4731
        %v4744 = vor.u32 %v4742, %v4743
        %v4745 = vshll.u32 920167782, %v4730
        %v4746 = vshrl.u32 1326507024, %v4731
        %v4747 = vor.u32 %v4745, %v4746
        %vm4748 = vcmp.lt.s32.totalorder %v4729, 1
        %vm4749 = vcmp.lt.s32.totalorder %v4729, 2
        %vm4750 = vcmp.lt.s32.totalorder %v4729, 3
        %vm4751 = vcmp.lt.s32.totalorder %v4729, 4
        %v4752 = vsel %vm4748, %v4732, %v4735
        %v4753 = vsel %vm4751, %v4741, 2102212464
        %v4754 = vsel %vm4750, %v4738, %v4753
        %v4755 = vsel %vm4749, %v4752, %v4754
        %v4756 = vsel %vm4748, %v4735, %v4738
        %v4757 = vsel %vm4751, %v4744, 920167782
        %v4758 = vsel %vm4750, %v4741, %v4757
        %v4759 = vsel %vm4749, %v4756, %v4758
        %v4760 = vsel %vm4748, %v4738, %v4741
        %v4761 = vsel %vm4751, %v4747, 1326507024
        %v4762 = vsel %vm4750, %v4744, %v4761
        %v4763 = vsel %vm4749, %v4760, %v4762
        %v4764 = vshll.u32 %v4724, 8
        %v4765 = vmul.u32.u64.compose %v4764, %v4763
        %v4766 = vextract.low.u32 %v4765
        %v4767 = vextract.high.u32 %v4765
        %v4768 = vmul.u32.u64.compose %v4764, %v4759
        %v4769 = vextract.low.u32 %v4768
        %v4770 = vextract.high.u32 %v4768
        %v4771 = vmul.u32 %v4764, %v4755
        %v4772 = vadd.s32 %v4767, %v4769
        %vm4773 = vc.u32 %v4767, %v4769
        %v4774 = vadd.s32 %v4770, 1
        %v4775 = vsel %vm4773, %v4774, %v4770
        %v4776 = vadd.s32 %v4771, %v4775
        %v4777 = vadd.s32 %v4776, 536870912
        %v4778 = vshrl.u32 %v4777, 30
        %v4779 = vshll.u32 %v4778, 30
        %v4780 = vsub.s32 %v4776, %v4779
        %vm4781 = vcmp.lt.s32.totalorder %v4780, 0
        %v4782 = vsub.s32 0, %v4780
        %v4783 = vsel %vm4781, %v4782, %v4780
        %v4784 = vclz %v4783
        %v4785 = vsub.s32 %v4784, 2
        %vm4786 = vcmp.gt.s32.totalorder 0, %v4785
        %v4787 = vsel %vm4786, 0, %v4785
        %v4788 = vsub.s32 32, %v4787
        %v4789 = vshll.u32 %v4780, %v4787
        %v4790 = vshrl.u32 %v4772, %v4788
        %v4791 = vor.u32 %v4789, %v4790
        %v4792 = vsub.s32 4294967266, %v4787
        %v4793 = vadd.s32 %v4792, 127
        %v4794 = vshll.u32 %v4793, 23
        %v4795 = vor.u32 4788187, %v4794
        %v4796 = vand.u32 2147483647, %v4795
        %v4798 = vcvt.s32.f32 %v4791
        %v4799 = vmul.f32 %v4798, %v4796
        %v4800 = vxor.u32 %v4799, 2147483648
        %v4801 = vsel %vm4718, %v4800, %v4799
        %v4802 = vsub.s32 4, %v4778
        %v4803 = vsel %vm4718, %v4802, %v4778
        %v4804 = vsel %vm4717, %v4288, %v4801
        %v4805 = vsel %vm4717, 0, %v4803
        %v4806 = vcosq.f32.pop %v4804
        %v4807 = vsinq.f32.pop %v4804
        %vm4808 = vweird.f32 %v4288
        %v4809 = vadd.s32 %v4805, 3
        %v4810 = vand.u32 %v4809, 3
        %vm4811 = vcmp.lt.s32.totalorder %v4810, 2
        %vm4812 = vcmp.eq.s32.totalorder %v4810, 0
        %v4813 = vxor.u32 %v4807, 2147483648
        %v4814 = vsel %vm4812, %v4806, %v4813
        %vm4815 = vcmp.eq.s32.totalorder %v4810, 2
        %v4816 = vxor.u32 %v4806, 2147483648
        %v4817 = vsel %vm4815, %v4816, %v4807
        %v4818 = vsel %vm4811, %v4814, %v4817
        %v4819 = vsel %vm4808, nan, %v4818
        %v4820 = vand.u32 2147483647, %v4289
        %vm4821 = vcmp.le.f32.partialorder %v4820, 0.7853982
        %vm4822 = vcmp.lt.s32.totalorder %v4289, 0
        %v4823 = vand.u32 %v4289, 2139095040
        %v4824 = vshrl.u32 %v4823, 23
        %v4825 = vsub.s32 %v4824, 127
        %v4826 = vand.u32 2147483647, %v4289
        %v4827 = vand.u32 %v4826, 8388607
        %v4828 = vor.u32 %v4827, 8388608
        %v4829 = vsub.s32 0, %v4828
        %v4830 = vadd.s32 %v4825, 1
        %vm4831 = vcmp.gt.s32.totalorder %v4830, 0
        %v4832 = vsel %vm4831, %v4830, 0
        %v4833 = vshrl.u32 %v4832, 5
        %v4834 = vand.u32 %v4832, 31
        %v4835 = vsub.s32 32, %v4834
        %v4836 = vshrl.u32 683565275, %v4835
        %v4837 = vshll.u32 683565275, %v4834
        %v4838 = vshrl.u32 2475754826, %v4835
        %v4839 = vor.u32 %v4837, %v4838
        %v4840 = vshll.u32 2475754826, %v4834
        %v4841 = vshrl.u32 2131351028, %v4835
        %v4842 = vor.u32 %v4840, %v4841
        %v4843 = vshll.u32 2131351028, %v4834
        %v4844 = vshrl.u32 2102212464, %v4835
        %v4845 = vor.u32 %v4843, %v4844
        %v4846 = vshll.u32 2102212464, %v4834
        %v4847 = vshrl.u32 920167782, %v4835
        %v4848 = vor.u32 %v4846, %v4847
        %v4849 = vshll.u32 920167782, %v4834
        %v4850 = vshrl.u32 1326507024, %v4835
        %v4851 = vor.u32 %v4849, %v4850
        %vm4852 = vcmp.lt.s32.totalorder %v4833, 1
        %vm4853 = vcmp.lt.s32.totalorder %v4833, 2
        %vm4854 = vcmp.lt.s32.totalorder %v4833, 3
        %vm4855 = vcmp.lt.s32.totalorder %v4833, 4
        %v4856 = vsel %vm4852, %v4836, %v4839
        %v4857 = vsel %vm4855, %v4845, 2102212464
        %v4858 = vsel %vm4854, %v4842, %v4857
        %v4859 = vsel %vm4853, %v4856, %v4858
        %v4860 = vsel %vm4852, %v4839, %v4842
        %v4861 = vsel %vm4855, %v4848, 920167782
        %v4862 = vsel %vm4854, %v4845, %v4861
        %v4863 = vsel %vm4853, %v4860, %v4862
        %v4864 = vsel %vm4852, %v4842, %v4845
        %v4865 = vsel %vm4855, %v4851, 1326507024
        %v4866 = vsel %vm4854, %v4848, %v4865
        %v4867 = vsel %vm4853, %v4864, %v4866
        %v4868 = vshll.u32 %v4828, 8
        %v4869 = vmul.u32.u64.compose %v4868, %v4867
        %v4870 = vextract.low.u32 %v4869
        %v4871 = vextract.high.u32 %v4869
        %v4872 = vmul.u32.u64.compose %v4868, %v4863
        %v4873 = vextract.low.u32 %v4872
        %v4874 = vextract.high.u32 %v4872
        %v4875 = vmul.u32 %v4868, %v4859
        %v4876 = vadd.s32 %v4871, %v4873
        %vm4877 = vc.u32 %v4871, %v4873
        %v4878 = vadd.s32 %v4874, 1
        %v4879 = vsel %vm4877, %v4878, %v4874
        %v4880 = vadd.s32 %v4875, %v4879
        %v4881 = vadd.s32 %v4880, 536870912
        %v4882 = vshrl.u32 %v4881, 30
        %v4883 = vshll.u32 %v4882, 30
        %v4884 = vsub.s32 %v4880, %v4883
        %vm4885 = vcmp.lt.s32.totalorder %v4884, 0
        %v4886 = vsub.s32 0, %v4884
        %v4887 = vsel %vm4885, %v4886, %v4884
        %v4888 = vclz %v4887
        %v4889 = vsub.s32 %v4888, 2
        %vm4890 = vcmp.gt.s32.totalorder 0, %v4889
        %v4891 = vsel %vm4890, 0, %v4889
        %v4892 = vsub.s32 32, %v4891
        %v4893 = vshll.u32 %v4884, %v4891
        %v4894 = vshrl.u32 %v4876, %v4892
        %v4895 = vor.u32 %v4893, %v4894
        %v4896 = vsub.s32 4294967266, %v4891
        %v4897 = vadd.s32 %v4896, 127
        %v4898 = vshll.u32 %v4897, 23
        %v4899 = vor.u32 4788187, %v4898
        %v4900 = vand.u32 2147483647, %v4899
        %v4902 = vcvt.s32.f32 %v4895
        %v4903 = vmul.f32 %v4902, %v4900
        %v4904 = vxor.u32 %v4903, 2147483648
        %v4905 = vsel %vm4822, %v4904, %v4903
        %v4906 = vsub.s32 4, %v4882
        %v4907 = vsel %vm4822, %v4906, %v4882
        %v4908 = vsel %vm4821, %v4289, %v4905
        %v4909 = vsel %vm4821, 0, %v4907
        %v4910 = vcosq.f32.pop %v4908
        %v4911 = vsinq.f32.pop %v4908
        %vm4912 = vweird.f32 %v4289
        %v4913 = vadd.s32 %v4909, 3
        %v4914 = vand.u32 %v4913, 3
        %vm4915 = vcmp.lt.s32.totalorder %v4914, 2
        %vm4916 = vcmp.eq.s32.totalorder %v4914, 0
        %v4917 = vxor.u32 %v4911, 2147483648
        %v4918 = vsel %vm4916, %v4910, %v4917
        %vm4919 = vcmp.eq.s32.totalorder %v4914, 2
        %v4920 = vxor.u32 %v4910, 2147483648
        %v4921 = vsel %vm4919, %v4920, %v4911
        %v4922 = vsel %vm4915, %v4918, %v4921
        %v4923 = vsel %vm4912, nan, %v4922
        %v4924 = vand.u32 2147483647, %v4290
        %vm4925 = vcmp.le.f32.partialorder %v4924, 0.7853982
        %vm4926 = vcmp.lt.s32.totalorder %v4290, 0
        %v4927 = vand.u32 %v4290, 2139095040
        %v4928 = vshrl.u32 %v4927, 23
        %v4929 = vsub.s32 %v4928, 127
        %v4930 = vand.u32 2147483647, %v4290
        %v4931 = vand.u32 %v4930, 8388607
        %v4932 = vor.u32 %v4931, 8388608
        %v4933 = vsub.s32 0, %v4932
        %v4934 = vadd.s32 %v4929, 1
        %vm4935 = vcmp.gt.s32.totalorder %v4934, 0
        %v4936 = vsel %vm4935, %v4934, 0
        %v4937 = vshrl.u32 %v4936, 5
        %v4938 = vand.u32 %v4936, 31
        %v4939 = vsub.s32 32, %v4938
        %v4940 = vshrl.u32 683565275, %v4939
        %v4941 = vshll.u32 683565275, %v4938
        %v4942 = vshrl.u32 2475754826, %v4939
        %v4943 = vor.u32 %v4941, %v4942
        %v4944 = vshll.u32 2475754826, %v4938
        %v4945 = vshrl.u32 2131351028, %v4939
        %v4946 = vor.u32 %v4944, %v4945
        %v4947 = vshll.u32 2131351028, %v4938
        %v4948 = vshrl.u32 2102212464, %v4939
        %v4949 = vor.u32 %v4947, %v4948
        %v4950 = vshll.u32 2102212464, %v4938
        %v4951 = vshrl.u32 920167782, %v4939
        %v4952 = vor.u32 %v4950, %v4951
        %v4953 = vshll.u32 920167782, %v4938
        %v4954 = vshrl.u32 1326507024, %v4939
        %v4955 = vor.u32 %v4953, %v4954
        %vm4956 = vcmp.lt.s32.totalorder %v4937, 1
        %vm4957 = vcmp.lt.s32.totalorder %v4937, 2
        %vm4958 = vcmp.lt.s32.totalorder %v4937, 3
        %vm4959 = vcmp.lt.s32.totalorder %v4937, 4
        %v4960 = vsel %vm4956, %v4940, %v4943
        %v4961 = vsel %vm4959, %v4949, 2102212464
        %v4962 = vsel %vm4958, %v4946, %v4961
        %v4963 = vsel %vm4957, %v4960, %v4962
        %v4964 = vsel %vm4956, %v4943, %v4946
        %v4965 = vsel %vm4959, %v4952, 920167782
        %v4966 = vsel %vm4958, %v4949, %v4965
        %v4967 = vsel %vm4957, %v4964, %v4966
        %v4968 = vsel %vm4956, %v4946, %v4949
        %v4969 = vsel %vm4959, %v4955, 1326507024
        %v4970 = vsel %vm4958, %v4952, %v4969
        %v4971 = vsel %vm4957, %v4968, %v4970
        %v4972 = vshll.u32 %v4932, 8
        %v4973 = vmul.u32.u64.compose %v4972, %v4971
        %v4974 = vextract.low.u32 %v4973
        %v4975 = vextract.high.u32 %v4973
        %v4976 = vmul.u32.u64.compose %v4972, %v4967
        %v4977 = vextract.low.u32 %v4976
        %v4978 = vextract.high.u32 %v4976
        %v4979 = vmul.u32 %v4972, %v4963
        %v4980 = vadd.s32 %v4975, %v4977
        %vm4981 = vc.u32 %v4975, %v4977
        %v4982 = vadd.s32 %v4978, 1
        %v4983 = vsel %vm4981, %v4982, %v4978
        %v4984 = vadd.s32 %v4979, %v4983
        %v4985 = vadd.s32 %v4984, 536870912
        %v4986 = vshrl.u32 %v4985, 30
        %v4987 = vshll.u32 %v4986, 30
        %v4988 = vsub.s32 %v4984, %v4987
        %vm4989 = vcmp.lt.s32.totalorder %v4988, 0
        %v4990 = vsub.s32 0, %v4988
        %v4991 = vsel %vm4989, %v4990, %v4988
        %v4992 = vclz %v4991
        %v4993 = vsub.s32 %v4992, 2
        %vm4994 = vcmp.gt.s32.totalorder 0, %v4993
        %v4995 = vsel %vm4994, 0, %v4993
        %v4996 = vsub.s32 32, %v4995
        %v4997 = vshll.u32 %v4988, %v4995
        %v4998 = vshrl.u32 %v4980, %v4996
        %v4999 = vor.u32 %v4997, %v4998
        %v5000 = vsub.s32 4294967266, %v4995
        %v5001 = vadd.s32 %v5000, 127
        %v5002 = vshll.u32 %v5001, 23
        %v5003 = vor.u32 4788187, %v5002
        %v5004 = vand.u32 2147483647, %v5003
        %v5006 = vcvt.s32.f32 %v4999
        %v5007 = vmul.f32 %v5006, %v5004
        %v5008 = vxor.u32 %v5007, 2147483648
        %v5009 = vsel %vm4926, %v5008, %v5007
        %v5010 = vsub.s32 4, %v4986
        %v5011 = vsel %vm4926, %v5010, %v4986
        %v5012 = vsel %vm4925, %v4290, %v5009
        %v5013 = vsel %vm4925, 0, %v5011
        %v5014 = vcosq.f32.pop %v5012
        %v5015 = vsinq.f32.pop %v5012
        %vm5016 = vweird.f32 %v4290
        %v5017 = vadd.s32 %v5013, 3
        %v5018 = vand.u32 %v5017, 3
        %vm5019 = vcmp.lt.s32.totalorder %v5018, 2
        %vm5020 = vcmp.eq.s32.totalorder %v5018, 0
        %v5021 = vxor.u32 %v5015, 2147483648
        %v5022 = vsel %vm5020, %v5014, %v5021
        %vm5023 = vcmp.eq.s32.totalorder %v5018, 2
        %v5024 = vxor.u32 %v5014, 2147483648
        %v5025 = vsel %vm5023, %v5024, %v5015
        %v5026 = vsel %vm5019, %v5022, %v5025
        %v5027 = vsel %vm5016, nan, %v5026
        %v5028 = vand.u32 2147483647, %v4291
        %vm5029 = vcmp.le.f32.partialorder %v5028, 0.7853982
        %vm5030 = vcmp.lt.s32.totalorder %v4291, 0
        %v5031 = vand.u32 %v4291, 2139095040
        %v5032 = vshrl.u32 %v5031, 23
        %v5033 = vsub.s32 %v5032, 127
        %v5034 = vand.u32 2147483647, %v4291
        %v5035 = vand.u32 %v5034, 8388607
        %v5036 = vor.u32 %v5035, 8388608
        %v5037 = vsub.s32 0, %v5036
        %v5038 = vadd.s32 %v5033, 1
        %vm5039 = vcmp.gt.s32.totalorder %v5038, 0
        %v5040 = vsel %vm5039, %v5038, 0
        %v5041 = vshrl.u32 %v5040, 5
        %v5042 = vand.u32 %v5040, 31
        %v5043 = vsub.s32 32, %v5042
        %v5044 = vshrl.u32 683565275, %v5043
        %v5045 = vshll.u32 683565275, %v5042
        %v5046 = vshrl.u32 2475754826, %v5043
        %v5047 = vor.u32 %v5045, %v5046
        %v5048 = vshll.u32 2475754826, %v5042
        %v5049 = vshrl.u32 2131351028, %v5043
        %v5050 = vor.u32 %v5048, %v5049
        %v5051 = vshll.u32 2131351028, %v5042
        %v5052 = vshrl.u32 2102212464, %v5043
        %v5053 = vor.u32 %v5051, %v5052
        %v5054 = vshll.u32 2102212464, %v5042
        %v5055 = vshrl.u32 920167782, %v5043
        %v5056 = vor.u32 %v5054, %v5055
        %v5057 = vshll.u32 920167782, %v5042
        %v5058 = vshrl.u32 1326507024, %v5043
        %v5059 = vor.u32 %v5057, %v5058
        %vm5060 = vcmp.lt.s32.totalorder %v5041, 1
        %vm5061 = vcmp.lt.s32.totalorder %v5041, 2
        %vm5062 = vcmp.lt.s32.totalorder %v5041, 3
        %vm5063 = vcmp.lt.s32.totalorder %v5041, 4
        %v5064 = vsel %vm5060, %v5044, %v5047
        %v5065 = vsel %vm5063, %v5053, 2102212464
        %v5066 = vsel %vm5062, %v5050, %v5065
        %v5067 = vsel %vm5061, %v5064, %v5066
        %v5068 = vsel %vm5060, %v5047, %v5050
        %v5069 = vsel %vm5063, %v5056, 920167782
        %v5070 = vsel %vm5062, %v5053, %v5069
        %v5071 = vsel %vm5061, %v5068, %v5070
        %v5072 = vsel %vm5060, %v5050, %v5053
        %v5073 = vsel %vm5063, %v5059, 1326507024
        %v5074 = vsel %vm5062, %v5056, %v5073
        %v5075 = vsel %vm5061, %v5072, %v5074
        %v5076 = vshll.u32 %v5036, 8
        %v5077 = vmul.u32.u64.compose %v5076, %v5075
        %v5078 = vextract.low.u32 %v5077
        %v5079 = vextract.high.u32 %v5077
        %v5080 = vmul.u32.u64.compose %v5076, %v5071
        %v5081 = vextract.low.u32 %v5080
        %v5082 = vextract.high.u32 %v5080
        %v5083 = vmul.u32 %v5076, %v5067
        %v5084 = vadd.s32 %v5079, %v5081
        %vm5085 = vc.u32 %v5079, %v5081
        %v5086 = vadd.s32 %v5082, 1
        %v5087 = vsel %vm5085, %v5086, %v5082
        %v5088 = vadd.s32 %v5083, %v5087
        %v5089 = vadd.s32 %v5088, 536870912
        %v5090 = vshrl.u32 %v5089, 30
        %v5091 = vshll.u32 %v5090, 30
        %v5092 = vsub.s32 %v5088, %v5091
        %vm5093 = vcmp.lt.s32.totalorder %v5092, 0
        %v5094 = vsub.s32 0, %v5092
        %v5095 = vsel %vm5093, %v5094, %v5092
        %v5096 = vclz %v5095
        %v5097 = vsub.s32 %v5096, 2
        %vm5098 = vcmp.gt.s32.totalorder 0, %v5097
        %v5099 = vsel %vm5098, 0, %v5097
        %v5100 = vsub.s32 32, %v5099
        %v5101 = vshll.u32 %v5092, %v5099
        %v5102 = vshrl.u32 %v5084, %v5100
        %v5103 = vor.u32 %v5101, %v5102
        %v5104 = vsub.s32 4294967266, %v5099
        %v5105 = vadd.s32 %v5104, 127
        %v5106 = vshll.u32 %v5105, 23
        %v5107 = vor.u32 4788187, %v5106
        %v5108 = vand.u32 2147483647, %v5107
        %v5110 = vcvt.s32.f32 %v5103
        %v5111 = vmul.f32 %v5110, %v5108
        %v5112 = vxor.u32 %v5111, 2147483648
        %v5113 = vsel %vm5030, %v5112, %v5111
        %v5114 = vsub.s32 4, %v5090
        %v5115 = vsel %vm5030, %v5114, %v5090
        %v5116 = vsel %vm5029, %v4291, %v5113
        %v5117 = vsel %vm5029, 0, %v5115
        %v5118 = vcosq.f32.pop %v5116
        %v5119 = vsinq.f32.pop %v5116
        %vm5120 = vweird.f32 %v4291
        %v5121 = vadd.s32 %v5117, 3
        %v5122 = vand.u32 %v5121, 3
        %vm5123 = vcmp.lt.s32.totalorder %v5122, 2
        %vm5124 = vcmp.eq.s32.totalorder %v5122, 0
        %v5125 = vxor.u32 %v5119, 2147483648
        %v5126 = vsel %vm5124, %v5118, %v5125
        %vm5127 = vcmp.eq.s32.totalorder %v5122, 2
        %v5128 = vxor.u32 %v5118, 2147483648
        %v5129 = vsel %vm5127, %v5128, %v5119
        %v5130 = vsel %vm5123, %v5126, %v5129
        %v5131 = vsel %vm5120, nan, %v5130
        %v5132 = vand.u32 2147483647, %v4292
        %vm5133 = vcmp.le.f32.partialorder %v5132, 0.7853982
        %vm5134 = vcmp.lt.s32.totalorder %v4292, 0
        %v5135 = vand.u32 %v4292, 2139095040
        %v5136 = vshrl.u32 %v5135, 23
        %v5137 = vsub.s32 %v5136, 127
        %v5138 = vand.u32 2147483647, %v4292
        %v5139 = vand.u32 %v5138, 8388607
        %v5140 = vor.u32 %v5139, 8388608
        %v5141 = vsub.s32 0, %v5140
        %v5142 = vadd.s32 %v5137, 1
        %vm5143 = vcmp.gt.s32.totalorder %v5142, 0
        %v5144 = vsel %vm5143, %v5142, 0
        %v5145 = vshrl.u32 %v5144, 5
        %v5146 = vand.u32 %v5144, 31
        %v5147 = vsub.s32 32, %v5146
        %v5148 = vshrl.u32 683565275, %v5147
        %v5149 = vshll.u32 683565275, %v5146
        %v5150 = vshrl.u32 2475754826, %v5147
        %v5151 = vor.u32 %v5149, %v5150
        %v5152 = vshll.u32 2475754826, %v5146
        %v5153 = vshrl.u32 2131351028, %v5147
        %v5154 = vor.u32 %v5152, %v5153
        %v5155 = vshll.u32 2131351028, %v5146
        %v5156 = vshrl.u32 2102212464, %v5147
        %v5157 = vor.u32 %v5155, %v5156
        %v5158 = vshll.u32 2102212464, %v5146
        %v5159 = vshrl.u32 920167782, %v5147
        %v5160 = vor.u32 %v5158, %v5159
        %v5161 = vshll.u32 920167782, %v5146
        %v5162 = vshrl.u32 1326507024, %v5147
        %v5163 = vor.u32 %v5161, %v5162
        %vm5164 = vcmp.lt.s32.totalorder %v5145, 1
        %vm5165 = vcmp.lt.s32.totalorder %v5145, 2
        %vm5166 = vcmp.lt.s32.totalorder %v5145, 3
        %vm5167 = vcmp.lt.s32.totalorder %v5145, 4
        %v5168 = vsel %vm5164, %v5148, %v5151
        %v5169 = vsel %vm5167, %v5157, 2102212464
        %v5170 = vsel %vm5166, %v5154, %v5169
        %v5171 = vsel %vm5165, %v5168, %v5170
        %v5172 = vsel %vm5164, %v5151, %v5154
        %v5173 = vsel %vm5167, %v5160, 920167782
        %v5174 = vsel %vm5166, %v5157, %v5173
        %v5175 = vsel %vm5165, %v5172, %v5174
        %v5176 = vsel %vm5164, %v5154, %v5157
        %v5177 = vsel %vm5167, %v5163, 1326507024
        %v5178 = vsel %vm5166, %v5160, %v5177
        %v5179 = vsel %vm5165, %v5176, %v5178
        %v5180 = vshll.u32 %v5140, 8
        %v5181 = vmul.u32.u64.compose %v5180, %v5179
        %v5182 = vextract.low.u32 %v5181
        %v5183 = vextract.high.u32 %v5181
        %v5184 = vmul.u32.u64.compose %v5180, %v5175
        %v5185 = vextract.low.u32 %v5184
        %v5186 = vextract.high.u32 %v5184
        %v5187 = vmul.u32 %v5180, %v5171
        %v5188 = vadd.s32 %v5183, %v5185
        %vm5189 = vc.u32 %v5183, %v5185
        %v5190 = vadd.s32 %v5186, 1
        %v5191 = vsel %vm5189, %v5190, %v5186
        %v5192 = vadd.s32 %v5187, %v5191
        %v5193 = vadd.s32 %v5192, 536870912
        %v5194 = vshrl.u32 %v5193, 30
        %v5195 = vshll.u32 %v5194, 30
        %v5196 = vsub.s32 %v5192, %v5195
        %vm5197 = vcmp.lt.s32.totalorder %v5196, 0
        %v5198 = vsub.s32 0, %v5196
        %v5199 = vsel %vm5197, %v5198, %v5196
        %v5200 = vclz %v5199
        %v5201 = vsub.s32 %v5200, 2
        %vm5202 = vcmp.gt.s32.totalorder 0, %v5201
        %v5203 = vsel %vm5202, 0, %v5201
        %v5204 = vsub.s32 32, %v5203
        %v5205 = vshll.u32 %v5196, %v5203
        %v5206 = vshrl.u32 %v5188, %v5204
        %v5207 = vor.u32 %v5205, %v5206
        %v5208 = vsub.s32 4294967266, %v5203
        %v5209 = vadd.s32 %v5208, 127
        %v5210 = vshll.u32 %v5209, 23
        %v5211 = vor.u32 4788187, %v5210
        %v5212 = vand.u32 2147483647, %v5211
        %v5214 = vcvt.s32.f32 %v5207
        %v5215 = vmul.f32 %v5214, %v5212
        %v5216 = vxor.u32 %v5215, 2147483648
        %v5217 = vsel %vm5134, %v5216, %v5215
        %v5218 = vsub.s32 4, %v5194
        %v5219 = vsel %vm5134, %v5218, %v5194
        %v5220 = vsel %vm5133, %v4292, %v5217
        %v5221 = vsel %vm5133, 0, %v5219
        %v5222 = vcosq.f32.pop %v5220
        %v5223 = vsinq.f32.pop %v5220
        %vm5224 = vweird.f32 %v4292
        %v5225 = vadd.s32 %v5221, 3
        %v5226 = vand.u32 %v5225, 3
        %vm5227 = vcmp.lt.s32.totalorder %v5226, 2
        %vm5228 = vcmp.eq.s32.totalorder %v5226, 0
        %v5229 = vxor.u32 %v5223, 2147483648
        %v5230 = vsel %vm5228, %v5222, %v5229
        %vm5231 = vcmp.eq.s32.totalorder %v5226, 2
        %v5232 = vxor.u32 %v5222, 2147483648
        %v5233 = vsel %vm5231, %v5232, %v5223
        %v5234 = vsel %vm5227, %v5230, %v5233
        %v5235 = vsel %vm5224, nan, %v5234
        %v5236 = vand.u32 2147483647, %v4293
        %vm5237 = vcmp.le.f32.partialorder %v5236, 0.7853982
        %vm5238 = vcmp.lt.s32.totalorder %v4293, 0
        %v5239 = vand.u32 %v4293, 2139095040
        %v5240 = vshrl.u32 %v5239, 23
        %v5241 = vsub.s32 %v5240, 127
        %v5242 = vand.u32 2147483647, %v4293
        %v5243 = vand.u32 %v5242, 8388607
        %v5244 = vor.u32 %v5243, 8388608
        %v5245 = vsub.s32 0, %v5244
        %v5246 = vadd.s32 %v5241, 1
        %vm5247 = vcmp.gt.s32.totalorder %v5246, 0
        %v5248 = vsel %vm5247, %v5246, 0
        %v5249 = vshrl.u32 %v5248, 5
        %v5250 = vand.u32 %v5248, 31
        %v5251 = vsub.s32 32, %v5250
        %v5252 = vshrl.u32 683565275, %v5251
        %v5253 = vshll.u32 683565275, %v5250
        %v5254 = vshrl.u32 2475754826, %v5251
        %v5255 = vor.u32 %v5253, %v5254
        %v5256 = vshll.u32 2475754826, %v5250
        %v5257 = vshrl.u32 2131351028, %v5251
        %v5258 = vor.u32 %v5256, %v5257
        %v5259 = vshll.u32 2131351028, %v5250
        %v5260 = vshrl.u32 2102212464, %v5251
        %v5261 = vor.u32 %v5259, %v5260
        %v5262 = vshll.u32 2102212464, %v5250
        %v5263 = vshrl.u32 920167782, %v5251
        %v5264 = vor.u32 %v5262, %v5263
        %v5265 = vshll.u32 920167782, %v5250
        %v5266 = vshrl.u32 1326507024, %v5251
        %v5267 = vor.u32 %v5265, %v5266
        %vm5268 = vcmp.lt.s32.totalorder %v5249, 1
        %vm5269 = vcmp.lt.s32.totalorder %v5249, 2
        %vm5270 = vcmp.lt.s32.totalorder %v5249, 3
        %vm5271 = vcmp.lt.s32.totalorder %v5249, 4
        %v5272 = vsel %vm5268, %v5252, %v5255
        %v5273 = vsel %vm5271, %v5261, 2102212464
        %v5274 = vsel %vm5270, %v5258, %v5273
        %v5275 = vsel %vm5269, %v5272, %v5274
        %v5276 = vsel %vm5268, %v5255, %v5258
        %v5277 = vsel %vm5271, %v5264, 920167782
        %v5278 = vsel %vm5270, %v5261, %v5277
        %v5279 = vsel %vm5269, %v5276, %v5278
        %v5280 = vsel %vm5268, %v5258, %v5261
        %v5281 = vsel %vm5271, %v5267, 1326507024
        %v5282 = vsel %vm5270, %v5264, %v5281
        %v5283 = vsel %vm5269, %v5280, %v5282
        %v5284 = vshll.u32 %v5244, 8
        %v5285 = vmul.u32.u64.compose %v5284, %v5283
        %v5286 = vextract.low.u32 %v5285
        %v5287 = vextract.high.u32 %v5285
        %v5288 = vmul.u32.u64.compose %v5284, %v5279
        %v5289 = vextract.low.u32 %v5288
        %v5290 = vextract.high.u32 %v5288
        %v5291 = vmul.u32 %v5284, %v5275
        %v5292 = vadd.s32 %v5287, %v5289
        %vm5293 = vc.u32 %v5287, %v5289
        %v5294 = vadd.s32 %v5290, 1
        %v5295 = vsel %vm5293, %v5294, %v5290
        %v5296 = vadd.s32 %v5291, %v5295
        %v5297 = vadd.s32 %v5296, 536870912
        %v5298 = vshrl.u32 %v5297, 30
        %v5299 = vshll.u32 %v5298, 30
        %v5300 = vsub.s32 %v5296, %v5299
        %vm5301 = vcmp.lt.s32.totalorder %v5300, 0
        %v5302 = vsub.s32 0, %v5300
        %v5303 = vsel %vm5301, %v5302, %v5300
        %v5304 = vclz %v5303
        %v5305 = vsub.s32 %v5304, 2
        %vm5306 = vcmp.gt.s32.totalorder 0, %v5305
        %v5307 = vsel %vm5306, 0, %v5305
        %v5308 = vsub.s32 32, %v5307
        %v5309 = vshll.u32 %v5300, %v5307
        %v5310 = vshrl.u32 %v5292, %v5308
        %v5311 = vor.u32 %v5309, %v5310
        %v5312 = vsub.s32 4294967266, %v5307
        %v5313 = vadd.s32 %v5312, 127
        %v5314 = vshll.u32 %v5313, 23
        %v5315 = vor.u32 4788187, %v5314
        %v5316 = vand.u32 2147483647, %v5315
        %v5318 = vcvt.s32.f32 %v5311
        %v5319 = vmul.f32 %v5318, %v5316
        %v5320 = vxor.u32 %v5319, 2147483648
        %v5321 = vsel %vm5238, %v5320, %v5319
        %v5322 = vsub.s32 4, %v5298
        %v5323 = vsel %vm5238, %v5322, %v5298
        %v5324 = vsel %vm5237, %v4293, %v5321
        %v5325 = vsel %vm5237, 0, %v5323
        %v5326 = vcosq.f32.pop %v5324
        %v5327 = vsinq.f32.pop %v5324
        %vm5328 = vweird.f32 %v4293
        %v5329 = vadd.s32 %v5325, 3
        %v5330 = vand.u32 %v5329, 3
        %vm5331 = vcmp.lt.s32.totalorder %v5330, 2
        %vm5332 = vcmp.eq.s32.totalorder %v5330, 0
        %v5333 = vxor.u32 %v5327, 2147483648
        %v5334 = vsel %vm5332, %v5326, %v5333
        %vm5335 = vcmp.eq.s32.totalorder %v5330, 2
        %v5336 = vxor.u32 %v5326, 2147483648
        %v5337 = vsel %vm5335, %v5336, %v5327
        %v5338 = vsel %vm5331, %v5334, %v5337
        %v5339 = vsel %vm5328, nan, %v5338
        %v5340 = vand.u32 2147483647, %v4294
        %vm5341 = vcmp.le.f32.partialorder %v5340, 0.7853982
        %vm5342 = vcmp.lt.s32.totalorder %v4294, 0
        %v5343 = vand.u32 %v4294, 2139095040
        %v5344 = vshrl.u32 %v5343, 23
        %v5345 = vsub.s32 %v5344, 127
        %v5346 = vand.u32 2147483647, %v4294
        %v5347 = vand.u32 %v5346, 8388607
        %v5348 = vor.u32 %v5347, 8388608
        %v5349 = vsub.s32 0, %v5348
        %v5350 = vadd.s32 %v5345, 1
        %vm5351 = vcmp.gt.s32.totalorder %v5350, 0
        %v5352 = vsel %vm5351, %v5350, 0
        %v5353 = vshrl.u32 %v5352, 5
        %v5354 = vand.u32 %v5352, 31
        %v5355 = vsub.s32 32, %v5354
        %v5356 = vshrl.u32 683565275, %v5355
        %v5357 = vshll.u32 683565275, %v5354
        %v5358 = vshrl.u32 2475754826, %v5355
        %v5359 = vor.u32 %v5357, %v5358
        %v5360 = vshll.u32 2475754826, %v5354
        %v5361 = vshrl.u32 2131351028, %v5355
        %v5362 = vor.u32 %v5360, %v5361
        %v5363 = vshll.u32 2131351028, %v5354
        %v5364 = vshrl.u32 2102212464, %v5355
        %v5365 = vor.u32 %v5363, %v5364
        %v5366 = vshll.u32 2102212464, %v5354
        %v5367 = vshrl.u32 920167782, %v5355
        %v5368 = vor.u32 %v5366, %v5367
        %v5369 = vshll.u32 920167782, %v5354
        %v5370 = vshrl.u32 1326507024, %v5355
        %v5371 = vor.u32 %v5369, %v5370
        %vm5372 = vcmp.lt.s32.totalorder %v5353, 1
        %vm5373 = vcmp.lt.s32.totalorder %v5353, 2
        %vm5374 = vcmp.lt.s32.totalorder %v5353, 3
        %vm5375 = vcmp.lt.s32.totalorder %v5353, 4
        %v5376 = vsel %vm5372, %v5356, %v5359
        %v5377 = vsel %vm5375, %v5365, 2102212464
        %v5378 = vsel %vm5374, %v5362, %v5377
        %v5379 = vsel %vm5373, %v5376, %v5378
        %v5380 = vsel %vm5372, %v5359, %v5362
        %v5381 = vsel %vm5375, %v5368, 920167782
        %v5382 = vsel %vm5374, %v5365, %v5381
        %v5383 = vsel %vm5373, %v5380, %v5382
        %v5384 = vsel %vm5372, %v5362, %v5365
        %v5385 = vsel %vm5375, %v5371, 1326507024
        %v5386 = vsel %vm5374, %v5368, %v5385
        %v5387 = vsel %vm5373, %v5384, %v5386
        %v5388 = vshll.u32 %v5348, 8
        %v5389 = vmul.u32.u64.compose %v5388, %v5387
        %v5390 = vextract.low.u32 %v5389
        %v5391 = vextract.high.u32 %v5389
        %v5392 = vmul.u32.u64.compose %v5388, %v5383
        %v5393 = vextract.low.u32 %v5392
        %v5394 = vextract.high.u32 %v5392
        %v5395 = vmul.u32 %v5388, %v5379
        %v5396 = vadd.s32 %v5391, %v5393
        %vm5397 = vc.u32 %v5391, %v5393
        %v5398 = vadd.s32 %v5394, 1
        %v5399 = vsel %vm5397, %v5398, %v5394
        %v5400 = vadd.s32 %v5395, %v5399
        %v5401 = vadd.s32 %v5400, 536870912
        %v5402 = vshrl.u32 %v5401, 30
        %v5403 = vshll.u32 %v5402, 30
        %v5404 = vsub.s32 %v5400, %v5403
        %vm5405 = vcmp.lt.s32.totalorder %v5404, 0
        %v5406 = vsub.s32 0, %v5404
        %v5407 = vsel %vm5405, %v5406, %v5404
        %v5408 = vclz %v5407
        %v5409 = vsub.s32 %v5408, 2
        %vm5410 = vcmp.gt.s32.totalorder 0, %v5409
        %v5411 = vsel %vm5410, 0, %v5409
        %v5412 = vsub.s32 32, %v5411
        %v5413 = vshll.u32 %v5404, %v5411
        %v5414 = vshrl.u32 %v5396, %v5412
        %v5415 = vor.u32 %v5413, %v5414
        %v5416 = vsub.s32 4294967266, %v5411
        %v5417 = vadd.s32 %v5416, 127
        %v5418 = vshll.u32 %v5417, 23
        %v5419 = vor.u32 4788187, %v5418
        %v5420 = vand.u32 2147483647, %v5419
        %v5422 = vcvt.s32.f32 %v5415
        %v5423 = vmul.f32 %v5422, %v5420
        %v5424 = vxor.u32 %v5423, 2147483648
        %v5425 = vsel %vm5342, %v5424, %v5423
        %v5426 = vsub.s32 4, %v5402
        %v5427 = vsel %vm5342, %v5426, %v5402
        %v5428 = vsel %vm5341, %v4294, %v5425
        %v5429 = vsel %vm5341, 0, %v5427
        %v5430 = vcosq.f32.pop %v5428
        %v5431 = vsinq.f32.pop %v5428
        %vm5432 = vweird.f32 %v4294
        %v5433 = vadd.s32 %v5429, 3
        %v5434 = vand.u32 %v5433, 3
        %vm5435 = vcmp.lt.s32.totalorder %v5434, 2
        %vm5436 = vcmp.eq.s32.totalorder %v5434, 0
        %v5437 = vxor.u32 %v5431, 2147483648
        %v5438 = vsel %vm5436, %v5430, %v5437
        %vm5439 = vcmp.eq.s32.totalorder %v5434, 2
        %v5440 = vxor.u32 %v5430, 2147483648
        %v5441 = vsel %vm5439, %v5440, %v5431
        %v5442 = vsel %vm5435, %v5438, %v5441
        %v5443 = vsel %vm5432, nan, %v5442
        %v5444 = vand.u32 2147483647, %v4295
        %vm5445 = vcmp.le.f32.partialorder %v5444, 0.7853982
        %vm5446 = vcmp.lt.s32.totalorder %v4295, 0
        %v5447 = vand.u32 %v4295, 2139095040
        %v5448 = vshrl.u32 %v5447, 23
        %v5449 = vsub.s32 %v5448, 127
        %v5450 = vand.u32 2147483647, %v4295
        %v5451 = vand.u32 %v5450, 8388607
        %v5452 = vor.u32 %v5451, 8388608
        %v5453 = vsub.s32 0, %v5452
        %v5454 = vadd.s32 %v5449, 1
        %vm5455 = vcmp.gt.s32.totalorder %v5454, 0
        %v5456 = vsel %vm5455, %v5454, 0
        %v5457 = vshrl.u32 %v5456, 5
        %v5458 = vand.u32 %v5456, 31
        %v5459 = vsub.s32 32, %v5458
        %v5460 = vshrl.u32 683565275, %v5459
        %v5461 = vshll.u32 683565275, %v5458
        %v5462 = vshrl.u32 2475754826, %v5459
        %v5463 = vor.u32 %v5461, %v5462
        %v5464 = vshll.u32 2475754826, %v5458
        %v5465 = vshrl.u32 2131351028, %v5459
        %v5466 = vor.u32 %v5464, %v5465
        %v5467 = vshll.u32 2131351028, %v5458
        %v5468 = vshrl.u32 2102212464, %v5459
        %v5469 = vor.u32 %v5467, %v5468
        %v5470 = vshll.u32 2102212464, %v5458
        %v5471 = vshrl.u32 920167782, %v5459
        %v5472 = vor.u32 %v5470, %v5471
        %v5473 = vshll.u32 920167782, %v5458
        %v5474 = vshrl.u32 1326507024, %v5459
        %v5475 = vor.u32 %v5473, %v5474
        %vm5476 = vcmp.lt.s32.totalorder %v5457, 1
        %vm5477 = vcmp.lt.s32.totalorder %v5457, 2
        %vm5478 = vcmp.lt.s32.totalorder %v5457, 3
        %vm5479 = vcmp.lt.s32.totalorder %v5457, 4
        %v5480 = vsel %vm5476, %v5460, %v5463
        %v5481 = vsel %vm5479, %v5469, 2102212464
        %v5482 = vsel %vm5478, %v5466, %v5481
        %v5483 = vsel %vm5477, %v5480, %v5482
        %v5484 = vsel %vm5476, %v5463, %v5466
        %v5485 = vsel %vm5479, %v5472, 920167782
        %v5486 = vsel %vm5478, %v5469, %v5485
        %v5487 = vsel %vm5477, %v5484, %v5486
        %v5488 = vsel %vm5476, %v5466, %v5469
        %v5489 = vsel %vm5479, %v5475, 1326507024
        %v5490 = vsel %vm5478, %v5472, %v5489
        %v5491 = vsel %vm5477, %v5488, %v5490
        %v5492 = vshll.u32 %v5452, 8
        %v5493 = vmul.u32.u64.compose %v5492, %v5491
        %v5494 = vextract.low.u32 %v5493
        %v5495 = vextract.high.u32 %v5493
        %v5496 = vmul.u32.u64.compose %v5492, %v5487
        %v5497 = vextract.low.u32 %v5496
        %v5498 = vextract.high.u32 %v5496
        %v5499 = vmul.u32 %v5492, %v5483
        %v5500 = vadd.s32 %v5495, %v5497
        %vm5501 = vc.u32 %v5495, %v5497
        %v5502 = vadd.s32 %v5498, 1
        %v5503 = vsel %vm5501, %v5502, %v5498
        %v5504 = vadd.s32 %v5499, %v5503
        %v5505 = vadd.s32 %v5504, 536870912
        %v5506 = vshrl.u32 %v5505, 30
        %v5507 = vshll.u32 %v5506, 30
        %v5508 = vsub.s32 %v5504, %v5507
        %vm5509 = vcmp.lt.s32.totalorder %v5508, 0
        %v5510 = vsub.s32 0, %v5508
        %v5511 = vsel %vm5509, %v5510, %v5508
        %v5512 = vclz %v5511
        %v5513 = vsub.s32 %v5512, 2
        %vm5514 = vcmp.gt.s32.totalorder 0, %v5513
        %v5515 = vsel %vm5514, 0, %v5513
        %v5516 = vsub.s32 32, %v5515
        %v5517 = vshll.u32 %v5508, %v5515
        %v5518 = vshrl.u32 %v5500, %v5516
        %v5519 = vor.u32 %v5517, %v5518
        %v5520 = vsub.s32 4294967266, %v5515
        %v5521 = vadd.s32 %v5520, 127
        %v5522 = vshll.u32 %v5521, 23
        %v5523 = vor.u32 4788187, %v5522
        %v5524 = vand.u32 2147483647, %v5523
        %v5526 = vcvt.s32.f32 %v5519
        %v5527 = vmul.f32 %v5526, %v5524
        %v5528 = vxor.u32 %v5527, 2147483648
        %v5529 = vsel %vm5446, %v5528, %v5527
        %v5530 = vsub.s32 4, %v5506
        %v5531 = vsel %vm5446, %v5530, %v5506
        %v5532 = vsel %vm5445, %v4295, %v5529
        %v5533 = vsel %vm5445, 0, %v5531
        %v5534 = vcosq.f32.pop %v5532
        %v5535 = vsinq.f32.pop %v5532
        %vm5536 = vweird.f32 %v4295
        %v5537 = vadd.s32 %v5533, 3
        %v5538 = vand.u32 %v5537, 3
        %vm5539 = vcmp.lt.s32.totalorder %v5538, 2
        %vm5540 = vcmp.eq.s32.totalorder %v5538, 0
        %v5541 = vxor.u32 %v5535, 2147483648
        %v5542 = vsel %vm5540, %v5534, %v5541
        %vm5543 = vcmp.eq.s32.totalorder %v5538, 2
        %v5544 = vxor.u32 %v5534, 2147483648
        %v5545 = vsel %vm5543, %v5544, %v5535
        %v5546 = vsel %vm5539, %v5542, %v5545
        %v5547 = vsel %vm5536, nan, %v5546
        %v5548 = vand.u32 2147483647, %v4296
        %vm5549 = vcmp.le.f32.partialorder %v5548, 0.7853982
        %vm5550 = vcmp.lt.s32.totalorder %v4296, 0
        %v5551 = vand.u32 %v4296, 2139095040
        %v5552 = vshrl.u32 %v5551, 23
        %v5553 = vsub.s32 %v5552, 127
        %v5554 = vand.u32 2147483647, %v4296
        %v5555 = vand.u32 %v5554, 8388607
        %v5556 = vor.u32 %v5555, 8388608
        %v5557 = vsub.s32 0, %v5556
        %v5558 = vadd.s32 %v5553, 1
        %vm5559 = vcmp.gt.s32.totalorder %v5558, 0
        %v5560 = vsel %vm5559, %v5558, 0
        %v5561 = vshrl.u32 %v5560, 5
        %v5562 = vand.u32 %v5560, 31
        %v5563 = vsub.s32 32, %v5562
        %v5564 = vshrl.u32 683565275, %v5563
        %v5565 = vshll.u32 683565275, %v5562
        %v5566 = vshrl.u32 2475754826, %v5563
        %v5567 = vor.u32 %v5565, %v5566
        %v5568 = vshll.u32 2475754826, %v5562
        %v5569 = vshrl.u32 2131351028, %v5563
        %v5570 = vor.u32 %v5568, %v5569
        %v5571 = vshll.u32 2131351028, %v5562
        %v5572 = vshrl.u32 2102212464, %v5563
        %v5573 = vor.u32 %v5571, %v5572
        %v5574 = vshll.u32 2102212464, %v5562
        %v5575 = vshrl.u32 920167782, %v5563
        %v5576 = vor.u32 %v5574, %v5575
        %v5577 = vshll.u32 920167782, %v5562
        %v5578 = vshrl.u32 1326507024, %v5563
        %v5579 = vor.u32 %v5577, %v5578
        %vm5580 = vcmp.lt.s32.totalorder %v5561, 1
        %vm5581 = vcmp.lt.s32.totalorder %v5561, 2
        %vm5582 = vcmp.lt.s32.totalorder %v5561, 3
        %vm5583 = vcmp.lt.s32.totalorder %v5561, 4
        %v5584 = vsel %vm5580, %v5564, %v5567
        %v5585 = vsel %vm5583, %v5573, 2102212464
        %v5586 = vsel %vm5582, %v5570, %v5585
        %v5587 = vsel %vm5581, %v5584, %v5586
        %v5588 = vsel %vm5580, %v5567, %v5570
        %v5589 = vsel %vm5583, %v5576, 920167782
        %v5590 = vsel %vm5582, %v5573, %v5589
        %v5591 = vsel %vm5581, %v5588, %v5590
        %v5592 = vsel %vm5580, %v5570, %v5573
        %v5593 = vsel %vm5583, %v5579, 1326507024
        %v5594 = vsel %vm5582, %v5576, %v5593
        %v5595 = vsel %vm5581, %v5592, %v5594
        %v5596 = vshll.u32 %v5556, 8
        %v5597 = vmul.u32.u64.compose %v5596, %v5595
        %v5598 = vextract.low.u32 %v5597
        %v5599 = vextract.high.u32 %v5597
        %v5600 = vmul.u32.u64.compose %v5596, %v5591
        %v5601 = vextract.low.u32 %v5600
        %v5602 = vextract.high.u32 %v5600
        %v5603 = vmul.u32 %v5596, %v5587
        %v5604 = vadd.s32 %v5599, %v5601
        %vm5605 = vc.u32 %v5599, %v5601
        %v5606 = vadd.s32 %v5602, 1
        %v5607 = vsel %vm5605, %v5606, %v5602
        %v5608 = vadd.s32 %v5603, %v5607
        %v5609 = vadd.s32 %v5608, 536870912
        %v5610 = vshrl.u32 %v5609, 30
        %v5611 = vshll.u32 %v5610, 30
        %v5612 = vsub.s32 %v5608, %v5611
        %vm5613 = vcmp.lt.s32.totalorder %v5612, 0
        %v5614 = vsub.s32 0, %v5612
        %v5615 = vsel %vm5613, %v5614, %v5612
        %v5616 = vclz %v5615
        %v5617 = vsub.s32 %v5616, 2
        %vm5618 = vcmp.gt.s32.totalorder 0, %v5617
        %v5619 = vsel %vm5618, 0, %v5617
        %v5620 = vsub.s32 32, %v5619
        %v5621 = vshll.u32 %v5612, %v5619
        %v5622 = vshrl.u32 %v5604, %v5620
        %v5623 = vor.u32 %v5621, %v5622
        %v5624 = vsub.s32 4294967266, %v5619
        %v5625 = vadd.s32 %v5624, 127
        %v5626 = vshll.u32 %v5625, 23
        %v5627 = vor.u32 4788187, %v5626
        %v5628 = vand.u32 2147483647, %v5627
        %v5630 = vcvt.s32.f32 %v5623
        %v5631 = vmul.f32 %v5630, %v5628
        %v5632 = vxor.u32 %v5631, 2147483648
        %v5633 = vsel %vm5550, %v5632, %v5631
        %v5634 = vsub.s32 4, %v5610
        %v5635 = vsel %vm5550, %v5634, %v5610
        %v5636 = vsel %vm5549, %v4296, %v5633
        %v5637 = vsel %vm5549, 0, %v5635
        %v5638 = vcosq.f32.pop %v5636
        %v5639 = vsinq.f32.pop %v5636
        %vm5640 = vweird.f32 %v4296
        %v5641 = vadd.s32 %v5637, 3
        %v5642 = vand.u32 %v5641, 3
        %vm5643 = vcmp.lt.s32.totalorder %v5642, 2
        %vm5644 = vcmp.eq.s32.totalorder %v5642, 0
        %v5645 = vxor.u32 %v5639, 2147483648
        %v5646 = vsel %vm5644, %v5638, %v5645
        %vm5647 = vcmp.eq.s32.totalorder %v5642, 2
        %v5648 = vxor.u32 %v5638, 2147483648
        %v5649 = vsel %vm5647, %v5648, %v5639
        %v5650 = vsel %vm5643, %v5646, %v5649
        %v5651 = vsel %vm5640, nan, %v5650
        %v5652 = vand.u32 2147483647, %v4297
        %vm5653 = vcmp.le.f32.partialorder %v5652, 0.7853982
        %vm5654 = vcmp.lt.s32.totalorder %v4297, 0
        %v5655 = vand.u32 %v4297, 2139095040
        %v5656 = vshrl.u32 %v5655, 23
        %v5657 = vsub.s32 %v5656, 127
        %v5658 = vand.u32 2147483647, %v4297
        %v5659 = vand.u32 %v5658, 8388607
        %v5660 = vor.u32 %v5659, 8388608
        %v5661 = vsub.s32 0, %v5660
        %v5662 = vadd.s32 %v5657, 1
        %vm5663 = vcmp.gt.s32.totalorder %v5662, 0
        %v5664 = vsel %vm5663, %v5662, 0
        %v5665 = vshrl.u32 %v5664, 5
        %v5666 = vand.u32 %v5664, 31
        %v5667 = vsub.s32 32, %v5666
        %v5668 = vshrl.u32 683565275, %v5667
        %v5669 = vshll.u32 683565275, %v5666
        %v5670 = vshrl.u32 2475754826, %v5667
        %v5671 = vor.u32 %v5669, %v5670
        %v5672 = vshll.u32 2475754826, %v5666
        %v5673 = vshrl.u32 2131351028, %v5667
        %v5674 = vor.u32 %v5672, %v5673
        %v5675 = vshll.u32 2131351028, %v5666
        %v5676 = vshrl.u32 2102212464, %v5667
        %v5677 = vor.u32 %v5675, %v5676
        %v5678 = vshll.u32 2102212464, %v5666
        %v5679 = vshrl.u32 920167782, %v5667
        %v5680 = vor.u32 %v5678, %v5679
        %v5681 = vshll.u32 920167782, %v5666
        %v5682 = vshrl.u32 1326507024, %v5667
        %v5683 = vor.u32 %v5681, %v5682
        %vm5684 = vcmp.lt.s32.totalorder %v5665, 1
        %vm5685 = vcmp.lt.s32.totalorder %v5665, 2
        %vm5686 = vcmp.lt.s32.totalorder %v5665, 3
        %vm5687 = vcmp.lt.s32.totalorder %v5665, 4
        %v5688 = vsel %vm5684, %v5668, %v5671
        %v5689 = vsel %vm5687, %v5677, 2102212464
        %v5690 = vsel %vm5686, %v5674, %v5689
        %v5691 = vsel %vm5685, %v5688, %v5690
        %v5692 = vsel %vm5684, %v5671, %v5674
        %v5693 = vsel %vm5687, %v5680, 920167782
        %v5694 = vsel %vm5686, %v5677, %v5693
        %v5695 = vsel %vm5685, %v5692, %v5694
        %v5696 = vsel %vm5684, %v5674, %v5677
        %v5697 = vsel %vm5687, %v5683, 1326507024
        %v5698 = vsel %vm5686, %v5680, %v5697
        %v5699 = vsel %vm5685, %v5696, %v5698
        %v5700 = vshll.u32 %v5660, 8
        %v5701 = vmul.u32.u64.compose %v5700, %v5699
        %v5702 = vextract.low.u32 %v5701
        %v5703 = vextract.high.u32 %v5701
        %v5704 = vmul.u32.u64.compose %v5700, %v5695
        %v5705 = vextract.low.u32 %v5704
        %v5706 = vextract.high.u32 %v5704
        %v5707 = vmul.u32 %v5700, %v5691
        %v5708 = vadd.s32 %v5703, %v5705
        %vm5709 = vc.u32 %v5703, %v5705
        %v5710 = vadd.s32 %v5706, 1
        %v5711 = vsel %vm5709, %v5710, %v5706
        %v5712 = vadd.s32 %v5707, %v5711
        %v5713 = vadd.s32 %v5712, 536870912
        %v5714 = vshrl.u32 %v5713, 30
        %v5715 = vshll.u32 %v5714, 30
        %v5716 = vsub.s32 %v5712, %v5715
        %vm5717 = vcmp.lt.s32.totalorder %v5716, 0
        %v5718 = vsub.s32 0, %v5716
        %v5719 = vsel %vm5717, %v5718, %v5716
        %v5720 = vclz %v5719
        %v5721 = vsub.s32 %v5720, 2
        %vm5722 = vcmp.gt.s32.totalorder 0, %v5721
        %v5723 = vsel %vm5722, 0, %v5721
        %v5724 = vsub.s32 32, %v5723
        %v5725 = vshll.u32 %v5716, %v5723
        %v5726 = vshrl.u32 %v5708, %v5724
        %v5727 = vor.u32 %v5725, %v5726
        %v5728 = vsub.s32 4294967266, %v5723
        %v5729 = vadd.s32 %v5728, 127
        %v5730 = vshll.u32 %v5729, 23
        %v5731 = vor.u32 4788187, %v5730
        %v5732 = vand.u32 2147483647, %v5731
        %v5734 = vcvt.s32.f32 %v5727
        %v5735 = vmul.f32 %v5734, %v5732
        %v5736 = vxor.u32 %v5735, 2147483648
        %v5737 = vsel %vm5654, %v5736, %v5735
        %v5738 = vsub.s32 4, %v5714
        %v5739 = vsel %vm5654, %v5738, %v5714
        %v5740 = vsel %vm5653, %v4297, %v5737
        %v5741 = vsel %vm5653, 0, %v5739
        %v5742 = vcosq.f32.pop %v5740
        %v5743 = vsinq.f32.pop %v5740
        %vm5744 = vweird.f32 %v4297
        %v5745 = vadd.s32 %v5741, 3
        %v5746 = vand.u32 %v5745, 3
        %vm5747 = vcmp.lt.s32.totalorder %v5746, 2
        %vm5748 = vcmp.eq.s32.totalorder %v5746, 0
        %v5749 = vxor.u32 %v5743, 2147483648
        %v5750 = vsel %vm5748, %v5742, %v5749
        %vm5751 = vcmp.eq.s32.totalorder %v5746, 2
        %v5752 = vxor.u32 %v5742, 2147483648
        %v5753 = vsel %vm5751, %v5752, %v5743
        %v5754 = vsel %vm5747, %v5750, %v5753
        %v5755 = vsel %vm5744, nan, %v5754
        %v5756 = vand.u32 2147483647, %v4298
        %vm5757 = vcmp.le.f32.partialorder %v5756, 0.7853982
        %vm5758 = vcmp.lt.s32.totalorder %v4298, 0
        %v5759 = vand.u32 %v4298, 2139095040
        %v5760 = vshrl.u32 %v5759, 23
        %v5761 = vsub.s32 %v5760, 127
        %v5762 = vand.u32 2147483647, %v4298
        %v5763 = vand.u32 %v5762, 8388607
        %v5764 = vor.u32 %v5763, 8388608
        %v5765 = vsub.s32 0, %v5764
        %v5766 = vadd.s32 %v5761, 1
        %vm5767 = vcmp.gt.s32.totalorder %v5766, 0
        %v5768 = vsel %vm5767, %v5766, 0
        %v5769 = vshrl.u32 %v5768, 5
        %v5770 = vand.u32 %v5768, 31
        %v5771 = vsub.s32 32, %v5770
        %v5772 = vshrl.u32 683565275, %v5771
        %v5773 = vshll.u32 683565275, %v5770
        %v5774 = vshrl.u32 2475754826, %v5771
        %v5775 = vor.u32 %v5773, %v5774
        %v5776 = vshll.u32 2475754826, %v5770
        %v5777 = vshrl.u32 2131351028, %v5771
        %v5778 = vor.u32 %v5776, %v5777
        %v5779 = vshll.u32 2131351028, %v5770
        %v5780 = vshrl.u32 2102212464, %v5771
        %v5781 = vor.u32 %v5779, %v5780
        %v5782 = vshll.u32 2102212464, %v5770
        %v5783 = vshrl.u32 920167782, %v5771
        %v5784 = vor.u32 %v5782, %v5783
        %v5785 = vshll.u32 920167782, %v5770
        %v5786 = vshrl.u32 1326507024, %v5771
        %v5787 = vor.u32 %v5785, %v5786
        %vm5788 = vcmp.lt.s32.totalorder %v5769, 1
        %vm5789 = vcmp.lt.s32.totalorder %v5769, 2
        %vm5790 = vcmp.lt.s32.totalorder %v5769, 3
        %vm5791 = vcmp.lt.s32.totalorder %v5769, 4
        %v5792 = vsel %vm5788, %v5772, %v5775
        %v5793 = vsel %vm5791, %v5781, 2102212464
        %v5794 = vsel %vm5790, %v5778, %v5793
        %v5795 = vsel %vm5789, %v5792, %v5794
        %v5796 = vsel %vm5788, %v5775, %v5778
        %v5797 = vsel %vm5791, %v5784, 920167782
        %v5798 = vsel %vm5790, %v5781, %v5797
        %v5799 = vsel %vm5789, %v5796, %v5798
        %v5800 = vsel %vm5788, %v5778, %v5781
        %v5801 = vsel %vm5791, %v5787, 1326507024
        %v5802 = vsel %vm5790, %v5784, %v5801
        %v5803 = vsel %vm5789, %v5800, %v5802
        %v5804 = vshll.u32 %v5764, 8
        %v5805 = vmul.u32.u64.compose %v5804, %v5803
        %v5806 = vextract.low.u32 %v5805
        %v5807 = vextract.high.u32 %v5805
        %v5808 = vmul.u32.u64.compose %v5804, %v5799
        %v5809 = vextract.low.u32 %v5808
        %v5810 = vextract.high.u32 %v5808
        %v5811 = vmul.u32 %v5804, %v5795
        %v5812 = vadd.s32 %v5807, %v5809
        %vm5813 = vc.u32 %v5807, %v5809
        %v5814 = vadd.s32 %v5810, 1
        %v5815 = vsel %vm5813, %v5814, %v5810
        %v5816 = vadd.s32 %v5811, %v5815
        %v5817 = vadd.s32 %v5816, 536870912
        %v5818 = vshrl.u32 %v5817, 30
        %v5819 = vshll.u32 %v5818, 30
        %v5820 = vsub.s32 %v5816, %v5819
        %vm5821 = vcmp.lt.s32.totalorder %v5820, 0
        %v5822 = vsub.s32 0, %v5820
        %v5823 = vsel %vm5821, %v5822, %v5820
        %v5824 = vclz %v5823
        %v5825 = vsub.s32 %v5824, 2
        %vm5826 = vcmp.gt.s32.totalorder 0, %v5825
        %v5827 = vsel %vm5826, 0, %v5825
        %v5828 = vsub.s32 32, %v5827
        %v5829 = vshll.u32 %v5820, %v5827
        %v5830 = vshrl.u32 %v5812, %v5828
        %v5831 = vor.u32 %v5829, %v5830
        %v5832 = vsub.s32 4294967266, %v5827
        %v5833 = vadd.s32 %v5832, 127
        %v5834 = vshll.u32 %v5833, 23
        %v5835 = vor.u32 4788187, %v5834
        %v5836 = vand.u32 2147483647, %v5835
        %v5838 = vcvt.s32.f32 %v5831
        %v5839 = vmul.f32 %v5838, %v5836
        %v5840 = vxor.u32 %v5839, 2147483648
        %v5841 = vsel %vm5758, %v5840, %v5839
        %v5842 = vsub.s32 4, %v5818
        %v5843 = vsel %vm5758, %v5842, %v5818
        %v5844 = vsel %vm5757, %v4298, %v5841
        %v5845 = vsel %vm5757, 0, %v5843
        %v5846 = vcosq.f32.pop %v5844
        %v5847 = vsinq.f32.pop %v5844
        %vm5848 = vweird.f32 %v4298
        %v5849 = vadd.s32 %v5845, 3
        %v5850 = vand.u32 %v5849, 3
        %vm5851 = vcmp.lt.s32.totalorder %v5850, 2
        %vm5852 = vcmp.eq.s32.totalorder %v5850, 0
        %v5853 = vxor.u32 %v5847, 2147483648
        %v5854 = vsel %vm5852, %v5846, %v5853
        %vm5855 = vcmp.eq.s32.totalorder %v5850, 2
        %v5856 = vxor.u32 %v5846, 2147483648
        %v5857 = vsel %vm5855, %v5856, %v5847
        %v5858 = vsel %vm5851, %v5854, %v5857
        %v5859 = vsel %vm5848, nan, %v5858
        %v5860 = vand.u32 2147483647, %v4299
        %vm5861 = vcmp.le.f32.partialorder %v5860, 0.7853982
        %vm5862 = vcmp.lt.s32.totalorder %v4299, 0
        %v5863 = vand.u32 %v4299, 2139095040
        %v5864 = vshrl.u32 %v5863, 23
        %v5865 = vsub.s32 %v5864, 127
        %v5866 = vand.u32 2147483647, %v4299
        %v5867 = vand.u32 %v5866, 8388607
        %v5868 = vor.u32 %v5867, 8388608
        %v5869 = vsub.s32 0, %v5868
        %v5870 = vadd.s32 %v5865, 1
        %vm5871 = vcmp.gt.s32.totalorder %v5870, 0
        %v5872 = vsel %vm5871, %v5870, 0
        %v5873 = vshrl.u32 %v5872, 5
        %v5874 = vand.u32 %v5872, 31
        %v5875 = vsub.s32 32, %v5874
        %v5876 = vshrl.u32 683565275, %v5875
        %v5877 = vshll.u32 683565275, %v5874
        %v5878 = vshrl.u32 2475754826, %v5875
        %v5879 = vor.u32 %v5877, %v5878
        %v5880 = vshll.u32 2475754826, %v5874
        %v5881 = vshrl.u32 2131351028, %v5875
        %v5882 = vor.u32 %v5880, %v5881
        %v5883 = vshll.u32 2131351028, %v5874
        %v5884 = vshrl.u32 2102212464, %v5875
        %v5885 = vor.u32 %v5883, %v5884
        %v5886 = vshll.u32 2102212464, %v5874
        %v5887 = vshrl.u32 920167782, %v5875
        %v5888 = vor.u32 %v5886, %v5887
        %v5889 = vshll.u32 920167782, %v5874
        %v5890 = vshrl.u32 1326507024, %v5875
        %v5891 = vor.u32 %v5889, %v5890
        %vm5892 = vcmp.lt.s32.totalorder %v5873, 1
        %vm5893 = vcmp.lt.s32.totalorder %v5873, 2
        %vm5894 = vcmp.lt.s32.totalorder %v5873, 3
        %vm5895 = vcmp.lt.s32.totalorder %v5873, 4
        %v5896 = vsel %vm5892, %v5876, %v5879
        %v5897 = vsel %vm5895, %v5885, 2102212464
        %v5898 = vsel %vm5894, %v5882, %v5897
        %v5899 = vsel %vm5893, %v5896, %v5898
        %v5900 = vsel %vm5892, %v5879, %v5882
        %v5901 = vsel %vm5895, %v5888, 920167782
        %v5902 = vsel %vm5894, %v5885, %v5901
        %v5903 = vsel %vm5893, %v5900, %v5902
        %v5904 = vsel %vm5892, %v5882, %v5885
        %v5905 = vsel %vm5895, %v5891, 1326507024
        %v5906 = vsel %vm5894, %v5888, %v5905
        %v5907 = vsel %vm5893, %v5904, %v5906
        %v5908 = vshll.u32 %v5868, 8
        %v5909 = vmul.u32.u64.compose %v5908, %v5907
        %v5910 = vextract.low.u32 %v5909
        %v5911 = vextract.high.u32 %v5909
        %v5912 = vmul.u32.u64.compose %v5908, %v5903
        %v5913 = vextract.low.u32 %v5912
        %v5914 = vextract.high.u32 %v5912
        %v5915 = vmul.u32 %v5908, %v5899
        %v5916 = vadd.s32 %v5911, %v5913
        %vm5917 = vc.u32 %v5911, %v5913
        %v5918 = vadd.s32 %v5914, 1
        %v5919 = vsel %vm5917, %v5918, %v5914
        %v5920 = vadd.s32 %v5915, %v5919
        %v5921 = vadd.s32 %v5920, 536870912
        %v5922 = vshrl.u32 %v5921, 30
        %v5923 = vshll.u32 %v5922, 30
        %v5924 = vsub.s32 %v5920, %v5923
        %vm5925 = vcmp.lt.s32.totalorder %v5924, 0
        %v5926 = vsub.s32 0, %v5924
        %v5927 = vsel %vm5925, %v5926, %v5924
        %v5928 = vclz %v5927
        %v5929 = vsub.s32 %v5928, 2
        %vm5930 = vcmp.gt.s32.totalorder 0, %v5929
        %v5931 = vsel %vm5930, 0, %v5929
        %v5932 = vsub.s32 32, %v5931
        %v5933 = vshll.u32 %v5924, %v5931
        %v5934 = vshrl.u32 %v5916, %v5932
        %v5935 = vor.u32 %v5933, %v5934
        %v5936 = vsub.s32 4294967266, %v5931
        %v5937 = vadd.s32 %v5936, 127
        %v5938 = vshll.u32 %v5937, 23
        %v5939 = vor.u32 4788187, %v5938
        %v5940 = vand.u32 2147483647, %v5939
        %v5942 = vcvt.s32.f32 %v5935
        %v5943 = vmul.f32 %v5942, %v5940
        %v5944 = vxor.u32 %v5943, 2147483648
        %v5945 = vsel %vm5862, %v5944, %v5943
        %v5946 = vsub.s32 4, %v5922
        %v5947 = vsel %vm5862, %v5946, %v5922
        %v5948 = vsel %vm5861, %v4299, %v5945
        %v5949 = vsel %vm5861, 0, %v5947
        %v5950 = vcosq.f32.pop %v5948
        %v5951 = vsinq.f32.pop %v5948
        %vm5952 = vweird.f32 %v4299
        %v5953 = vadd.s32 %v5949, 3
        %v5954 = vand.u32 %v5953, 3
        %vm5955 = vcmp.lt.s32.totalorder %v5954, 2
        %vm5956 = vcmp.eq.s32.totalorder %v5954, 0
        %v5957 = vxor.u32 %v5951, 2147483648
        %v5958 = vsel %vm5956, %v5950, %v5957
        %vm5959 = vcmp.eq.s32.totalorder %v5954, 2
        %v5960 = vxor.u32 %v5950, 2147483648
        %v5961 = vsel %vm5959, %v5960, %v5951
        %v5962 = vsel %vm5955, %v5958, %v5961
        %v5963 = vsel %vm5952, nan, %v5962
        %vm5964 = vcmask 130048
        %5965 = vst.msk [vmem:[%s147] sm:$0xff] %vm5964, %v4403
        %5966 = vst.msk [vmem:[%s147 + $0x8] sm:$0xff] %vm5964, %v4403
        %5967 = vst.msk [vmem:[%s147 + $0x10] sm:$0xff] %vm5964, %v4507
        %5968 = vst.msk [vmem:[%s147 + $0x18] sm:$0xff] %vm5964, %v4507
        %5969 = vst.msk [vmem:[%s147 + $0x20] sm:$0xff] %vm5964, %v4611
        %5970 = vst.msk [vmem:[%s147 + $0x28] sm:$0xff] %vm5964, %v4611
        %5971 = vst.msk [vmem:[%s147 + $0x30] sm:$0xff] %vm5964, %v4715
        %5972 = vst.msk [vmem:[%s147 + $0x38] sm:$0xff] %vm5964, %v4715
        %5973 = vst.msk [vmem:[%s147 + $0x40] sm:$0xff] %vm5964, %v4819
        %5974 = vst.msk [vmem:[%s147 + $0x48] sm:$0xff] %vm5964, %v4819
        %5975 = vst.msk [vmem:[%s147 + $0x50] sm:$0xff] %vm5964, %v4923
        %5976 = vst.msk [vmem:[%s147 + $0x58] sm:$0xff] %vm5964, %v4923
        %5977 = vst.msk [vmem:[%s147 + $0x60] sm:$0xff] %vm5964, %v5027
        %5978 = vst.msk [vmem:[%s147 + $0x68] sm:$0xff] %vm5964, %v5027
        %5979 = vst.msk [vmem:[%s147 + $0x70] sm:$0xff] %vm5964, %v5131
        %5980 = vst.msk [vmem:[%s147 + $0x78] sm:$0xff] %vm5964, %v5131
        %5981 = vst.msk [vmem:[%s147 + $0x80] sm:$0xff] %vm5964, %v5235
        %5982 = vst.msk [vmem:[%s147 + $0x88] sm:$0xff] %vm5964, %v5235
        %5983 = vst.msk [vmem:[%s147 + $0x90] sm:$0xff] %vm5964, %v5339
        %5984 = vst.msk [vmem:[%s147 + $0x98] sm:$0xff] %vm5964, %v5339
        %5985 = vst.msk [vmem:[%s147 + $0xa0] sm:$0xff] %vm5964, %v5443
        %5986 = vst.msk [vmem:[%s147 + $0xa8] sm:$0xff] %vm5964, %v5443
        %5987 = vst.msk [vmem:[%s147 + $0xb0] sm:$0xff] %vm5964, %v5547
        %5988 = vst.msk [vmem:[%s147 + $0xb8] sm:$0xff] %vm5964, %v5547
        %5989 = vst.msk [vmem:[%s147 + $0xc0] sm:$0xff] %vm5964, %v5651
        %5990 = vst.msk [vmem:[%s147 + $0xc8] sm:$0xff] %vm5964, %v5651
        %5991 = vst.msk [vmem:[%s147 + $0xd0] sm:$0xff] %vm5964, %v5755
        %5992 = vst.msk [vmem:[%s147 + $0xd8] sm:$0xff] %vm5964, %v5755
        %5993 = vst.msk [vmem:[%s147 + $0xe0] sm:$0xff] %vm5964, %v5859
        %5994 = vst.msk [vmem:[%s147 + $0xe8] sm:$0xff] %vm5964, %v5859
        %5995 = vst.msk [vmem:[%s147 + $0xf0] sm:$0xff] %vm5964, %v5963
        %5996 = vst.msk [vmem:[%s147 + $0xf8] sm:$0xff] %vm5964, %v5963
      $region36: #{tpu_custom_call.1} parent=27 // pred_fallthru
        _
      %s5997 = smul.u32 16, %s18
      %p5998 = scmp.lt.s32.totalorder %s17, 1
      %s5999 = scalar_select %p5998, %s17, 1
      %p6000 = scmp.lt.s32.totalorder %s5997, 31
      %s6001 = scalar_select %p6000, %s5997, 31
      %s6002 = smul.addr %s6001, 2
      %s6003 = smul.addr %s5999, 64
      %s6004 = sadd.s32 %s6002, %s6003
      %s6005 = smul.addr %s6004, 8
      %s6006 = scalar_lea.vmem %s2, %s6005
      // Predicated region
      $region37: #{tpu_custom_call.1} parent=27 // pred_check
        %p6007 = pneg %p87
      $region38: #{tpu_custom_call.1} parent=27 // pred_check_branch
        %6009 = sbr.rel (%p6007) target = $region40
      $region39: #{tpu_custom_call.1} parent=27 // pred_region
        %s6010 = smul.u32 16, %s18
      $region40: #{tpu_custom_call.1} parent=27 // pred_fallthru
        _
    $region28: #{tpu_custom_call.1} parent=5 // pred_fallthru
      _
    %p6011 = scmp.le.s32.totalorder 2, %s8
    // Predicated region
    $region41: #{tpu_custom_call.1} parent=5 // pred_check
      %p6012 = pneg %p6011
    $region42: #{tpu_custom_call.1} parent=5 // pred_check_branch
      %6014 = sbr.rel (%p6012) target = $region44
    $region43: #{tpu_custom_call.1} parent=5 // pred_region
      %s6015 = ssub.s32 %s8, 2
      // Predicated region
      $region45: #{tpu_custom_call.1} parent=43 // pred_check
        %p6016 = pneg %p93
      $region46: #{tpu_custom_call.1} parent=43 // pred_check_branch
        %6018 = sbr.rel (%p6016) target = $region48
      $region47: #{tpu_custom_call.1} parent=43 // pred_region
        %s6019 = smul.u32 16, %s20
        %p6020 = scmp.lt.s32.totalorder %s19, 1
        %s6021 = scalar_select %p6020, %s19, 1
        %p6022 = scmp.lt.s32.totalorder %s6019, 31
        %s6023 = scalar_select %p6022, %s6019, 31
        %s6024 = smul.addr %s6023, 2
        %s6025 = smul.addr %s6021, 64
        %s6026 = sadd.s32 %s6024, %s6025
        %s6027 = smul.addr %s6026, 8
        %s6028 = scalar_lea.vmem %s2, %s6027
      $region48: #{tpu_custom_call.1} parent=43 // pred_fallthru
        _
    $region44: #{tpu_custom_call.1} parent=5 // pred_fallthru
      _
  $region6: #{tpu_custom_call.1} parent=0 // loop_footer
    %s12 = sadd.s32 1, %s8
  $region7: #{tpu_custom_call.1} parent=0 // loop_footer_branch
    %7 = sbr.rel target = $region3
  $region8: #{tpu_custom_call.1} parent=0 // loop_exit
    _

</llo_original>
